<compile_context>
chip_gen: v6e
topology: v6e:2x2x1
jax: 0.10.0
libtpu: 0.0.40
codegen_flags: <defaults>
</compile_context>

<pallas_src>
import functools

import numpy as np

import jax
import jax.numpy as jnp
from jax.experimental import pallas as pl
from jax.experimental.pallas import tpu as pltpu


# ----------------------------------------------------------------------------
# Fused encoder kernel (single invocation; every operand resident in VMEM).
# ----------------------------------------------------------------------------
def _encoder_kernel(x_ref, r1_ref, s1_ref, b1_ref,
                    r2_ref, s2_ref, gsel_ref, gselt_ref, p2_ref,
                    r3_ref, s3_ref, b3_ref, seli_ref, w1c_ref,
                    bsel_ref, bselt_ref, w2_ref, w3_ref, b3fc_ref,
                    o_ref, *, batch):
    f32 = jnp.float32
    bf16 = jnp.bfloat16
    blk = seli_ref.shape[2]          # padded (pool-row, image) block of conv3 rows

    def conv(x_bf, r_ref, s_ref):
        """Stride-2 3x3 conv as sum_kh (R_kh @ x) @ S_kh, all on the MXU."""
        acc = None
        for kh in range(3):
            rows = jnp.dot(r_ref[kh], x_bf, preferred_element_type=f32)
            part = jnp.dot(rows.astype(bf16), s_ref[kh],
                           preferred_element_type=f32)
            acc = part if acc is None else acc + part
        return acc

    # conv1: 3->8, stride 2, pad 1, bias, ReLU.   (3B*16, 128), lanes = (w1, c1)
    y1 = conv(x_ref[...], r1_ref, s1_ref) + b1_ref[...]
    y1 = jnp.maximum(y1, 0.0).astype(bf16)

    # conv2: 8->16 + train-mode BatchNorm2d(16) + ReLU.  (3B*8, 128), lanes=(w2,c2)
    y2 = conv(y1, r2_ref, s2_ref)
    cnt2 = float(batch * 8 * 8)                       # samples / channel / branch
    rsum = jnp.dot(gselt_ref[...], y2, preferred_element_type=f32)        # (3, 128)
    rsq = jnp.dot(gselt_ref[...], y2 * y2, preferred_element_type=f32)    # (3, 128)
    cmean = jnp.dot(rsum, p2_ref[...], preferred_element_type=f32) / cnt2
    cex2 = jnp.dot(rsq, p2_ref[...], preferred_element_type=f32) / cnt2
    mean = jnp.dot(gsel_ref[...], cmean, preferred_element_type=f32)      # per row
    ex2 = jnp.dot(gsel_ref[...], cex2, preferred_element_type=f32)
    y2 = (y2 - mean) * jax.lax.rsqrt(ex2 - mean * mean + 1e-5)
    y2 = jnp.maximum(y2, 0.0).astype(bf16)

    # conv3: 16->32, bias, ReLU.  (2*blk, 128); rows ordered (di, pool_i, image)
    # (padded to blk), lanes ordered (dj, pool_j, c3) so MaxPool2d vectorizes.
    y3 = conv(y2, r3_ref, s3_ref) + b3_ref[...]
    y3 = jnp.maximum(y3, 0.0)

    # MaxPool2d(2,2): max over di via a tile-aligned row-slice pair, max over dj
    # via a 64-lane roll.  Flatten (NCHW order) + Linear(128,256) folded into w1c.
    m = jnp.maximum(y3[:blk], y3[blk:])
    m = jnp.maximum(m, pltpu.roll(m, shift=64, axis=1)).astype(bf16)
    h = None
    for i in range(2):
        rows = jnp.dot(seli_ref[i], m, preferred_element_type=f32)        # (3B, 128)
        part = jnp.dot(rows.astype(bf16), w1c_ref[i],
                       preferred_element_type=f32)                        # (3B, 256)
        h = part if h is None else h + part

    def bn_rows(t):
        """Per-branch train-mode BatchNorm1d over the `batch` rows of each branch."""
        mu3 = jnp.dot(bselt_ref[...], t, preferred_element_type=f32) / float(batch)
        ex3 = jnp.dot(bselt_ref[...], t * t, preferred_element_type=f32) / float(batch)
        mu = jnp.dot(bsel_ref[...], mu3, preferred_element_type=f32)
        ex = jnp.dot(bsel_ref[...], ex3, preferred_element_type=f32)
        return (t - mu) * jax.lax.rsqrt(ex - mu * mu + 1e-5)

    h = jnp.maximum(bn_rows(h), 0.0).astype(bf16)
    h = jnp.dot(h, w2_ref[...], preferred_element_type=f32)               # (3B, 128)
    h = jnp.maximum(bn_rows(h), 0.0).astype(bf16)
    o_ref[...] = (jnp.dot(h, w3_ref[...], preferred_element_type=f32)
                  + b3fc_ref[...])                                        # (3B, 128)


def train_models_nce_forward(consts, anchor, positive, negative, batch,
                             latent_dims=64):
    """Encoder applied independently to each branch (all three fused)."""
    x = jnp.stack([anchor, positive, negative], axis=0)        # (3, B, 3, 32, 32)
    x = jnp.transpose(x, (0, 1, 3, 4, 2))                      # NHWC
    x = x.reshape(3 * batch * 32, 32 * 3).astype(jnp.bfloat16)  # rows=(g,b,h), lanes=(w,c)
    out = pl.pallas_call(
        functools.partial(_encoder_kernel, batch=batch),
        out_shape=jax.ShapeDtypeStruct((3 * batch, 128), jnp.float32),
    )(x, consts["r1"], consts["s1"], consts["b1"],
      consts["r2"], consts["s2"], consts["gsel"], consts["gselt"], consts["p2"],
      consts["r3"], consts["s3"], consts["b3"], consts["seli"], consts["w1c"],
      consts["bsel"], consts["bselt"], consts["w2fc"], consts["w3fc"],
      consts["b3fc"])
    z = out.reshape(3, batch, 128)[:, :, :latent_dims]
    return z[0], z[1], z[2]


# ----------------------------------------------------------------------------
# Deterministic parameter init (Xavier-uniform weights, zero biases) and the
# host-side construction of the selection / weight-scatter constants.
# ----------------------------------------------------------------------------
def _xavier(key, shape, fan_in, fan_out):
    bound = float(np.sqrt(6.0 / (fan_in + fan_out)))
    return jax.random.uniform(key, shape, jnp.float32, -bound, bound)


def init_raw_params(key, latent_dims=64):
    ks = jax.random.split(key, 6)
    p = {}
    # Conv weights stored (kh, kw, cin, cout); biases zero (PyTorch init).
    p["w1"] = _xavier(ks[0], (3, 3, 3, 8), 3 * 9, 8 * 9)
    p["b1"] = jnp.zeros((8,), jnp.float32)
    p["w2"] = _xavier(ks[1], (3, 3, 8, 16), 8 * 9, 16 * 9)
    p["b2"] = jnp.zeros((16,), jnp.float32)
    p["w3"] = _xavier(ks[2], (3, 3, 16, 32), 16 * 9, 32 * 9)
    p["b3"] = jnp.zeros((32,), jnp.float32)
    # Linear weights stored (in, out); biases zero.
    p["fc1"] = _xavier(ks[3], (128, 256), 128, 256)
    p["fc2"] = _xavier(ks[4], (256, 128), 256, 128)
    p["fc3"] = _xavier(ks[5], (128, latent_dims), 128, latent_dims)
    p["fc3_b"] = jnp.zeros((latent_dims,), jnp.float32)
    return p


def _build_R(n_img, h_in, h_out, row_of=None, n_rows=None):
    """0/1 stride-2 row-selection matrices, block-diagonal over images."""
    if n_rows is None:
        n_rows = n_img * h_out
    R = np.zeros((3, n_rows, n_img * h_in), np.float32)
    for kh in range(3):
        for img in range(n_img):
            for ho in range(h_out):
                hi = 2 * ho + kh - 1
                if 0 <= hi < h_in:
                    r = (img * h_out + ho) if row_of is None else row_of(img, ho)
                    R[kh, r, img * h_in + hi] = 1.0
    return R


def _build_S(w_in, w_out, c_in, c_out, w_conv, col_of=None, n_cols=None):
    """Scatter the 3x3 conv weights over (width, channel) lanes per kh."""
    w_np = np.asarray(w_conv)                       # (3, 3, c_in, c_out)
    if n_cols is None:
        n_cols = w_out * c_out
    S = np.zeros((3, w_in * c_in, n_cols), np.float32)
    for kh in range(3):
        for wo in range(w_out):
            col = (wo * c_out) if col_of is None else col_of(wo)
            for kw in range(3):
                wi = 2 * wo + kw - 1
                if 0 <= wi < w_in:
                    S[kh, wi * c_in:(wi + 1) * c_in, col:col + c_out] = w_np[kh, kw]
    return S


def build_kernel_constants(raw, batch, latent_dims=64):
    assert latent_dims <= 128
    n_img = 3 * batch
    blk = ((2 * n_img + 7) // 8) * 8                 # padded (pool_i, image) rows
    bf16 = jnp.bfloat16
    c = {}

    # conv1 / conv2 selection + weight-scatter matrices.
    c["r1"] = jnp.asarray(_build_R(n_img, 32, 16), bf16)
    c["s1"] = jnp.asarray(_build_S(32, 16, 3, 8, raw["w1"]), bf16)
    c["b1"] = jnp.asarray(np.tile(np.asarray(raw["b1"]), 16)[None, :], jnp.float32)
    c["r2"] = jnp.asarray(_build_R(n_img, 16, 8), bf16)
    c["s2"] = jnp.asarray(_build_S(16, 8, 8, 16, raw["w2"]), bf16)

    # conv2 BatchNorm2d helpers: per-branch row selection + per-channel lane pool.
    g = np.arange(n_img * 8) // (batch * 8)
    gsel = (g[:, None] == np.arange(3)[None, :]).astype(np.float32)
    c["gsel"], c["gselt"] = jnp.asarray(gsel), jnp.asarray(gsel.T)
    lane = np.arange(128)
    c["p2"] = jnp.asarray((lane[:, None] % 16 == lane[None, :] % 16)
                          .astype(np.float32))

    # conv3: rows ordered (di, pool_i, image) padded to blk per di block,
    # lanes ordered (dj, pool_j, channel) -> MaxPool2d(2,2) vectorizes.
    def row3(img, ho):                               # ho = 2*pool_i + di
        return (ho % 2) * blk + (ho // 2) * n_img + img

    def col3(wo):                                    # wo = 2*pool_j + dj
        return (wo % 2) * 64 + (wo // 2) * 32

    c["r3"] = jnp.asarray(_build_R(n_img, 8, 4, row_of=row3, n_rows=2 * blk), bf16)
    c["s3"] = jnp.asarray(_build_S(8, 4, 16, 32, raw["w3"], col_of=col3,
                                   n_cols=128), bf16)
    c["b3"] = jnp.asarray(np.tile(np.asarray(raw["b3"]), 4)[None, :], jnp.float32)

    # MaxPool row selection + fc1 weights permuted from NCHW-flatten order.
    seli = np.zeros((2, n_img, blk), np.float32)
    for i in range(2):
        for img in range(n_img):
            seli[i, img, i * n_img + img] = 1.0
    c["seli"] = jnp.asarray(seli, bf16)
    fc1 = np.asarray(raw["fc1"])                     # rows indexed c*4 + i*2 + j
    w1c = np.zeros((2, 128, 256), np.float32)        # lanes >= 64 stay zero
    for i in range(2):
        for j in range(2):
            for ch in range(32):
                w1c[i, j * 32 + ch, :] = fc1[ch * 4 + i * 2 + j, :]
    c["w1c"] = jnp.asarray(w1c, bf16)

    # fc BatchNorm1d helpers (per-branch row selection / broadcast).
    bidx = np.arange(n_img) // batch
    bsel = (bidx[:, None] == np.arange(3)[None, :]).astype(np.float32)
    c["bsel"], c["bselt"] = jnp.asarray(bsel), jnp.asarray(bsel.T)

    c["w2fc"] = jnp.asarray(raw["fc2"], bf16)
    w3 = np.zeros((128, 128), np.float32)
    w3[:, :latent_dims] = np.asarray(raw["fc3"])
    c["w3fc"] = jnp.asarray(w3, bf16)
    b3fc = np.zeros((1, 128), np.float32)
    b3fc[0, :latent_dims] = np.asarray(raw["fc3_b"])
    c["b3fc"] = jnp.asarray(b3fc)
    return c


# ----------------------------------------------------------------------------
# Pure-JAX (XLA) reference of the same train-mode forward, used to validate
# the fused kernel (bf16 matmul operands / f32 accumulation, like the kernel).
# ----------------------------------------------------------------------------
def _reference_encoder(raw, x):
    bf16 = jnp.bfloat16

    def conv(h, w, b):
        w_oihw = jnp.transpose(w, (3, 2, 0, 1)).astype(bf16)
        y = jax.lax.conv_general_dilated(
            h.astype(bf16), w_oihw, (2, 2), ((1, 1), (1, 1)),
            dimension_numbers=("NCHW", "OIHW", "NCHW"),
            preferred_element_type=jnp.float32)
        return y + b[None, :, None, None]

    def bn(y, axes):
        mu = jnp.mean(y, axis=axes, keepdims=True)
        var = jnp.mean((y - mu) ** 2, axis=axes, keepdims=True)
        return (y - mu) * jax.lax.rsqrt(var + 1e-5)

    h = jnp.maximum(conv(x, raw["w1"], raw["b1"]), 0.0)
    h = jnp.maximum(bn(conv(h, raw["w2"], raw["b2"]), (0, 2, 3)), 0.0)
    h = jnp.maximum(conv(h, raw["w3"], raw["b3"]), 0.0)          # (B, 32, 4, 4)
    b = h.shape[0]
    h = h.reshape(b, 32, 2, 2, 2, 2).max(axis=(3, 5))            # MaxPool2d(2, 2)
    feat = h.reshape(b, 128)                                     # NCHW flatten
    h = jnp.dot(feat.astype(bf16), raw["fc1"].astype(bf16),
                preferred_element_type=jnp.float32)
    h = jnp.maximum(bn(h, (0,)), 0.0)
    h = jnp.dot(h.astype(bf16), raw["fc2"].astype(bf16),
                preferred_element_type=jnp.float32)
    h = jnp.maximum(bn(h, (0,)), 0.0)
    return (jnp.dot(h.astype(bf16), raw["fc3"].astype(bf16),
                    preferred_element_type=jnp.float32) + raw["fc3_b"])


# ----------------------------------------------------------------------------
if __name__ == "__main__":
    root = jax.random.PRNGKey(0)
    k_params, ka, kp, kn = jax.random.split(root, 4)

    latent_dims, B = 64, 2
    raw = init_raw_params(k_params, latent_dims=latent_dims)
    consts = build_kernel_constants(raw, B, latent_dims=latent_dims)

    # Input spatial size must be 32x32 so the encoder flattens to 32*2*2 = 128.
    anchor_im = jax.random.normal(ka, (B, 3, 32, 32), jnp.float32)
    positive_im = jax.random.normal(kp, (B, 3, 32, 32), jnp.float32)
    negative_im = jax.random.normal(kn, (B, 3, 32, 32), jnp.float32)

    fwd = jax.jit(functools.partial(train_models_nce_forward, consts,
                                    batch=B, latent_dims=latent_dims))
    a_lat, p_lat, n_lat = fwd(anchor_im, positive_im, negative_im)
    jax.block_until_ready((a_lat, p_lat, n_lat))

    assert a_lat.shape == (B, latent_dims)
    assert p_lat.shape == (B, latent_dims)
    assert n_lat.shape == (B, latent_dims)

    # Validate the fused kernel against the pure-XLA reference.
    ref = jnp.stack([_reference_encoder(raw, im)
                     for im in (anchor_im, positive_im, negative_im)])
    got = jnp.stack([a_lat, p_lat, n_lat])
    rel = jnp.linalg.norm(got - ref) / (jnp.linalg.norm(ref) + 1e-6)
    assert float(rel) < 5e-2, f"kernel/reference mismatch: rel={float(rel)}"

    print("KERNEL_OK")
</pallas_src>

<mosaic_0001>
module attributes {stable_mosaic.version = 11 : i64} {
  func.func @_encoder_kernel(%arg0: memref<192x96xbf16, #tpu.memory_space<vmem>>, %arg1: memref<3x96x192xbf16, #tpu.memory_space<vmem>>, %arg2: memref<3x96x128xbf16, #tpu.memory_space<vmem>>, %arg3: memref<1x128xf32, #tpu.memory_space<vmem>>, %arg4: memref<3x48x96xbf16, #tpu.memory_space<vmem>>, %arg5: memref<3x128x128xbf16, #tpu.memory_space<vmem>>, %arg6: memref<48x3xf32, #tpu.memory_space<vmem>>, %arg7: memref<3x48xf32, #tpu.memory_space<vmem>>, %arg8: memref<128x128xf32, #tpu.memory_space<vmem>>, %arg9: memref<3x32x48xbf16, #tpu.memory_space<vmem>>, %arg10: memref<3x128x128xbf16, #tpu.memory_space<vmem>>, %arg11: memref<1x128xf32, #tpu.memory_space<vmem>>, %arg12: memref<2x6x16xbf16, #tpu.memory_space<vmem>>, %arg13: memref<2x128x256xbf16, #tpu.memory_space<vmem>>, %arg14: memref<6x3xf32, #tpu.memory_space<vmem>>, %arg15: memref<3x6xf32, #tpu.memory_space<vmem>>, %arg16: memref<256x128xbf16, #tpu.memory_space<vmem>>, %arg17: memref<128x128xbf16, #tpu.memory_space<vmem>>, %arg18: memref<1x128xf32, #tpu.memory_space<vmem>>, %arg19: memref<6x128xf32, #tpu.memory_space<vmem>>) attributes {dimension_semantics = [], scalar_prefetch = 0 : i64, scratch_operands = 0 : i64, tpu.core_type = #tpu.core_type<tc>} {
    %c0 = arith.constant 0 : index
    %c0_0 = arith.constant 0 : index
    %0 = vector.load %arg0[%c0, %c0_0] : memref<192x96xbf16, #tpu.memory_space<vmem>>, vector<192x96xbf16>
    %c0_1 = arith.constant 0 : index
    %c0_2 = arith.constant 0 : index
    %c0_3 = arith.constant 0 : index
    %1 = vector.load %arg1[%c0_1, %c0_2, %c0_3] : memref<3x96x192xbf16, #tpu.memory_space<vmem>>, vector<1x96x192xbf16>
    %2 = vector.shape_cast %1 : vector<1x96x192xbf16> to vector<96x192xbf16>
    %cst = arith.constant dense<0.000000e+00> : vector<96x96xf32>
    %3 = tpu.matmul %2, %0, %cst {dimension_numbers = #tpu.dot_dimension_numbers<[1], [0], [0], [1], [0, 0, 1, 1], [], []>} : vector<96x192xbf16>, vector<192x96xbf16>, vector<96x96xf32> -> vector<96x96xf32>
    %4 = arith.truncf %3 : vector<96x96xf32> to vector<96x96xbf16>
    %c0_4 = arith.constant 0 : index
    %c0_5 = arith.constant 0 : index
    %c0_6 = arith.constant 0 : index
    %5 = vector.load %arg2[%c0_4, %c0_5, %c0_6] : memref<3x96x128xbf16, #tpu.memory_space<vmem>>, vector<1x96x128xbf16>
    %6 = vector.shape_cast %5 : vector<1x96x128xbf16> to vector<96x128xbf16>
    %cst_7 = arith.constant dense<0.000000e+00> : vector<96x128xf32>
    %7 = tpu.matmul %4, %6, %cst_7 {dimension_numbers = #tpu.dot_dimension_numbers<[1], [0], [0], [1], [0, 0, 1, 1], [], []>} : vector<96x96xbf16>, vector<96x128xbf16>, vector<96x128xf32> -> vector<96x128xf32>
    %c1 = arith.constant 1 : index
    %c0_8 = arith.constant 0 : index
    %c0_9 = arith.constant 0 : index
    %8 = vector.load %arg1[%c1, %c0_8, %c0_9] : memref<3x96x192xbf16, #tpu.memory_space<vmem>>, vector<1x96x192xbf16>
    %9 = vector.shape_cast %8 : vector<1x96x192xbf16> to vector<96x192xbf16>
    %cst_10 = arith.constant dense<0.000000e+00> : vector<96x96xf32>
    %10 = tpu.matmul %9, %0, %cst_10 {dimension_numbers = #tpu.dot_dimension_numbers<[1], [0], [0], [1], [0, 0, 1, 1], [], []>} : vector<96x192xbf16>, vector<192x96xbf16>, vector<96x96xf32> -> vector<96x96xf32>
    %11 = arith.truncf %10 : vector<96x96xf32> to vector<96x96xbf16>
    %c1_11 = arith.constant 1 : index
    %c0_12 = arith.constant 0 : index
    %c0_13 = arith.constant 0 : index
    %12 = vector.load %arg2[%c1_11, %c0_12, %c0_13] : memref<3x96x128xbf16, #tpu.memory_space<vmem>>, vector<1x96x128xbf16>
    %13 = vector.shape_cast %12 : vector<1x96x128xbf16> to vector<96x128xbf16>
    %cst_14 = arith.constant dense<0.000000e+00> : vector<96x128xf32>
    %14 = tpu.matmul %11, %13, %cst_14 {dimension_numbers = #tpu.dot_dimension_numbers<[1], [0], [0], [1], [0, 0, 1, 1], [], []>} : vector<96x96xbf16>, vector<96x128xbf16>, vector<96x128xf32> -> vector<96x128xf32>
    %15 = arith.addf %7, %14 : vector<96x128xf32>
    %c2 = arith.constant 2 : index
    %c0_15 = arith.constant 0 : index
    %c0_16 = arith.constant 0 : index
    %16 = vector.load %arg1[%c2, %c0_15, %c0_16] : memref<3x96x192xbf16, #tpu.memory_space<vmem>>, vector<1x96x192xbf16>
    %17 = vector.shape_cast %16 : vector<1x96x192xbf16> to vector<96x192xbf16>
    %cst_17 = arith.constant dense<0.000000e+00> : vector<96x96xf32>
    %18 = tpu.matmul %17, %0, %cst_17 {dimension_numbers = #tpu.dot_dimension_numbers<[1], [0], [0], [1], [0, 0, 1, 1], [], []>} : vector<96x192xbf16>, vector<192x96xbf16>, vector<96x96xf32> -> vector<96x96xf32>
    %19 = arith.truncf %18 : vector<96x96xf32> to vector<96x96xbf16>
    %c2_18 = arith.constant 2 : index
    %c0_19 = arith.constant 0 : index
    %c0_20 = arith.constant 0 : index
    %20 = vector.load %arg2[%c2_18, %c0_19, %c0_20] : memref<3x96x128xbf16, #tpu.memory_space<vmem>>, vector<1x96x128xbf16>
    %21 = vector.shape_cast %20 : vector<1x96x128xbf16> to vector<96x128xbf16>
    %cst_21 = arith.constant dense<0.000000e+00> : vector<96x128xf32>
    %22 = tpu.matmul %19, %21, %cst_21 {dimension_numbers = #tpu.dot_dimension_numbers<[1], [0], [0], [1], [0, 0, 1, 1], [], []>} : vector<96x96xbf16>, vector<96x128xbf16>, vector<96x128xf32> -> vector<96x128xf32>
    %23 = arith.addf %15, %22 : vector<96x128xf32>
    %c0_22 = arith.constant 0 : index
    %c0_23 = arith.constant 0 : index
    %24 = vector.load %arg3[%c0_22, %c0_23] : memref<1x128xf32, #tpu.memory_space<vmem>>, vector<1x128xf32>
    %25 = vector.broadcast %24 : vector<1x128xf32> to vector<96x128xf32>
    %26 = arith.addf %23, %25 : vector<96x128xf32>
    %cst_24 = arith.constant 0.000000e+00 : f32
    %27 = vector.broadcast %cst_24 : f32 to vector<96x128xf32>
    %28 = arith.maximumf %26, %27 : vector<96x128xf32>
    %29 = arith.truncf %28 : vector<96x128xf32> to vector<96x128xbf16>
    %c0_25 = arith.constant 0 : index
    %c0_26 = arith.constant 0 : index
    %c0_27 = arith.constant 0 : index
    %30 = vector.load %arg4[%c0_25, %c0_26, %c0_27] : memref<3x48x96xbf16, #tpu.memory_space<vmem>>, vector<1x48x96xbf16>
    %31 = vector.shape_cast %30 : vector<1x48x96xbf16> to vector<48x96xbf16>
    %cst_28 = arith.constant dense<0.000000e+00> : vector<48x128xf32>
    %32 = tpu.matmul %31, %29, %cst_28 {dimension_numbers = #tpu.dot_dimension_numbers<[1], [0], [0], [1], [0, 0, 1, 1], [], []>} : vector<48x96xbf16>, vector<96x128xbf16>, vector<48x128xf32> -> vector<48x128xf32>
    %33 = arith.truncf %32 : vector<48x128xf32> to vector<48x128xbf16>
    %c0_29 = arith.constant 0 : index
    %c0_30 = arith.constant 0 : index
    %c0_31 = arith.constant 0 : index
    %34 = vector.load %arg5[%c0_29, %c0_30, %c0_31] : memref<3x128x128xbf16, #tpu.memory_space<vmem>>, vector<1x128x128xbf16>
    %35 = vector.shape_cast %34 : vector<1x128x128xbf16> to vector<128x128xbf16>
    %cst_32 = arith.constant dense<0.000000e+00> : vector<48x128xf32>
    %36 = tpu.matmul %33, %35, %cst_32 {dimension_numbers = #tpu.dot_dimension_numbers<[1], [0], [0], [1], [0, 0, 1, 1], [], []>} : vector<48x128xbf16>, vector<128x128xbf16>, vector<48x128xf32> -> vector<48x128xf32>
    %c1_33 = arith.constant 1 : index
    %c0_34 = arith.constant 0 : index
    %c0_35 = arith.constant 0 : index
    %37 = vector.load %arg4[%c1_33, %c0_34, %c0_35] : memref<3x48x96xbf16, #tpu.memory_space<vmem>>, vector<1x48x96xbf16>
    %38 = vector.shape_cast %37 : vector<1x48x96xbf16> to vector<48x96xbf16>
    %cst_36 = arith.constant dense<0.000000e+00> : vector<48x128xf32>
    %39 = tpu.matmul %38, %29, %cst_36 {dimension_numbers = #tpu.dot_dimension_numbers<[1], [0], [0], [1], [0, 0, 1, 1], [], []>} : vector<48x96xbf16>, vector<96x128xbf16>, vector<48x128xf32> -> vector<48x128xf32>
    %40 = arith.truncf %39 : vector<48x128xf32> to vector<48x128xbf16>
    %c1_37 = arith.constant 1 : index
    %c0_38 = arith.constant 0 : index
    %c0_39 = arith.constant 0 : index
    %41 = vector.load %arg5[%c1_37, %c0_38, %c0_39] : memref<3x128x128xbf16, #tpu.memory_space<vmem>>, vector<1x128x128xbf16>
    %42 = vector.shape_cast %41 : vector<1x128x128xbf16> to vector<128x128xbf16>
    %cst_40 = arith.constant dense<0.000000e+00> : vector<48x128xf32>
    %43 = tpu.matmul %40, %42, %cst_40 {dimension_numbers = #tpu.dot_dimension_numbers<[1], [0], [0], [1], [0, 0, 1, 1], [], []>} : vector<48x128xbf16>, vector<128x128xbf16>, vector<48x128xf32> -> vector<48x128xf32>
    %44 = arith.addf %36, %43 : vector<48x128xf32>
    %c2_41 = arith.constant 2 : index
    %c0_42 = arith.constant 0 : index
    %c0_43 = arith.constant 0 : index
    %45 = vector.load %arg4[%c2_41, %c0_42, %c0_43] : memref<3x48x96xbf16, #tpu.memory_space<vmem>>, vector<1x48x96xbf16>
    %46 = vector.shape_cast %45 : vector<1x48x96xbf16> to vector<48x96xbf16>
    %cst_44 = arith.constant dense<0.000000e+00> : vector<48x128xf32>
    %47 = tpu.matmul %46, %29, %cst_44 {dimension_numbers = #tpu.dot_dimension_numbers<[1], [0], [0], [1], [0, 0, 1, 1], [], []>} : vector<48x96xbf16>, vector<96x128xbf16>, vector<48x128xf32> -> vector<48x128xf32>
    %48 = arith.truncf %47 : vector<48x128xf32> to vector<48x128xbf16>
    %c2_45 = arith.constant 2 : index
    %c0_46 = arith.constant 0 : index
    %c0_47 = arith.constant 0 : index
    %49 = vector.load %arg5[%c2_45, %c0_46, %c0_47] : memref<3x128x128xbf16, #tpu.memory_space<vmem>>, vector<1x128x128xbf16>
    %50 = vector.shape_cast %49 : vector<1x128x128xbf16> to vector<128x128xbf16>
    %cst_48 = arith.constant dense<0.000000e+00> : vector<48x128xf32>
    %51 = tpu.matmul %48, %50, %cst_48 {dimension_numbers = #tpu.dot_dimension_numbers<[1], [0], [0], [1], [0, 0, 1, 1], [], []>} : vector<48x128xbf16>, vector<128x128xbf16>, vector<48x128xf32> -> vector<48x128xf32>
    %52 = arith.addf %44, %51 : vector<48x128xf32>
    %c0_49 = arith.constant 0 : index
    %c0_50 = arith.constant 0 : index
    %53 = vector.load %arg7[%c0_49, %c0_50] : memref<3x48xf32, #tpu.memory_space<vmem>>, vector<3x48xf32>
    %cst_51 = arith.constant dense<0.000000e+00> : vector<3x128xf32>
    %54 = tpu.matmul %53, %52, %cst_51 {dimension_numbers = #tpu.dot_dimension_numbers<[1], [0], [0], [1], [0, 0, 1, 1], [], []>} : vector<3x48xf32>, vector<48x128xf32>, vector<3x128xf32> -> vector<3x128xf32>
    %c0_52 = arith.constant 0 : index
    %c0_53 = arith.constant 0 : index
    %55 = vector.load %arg7[%c0_52, %c0_53] : memref<3x48xf32, #tpu.memory_space<vmem>>, vector<3x48xf32>
    %56 = arith.mulf %52, %52 : vector<48x128xf32>
    %cst_54 = arith.constant dense<0.000000e+00> : vector<3x128xf32>
    %57 = tpu.matmul %55, %56, %cst_54 {dimension_numbers = #tpu.dot_dimension_numbers<[1], [0], [0], [1], [0, 0, 1, 1], [], []>} : vector<3x48xf32>, vector<48x128xf32>, vector<3x128xf32> -> vector<3x128xf32>
    %c0_55 = arith.constant 0 : index
    %c0_56 = arith.constant 0 : index
    %58 = vector.load %arg8[%c0_55, %c0_56] : memref<128x128xf32, #tpu.memory_space<vmem>>, vector<128x128xf32>
    %cst_57 = arith.constant dense<0.000000e+00> : vector<3x128xf32>
    %59 = tpu.matmul %54, %58, %cst_57 {dimension_numbers = #tpu.dot_dimension_numbers<[1], [0], [0], [1], [0, 0, 1, 1], [], []>} : vector<3x128xf32>, vector<128x128xf32>, vector<3x128xf32> -> vector<3x128xf32>
    %cst_58 = arith.constant 1.280000e+02 : f32
    %60 = vector.broadcast %cst_58 : f32 to vector<3x128xf32>
    %61 = arith.divf %59, %60 : vector<3x128xf32>
    %c0_59 = arith.constant 0 : index
    %c0_60 = arith.constant 0 : index
    %62 = vector.load %arg8[%c0_59, %c0_60] : memref<128x128xf32, #tpu.memory_space<vmem>>, vector<128x128xf32>
    %cst_61 = arith.constant dense<0.000000e+00> : vector<3x128xf32>
    %63 = tpu.matmul %57, %62, %cst_61 {dimension_numbers = #tpu.dot_dimension_numbers<[1], [0], [0], [1], [0, 0, 1, 1], [], []>} : vector<3x128xf32>, vector<128x128xf32>, vector<3x128xf32> -> vector<3x128xf32>
    %cst_62 = arith.constant 1.280000e+02 : f32
    %64 = vector.broadcast %cst_62 : f32 to vector<3x128xf32>
    %65 = arith.divf %63, %64 : vector<3x128xf32>
    %c0_63 = arith.constant 0 : index
    %c0_64 = arith.constant 0 : index
    %66 = vector.load %arg6[%c0_63, %c0_64] : memref<48x3xf32, #tpu.memory_space<vmem>>, vector<48x3xf32>
    %cst_65 = arith.constant dense<0.000000e+00> : vector<48x128xf32>
    %67 = tpu.matmul %66, %61, %cst_65 {dimension_numbers = #tpu.dot_dimension_numbers<[1], [0], [0], [1], [0, 0, 1, 1], [], []>} : vector<48x3xf32>, vector<3x128xf32>, vector<48x128xf32> -> vector<48x128xf32>
    %c0_66 = arith.constant 0 : index
    %c0_67 = arith.constant 0 : index
    %68 = vector.load %arg6[%c0_66, %c0_67] : memref<48x3xf32, #tpu.memory_space<vmem>>, vector<48x3xf32>
    %cst_68 = arith.constant dense<0.000000e+00> : vector<48x128xf32>
    %69 = tpu.matmul %68, %65, %cst_68 {dimension_numbers = #tpu.dot_dimension_numbers<[1], [0], [0], [1], [0, 0, 1, 1], [], []>} : vector<48x3xf32>, vector<3x128xf32>, vector<48x128xf32> -> vector<48x128xf32>
    %70 = arith.subf %52, %67 : vector<48x128xf32>
    %71 = arith.mulf %67, %67 : vector<48x128xf32>
    %72 = arith.subf %69, %71 : vector<48x128xf32>
    %cst_69 = arith.constant 9.99999974E-6 : f32
    %73 = vector.broadcast %cst_69 : f32 to vector<48x128xf32>
    %74 = arith.addf %72, %73 : vector<48x128xf32>
    %75 = math.rsqrt %74 : vector<48x128xf32>
    %76 = arith.mulf %70, %75 : vector<48x128xf32>
    %cst_70 = arith.constant 0.000000e+00 : f32
    %77 = vector.broadcast %cst_70 : f32 to vector<48x128xf32>
    %78 = arith.maximumf %76, %77 : vector<48x128xf32>
    %79 = arith.truncf %78 : vector<48x128xf32> to vector<48x128xbf16>
    %c0_71 = arith.constant 0 : index
    %c0_72 = arith.constant 0 : index
    %c0_73 = arith.constant 0 : index
    %80 = vector.load %arg9[%c0_71, %c0_72, %c0_73] : memref<3x32x48xbf16, #tpu.memory_space<vmem>>, vector<1x32x48xbf16>
    %81 = vector.shape_cast %80 : vector<1x32x48xbf16> to vector<32x48xbf16>
    %cst_74 = arith.constant dense<0.000000e+00> : vector<32x128xf32>
    %82 = tpu.matmul %81, %79, %cst_74 {dimension_numbers = #tpu.dot_dimension_numbers<[1], [0], [0], [1], [0, 0, 1, 1], [], []>} : vector<32x48xbf16>, vector<48x128xbf16>, vector<32x128xf32> -> vector<32x128xf32>
    %83 = arith.truncf %82 : vector<32x128xf32> to vector<32x128xbf16>
    %c0_75 = arith.constant 0 : index
    %c0_76 = arith.constant 0 : index
    %c0_77 = arith.constant 0 : index
    %84 = vector.load %arg10[%c0_75, %c0_76, %c0_77] : memref<3x128x128xbf16, #tpu.memory_space<vmem>>, vector<1x128x128xbf16>
    %85 = vector.shape_cast %84 : vector<1x128x128xbf16> to vector<128x128xbf16>
    %cst_78 = arith.constant dense<0.000000e+00> : vector<32x128xf32>
    %86 = tpu.matmul %83, %85, %cst_78 {dimension_numbers = #tpu.dot_dimension_numbers<[1], [0], [0], [1], [0, 0, 1, 1], [], []>} : vector<32x128xbf16>, vector<128x128xbf16>, vector<32x128xf32> -> vector<32x128xf32>
    %c1_79 = arith.constant 1 : index
    %c0_80 = arith.constant 0 : index
    %c0_81 = arith.constant 0 : index
    %87 = vector.load %arg9[%c1_79, %c0_80, %c0_81] : memref<3x32x48xbf16, #tpu.memory_space<vmem>>, vector<1x32x48xbf16>
    %88 = vector.shape_cast %87 : vector<1x32x48xbf16> to vector<32x48xbf16>
    %cst_82 = arith.constant dense<0.000000e+00> : vector<32x128xf32>
    %89 = tpu.matmul %88, %79, %cst_82 {dimension_numbers = #tpu.dot_dimension_numbers<[1], [0], [0], [1], [0, 0, 1, 1], [], []>} : vector<32x48xbf16>, vector<48x128xbf16>, vector<32x128xf32> -> vector<32x128xf32>
    %90 = arith.truncf %89 : vector<32x128xf32> to vector<32x128xbf16>
    %c1_83 = arith.constant 1 : index
    %c0_84 = arith.constant 0 : index
    %c0_85 = arith.constant 0 : index
    %91 = vector.load %arg10[%c1_83, %c0_84, %c0_85] : memref<3x128x128xbf16, #tpu.memory_space<vmem>>, vector<1x128x128xbf16>
    %92 = vector.shape_cast %91 : vector<1x128x128xbf16> to vector<128x128xbf16>
    %cst_86 = arith.constant dense<0.000000e+00> : vector<32x128xf32>
    %93 = tpu.matmul %90, %92, %cst_86 {dimension_numbers = #tpu.dot_dimension_numbers<[1], [0], [0], [1], [0, 0, 1, 1], [], []>} : vector<32x128xbf16>, vector<128x128xbf16>, vector<32x128xf32> -> vector<32x128xf32>
    %94 = arith.addf %86, %93 : vector<32x128xf32>
    %c2_87 = arith.constant 2 : index
    %c0_88 = arith.constant 0 : index
    %c0_89 = arith.constant 0 : index
    %95 = vector.load %arg9[%c2_87, %c0_88, %c0_89] : memref<3x32x48xbf16, #tpu.memory_space<vmem>>, vector<1x32x48xbf16>
    %96 = vector.shape_cast %95 : vector<1x32x48xbf16> to vector<32x48xbf16>
    %cst_90 = arith.constant dense<0.000000e+00> : vector<32x128xf32>
    %97 = tpu.matmul %96, %79, %cst_90 {dimension_numbers = #tpu.dot_dimension_numbers<[1], [0], [0], [1], [0, 0, 1, 1], [], []>} : vector<32x48xbf16>, vector<48x128xbf16>, vector<32x128xf32> -> vector<32x128xf32>
    %98 = arith.truncf %97 : vector<32x128xf32> to vector<32x128xbf16>
    %c2_91 = arith.constant 2 : index
    %c0_92 = arith.constant 0 : index
    %c0_93 = arith.constant 0 : index
    %99 = vector.load %arg10[%c2_91, %c0_92, %c0_93] : memref<3x128x128xbf16, #tpu.memory_space<vmem>>, vector<1x128x128xbf16>
    %100 = vector.shape_cast %99 : vector<1x128x128xbf16> to vector<128x128xbf16>
    %cst_94 = arith.constant dense<0.000000e+00> : vector<32x128xf32>
    %101 = tpu.matmul %98, %100, %cst_94 {dimension_numbers = #tpu.dot_dimension_numbers<[1], [0], [0], [1], [0, 0, 1, 1], [], []>} : vector<32x128xbf16>, vector<128x128xbf16>, vector<32x128xf32> -> vector<32x128xf32>
    %102 = arith.addf %94, %101 : vector<32x128xf32>
    %c0_95 = arith.constant 0 : index
    %c0_96 = arith.constant 0 : index
    %103 = vector.load %arg11[%c0_95, %c0_96] : memref<1x128xf32, #tpu.memory_space<vmem>>, vector<1x128xf32>
    %104 = vector.broadcast %103 : vector<1x128xf32> to vector<32x128xf32>
    %105 = arith.addf %102, %104 : vector<32x128xf32>
    %cst_97 = arith.constant 0.000000e+00 : f32
    %106 = vector.broadcast %cst_97 : f32 to vector<32x128xf32>
    %107 = arith.maximumf %105, %106 : vector<32x128xf32>
    %108 = vector.extract_strided_slice %107 {offsets = [0, 0], sizes = [16, 128], strides = [1, 1]} : vector<32x128xf32> to vector<16x128xf32>
    %109 = vector.extract_strided_slice %107 {offsets = [16, 0], sizes = [16, 128], strides = [1, 1]} : vector<32x128xf32> to vector<16x128xf32>
    %110 = arith.maximumf %108, %109 : vector<16x128xf32>
    %c64_i32 = arith.constant 64 : i32
    %111 = tpu.dynamic_rotate %110 by %c64_i32 dim 1 : vector<16x128xf32>, i32 -> vector<16x128xf32>
    %112 = arith.maximumf %110, %111 : vector<16x128xf32>
    %113 = arith.truncf %112 : vector<16x128xf32> to vector<16x128xbf16>
    %c0_98 = arith.constant 0 : index
    %c0_99 = arith.constant 0 : index
    %c0_100 = arith.constant 0 : index
    %114 = vector.load %arg12[%c0_98, %c0_99, %c0_100] : memref<2x6x16xbf16, #tpu.memory_space<vmem>>, vector<1x6x16xbf16>
    %115 = vector.shape_cast %114 : vector<1x6x16xbf16> to vector<6x16xbf16>
    %cst_101 = arith.constant dense<0.000000e+00> : vector<6x128xf32>
    %116 = tpu.matmul %115, %113, %cst_101 {dimension_numbers = #tpu.dot_dimension_numbers<[1], [0], [0], [1], [0, 0, 1, 1], [], []>} : vector<6x16xbf16>, vector<16x128xbf16>, vector<6x128xf32> -> vector<6x128xf32>
    %117 = arith.truncf %116 : vector<6x128xf32> to vector<6x128xbf16>
    %c0_102 = arith.constant 0 : index
    %c0_103 = arith.constant 0 : index
    %c0_104 = arith.constant 0 : index
    %118 = vector.load %arg13[%c0_102, %c0_103, %c0_104] : memref<2x128x256xbf16, #tpu.memory_space<vmem>>, vector<1x128x256xbf16>
    %119 = vector.shape_cast %118 : vector<1x128x256xbf16> to vector<128x256xbf16>
    %cst_105 = arith.constant dense<0.000000e+00> : vector<6x256xf32>
    %120 = tpu.matmul %117, %119, %cst_105 {dimension_numbers = #tpu.dot_dimension_numbers<[1], [0], [0], [1], [0, 0, 1, 1], [], []>} : vector<6x128xbf16>, vector<128x256xbf16>, vector<6x256xf32> -> vector<6x256xf32>
    %c1_106 = arith.constant 1 : index
    %c0_107 = arith.constant 0 : index
    %c0_108 = arith.constant 0 : index
    %121 = vector.load %arg12[%c1_106, %c0_107, %c0_108] : memref<2x6x16xbf16, #tpu.memory_space<vmem>>, vector<1x6x16xbf16>
    %122 = vector.shape_cast %121 : vector<1x6x16xbf16> to vector<6x16xbf16>
    %cst_109 = arith.constant dense<0.000000e+00> : vector<6x128xf32>
    %123 = tpu.matmul %122, %113, %cst_109 {dimension_numbers = #tpu.dot_dimension_numbers<[1], [0], [0], [1], [0, 0, 1, 1], [], []>} : vector<6x16xbf16>, vector<16x128xbf16>, vector<6x128xf32> -> vector<6x128xf32>
    %124 = arith.truncf %123 : vector<6x128xf32> to vector<6x128xbf16>
    %c1_110 = arith.constant 1 : index
    %c0_111 = arith.constant 0 : index
    %c0_112 = arith.constant 0 : index
    %125 = vector.load %arg13[%c1_110, %c0_111, %c0_112] : memref<2x128x256xbf16, #tpu.memory_space<vmem>>, vector<1x128x256xbf16>
    %126 = vector.shape_cast %125 : vector<1x128x256xbf16> to vector<128x256xbf16>
    %cst_113 = arith.constant dense<0.000000e+00> : vector<6x256xf32>
    %127 = tpu.matmul %124, %126, %cst_113 {dimension_numbers = #tpu.dot_dimension_numbers<[1], [0], [0], [1], [0, 0, 1, 1], [], []>} : vector<6x128xbf16>, vector<128x256xbf16>, vector<6x256xf32> -> vector<6x256xf32>
    %128 = arith.addf %120, %127 : vector<6x256xf32>
    %c0_114 = arith.constant 0 : index
    %c0_115 = arith.constant 0 : index
    %129 = vector.load %arg15[%c0_114, %c0_115] : memref<3x6xf32, #tpu.memory_space<vmem>>, vector<3x6xf32>
    %cst_116 = arith.constant dense<0.000000e+00> : vector<3x256xf32>
    %130 = tpu.matmul %129, %128, %cst_116 {dimension_numbers = #tpu.dot_dimension_numbers<[1], [0], [0], [1], [0, 0, 1, 1], [], []>} : vector<3x6xf32>, vector<6x256xf32>, vector<3x256xf32> -> vector<3x256xf32>
    %cst_117 = arith.constant 2.000000e+00 : f32
    %131 = vector.broadcast %cst_117 : f32 to vector<3x256xf32>
    %132 = arith.divf %130, %131 : vector<3x256xf32>
    %c0_118 = arith.constant 0 : index
    %c0_119 = arith.constant 0 : index
    %133 = vector.load %arg15[%c0_118, %c0_119] : memref<3x6xf32, #tpu.memory_space<vmem>>, vector<3x6xf32>
    %134 = arith.mulf %128, %128 : vector<6x256xf32>
    %cst_120 = arith.constant dense<0.000000e+00> : vector<3x256xf32>
    %135 = tpu.matmul %133, %134, %cst_120 {dimension_numbers = #tpu.dot_dimension_numbers<[1], [0], [0], [1], [0, 0, 1, 1], [], []>} : vector<3x6xf32>, vector<6x256xf32>, vector<3x256xf32> -> vector<3x256xf32>
    %cst_121 = arith.constant 2.000000e+00 : f32
    %136 = vector.broadcast %cst_121 : f32 to vector<3x256xf32>
    %137 = arith.divf %135, %136 : vector<3x256xf32>
    %c0_122 = arith.constant 0 : index
    %c0_123 = arith.constant 0 : index
    %138 = vector.load %arg14[%c0_122, %c0_123] : memref<6x3xf32, #tpu.memory_space<vmem>>, vector<6x3xf32>
    %cst_124 = arith.constant dense<0.000000e+00> : vector<6x256xf32>
    %139 = tpu.matmul %138, %132, %cst_124 {dimension_numbers = #tpu.dot_dimension_numbers<[1], [0], [0], [1], [0, 0, 1, 1], [], []>} : vector<6x3xf32>, vector<3x256xf32>, vector<6x256xf32> -> vector<6x256xf32>
    %c0_125 = arith.constant 0 : index
    %c0_126 = arith.constant 0 : index
    %140 = vector.load %arg14[%c0_125, %c0_126] : memref<6x3xf32, #tpu.memory_space<vmem>>, vector<6x3xf32>
    %cst_127 = arith.constant dense<0.000000e+00> : vector<6x256xf32>
    %141 = tpu.matmul %140, %137, %cst_127 {dimension_numbers = #tpu.dot_dimension_numbers<[1], [0], [0], [1], [0, 0, 1, 1], [], []>} : vector<6x3xf32>, vector<3x256xf32>, vector<6x256xf32> -> vector<6x256xf32>
    %142 = arith.subf %128, %139 : vector<6x256xf32>
    %143 = arith.mulf %139, %139 : vector<6x256xf32>
    %144 = arith.subf %141, %143 : vector<6x256xf32>
    %cst_128 = arith.constant 9.99999974E-6 : f32
    %145 = vector.broadcast %cst_128 : f32 to vector<6x256xf32>
    %146 = arith.addf %144, %145 : vector<6x256xf32>
    %147 = math.rsqrt %146 : vector<6x256xf32>
    %148 = arith.mulf %142, %147 : vector<6x256xf32>
    %cst_129 = arith.constant 0.000000e+00 : f32
    %149 = vector.broadcast %cst_129 : f32 to vector<6x256xf32>
    %150 = arith.maximumf %148, %149 : vector<6x256xf32>
    %151 = arith.truncf %150 : vector<6x256xf32> to vector<6x256xbf16>
    %c0_130 = arith.constant 0 : index
    %c0_131 = arith.constant 0 : index
    %152 = vector.load %arg16[%c0_130, %c0_131] : memref<256x128xbf16, #tpu.memory_space<vmem>>, vector<256x128xbf16>
    %cst_132 = arith.constant dense<0.000000e+00> : vector<6x128xf32>
    %153 = tpu.matmul %151, %152, %cst_132 {dimension_numbers = #tpu.dot_dimension_numbers<[1], [0], [0], [1], [0, 0, 1, 1], [], []>} : vector<6x256xbf16>, vector<256x128xbf16>, vector<6x128xf32> -> vector<6x128xf32>
    %c0_133 = arith.constant 0 : index
    %c0_134 = arith.constant 0 : index
    %154 = vector.load %arg15[%c0_133, %c0_134] : memref<3x6xf32, #tpu.memory_space<vmem>>, vector<3x6xf32>
    %cst_135 = arith.constant dense<0.000000e+00> : vector<3x128xf32>
    %155 = tpu.matmul %154, %153, %cst_135 {dimension_numbers = #tpu.dot_dimension_numbers<[1], [0], [0], [1], [0, 0, 1, 1], [], []>} : vector<3x6xf32>, vector<6x128xf32>, vector<3x128xf32> -> vector<3x128xf32>
    %cst_136 = arith.constant 2.000000e+00 : f32
    %156 = vector.broadcast %cst_136 : f32 to vector<3x128xf32>
    %157 = arith.divf %155, %156 : vector<3x128xf32>
    %c0_137 = arith.constant 0 : index
    %c0_138 = arith.constant 0 : index
    %158 = vector.load %arg15[%c0_137, %c0_138] : memref<3x6xf32, #tpu.memory_space<vmem>>, vector<3x6xf32>
    %159 = arith.mulf %153, %153 : vector<6x128xf32>
    %cst_139 = arith.constant dense<0.000000e+00> : vector<3x128xf32>
    %160 = tpu.matmul %158, %159, %cst_139 {dimension_numbers = #tpu.dot_dimension_numbers<[1], [0], [0], [1], [0, 0, 1, 1], [], []>} : vector<3x6xf32>, vector<6x128xf32>, vector<3x128xf32> -> vector<3x128xf32>
    %cst_140 = arith.constant 2.000000e+00 : f32
    %161 = vector.broadcast %cst_140 : f32 to vector<3x128xf32>
    %162 = arith.divf %160, %161 : vector<3x128xf32>
    %c0_141 = arith.constant 0 : index
    %c0_142 = arith.constant 0 : index
    %163 = vector.load %arg14[%c0_141, %c0_142] : memref<6x3xf32, #tpu.memory_space<vmem>>, vector<6x3xf32>
    %cst_143 = arith.constant dense<0.000000e+00> : vector<6x128xf32>
    %164 = tpu.matmul %163, %157, %cst_143 {dimension_numbers = #tpu.dot_dimension_numbers<[1], [0], [0], [1], [0, 0, 1, 1], [], []>} : vector<6x3xf32>, vector<3x128xf32>, vector<6x128xf32> -> vector<6x128xf32>
    %c0_144 = arith.constant 0 : index
    %c0_145 = arith.constant 0 : index
    %165 = vector.load %arg14[%c0_144, %c0_145] : memref<6x3xf32, #tpu.memory_space<vmem>>, vector<6x3xf32>
    %cst_146 = arith.constant dense<0.000000e+00> : vector<6x128xf32>
    %166 = tpu.matmul %165, %162, %cst_146 {dimension_numbers = #tpu.dot_dimension_numbers<[1], [0], [0], [1], [0, 0, 1, 1], [], []>} : vector<6x3xf32>, vector<3x128xf32>, vector<6x128xf32> -> vector<6x128xf32>
    %167 = arith.subf %153, %164 : vector<6x128xf32>
    %168 = arith.mulf %164, %164 : vector<6x128xf32>
    %169 = arith.subf %166, %168 : vector<6x128xf32>
    %cst_147 = arith.constant 9.99999974E-6 : f32
    %170 = vector.broadcast %cst_147 : f32 to vector<6x128xf32>
    %171 = arith.addf %169, %170 : vector<6x128xf32>
    %172 = math.rsqrt %171 : vector<6x128xf32>
    %173 = arith.mulf %167, %172 : vector<6x128xf32>
    %cst_148 = arith.constant 0.000000e+00 : f32
    %174 = vector.broadcast %cst_148 : f32 to vector<6x128xf32>
    %175 = arith.maximumf %173, %174 : vector<6x128xf32>
    %176 = arith.truncf %175 : vector<6x128xf32> to vector<6x128xbf16>
    %c0_149 = arith.constant 0 : index
    %c0_150 = arith.constant 0 : index
    %177 = vector.load %arg17[%c0_149, %c0_150] : memref<128x128xbf16, #tpu.memory_space<vmem>>, vector<128x128xbf16>
    %cst_151 = arith.constant dense<0.000000e+00> : vector<6x128xf32>
    %178 = tpu.matmul %176, %177, %cst_151 {dimension_numbers = #tpu.dot_dimension_numbers<[1], [0], [0], [1], [0, 0, 1, 1], [], []>} : vector<6x128xbf16>, vector<128x128xbf16>, vector<6x128xf32> -> vector<6x128xf32>
    %c0_152 = arith.constant 0 : index
    %c0_153 = arith.constant 0 : index
    %179 = vector.load %arg18[%c0_152, %c0_153] : memref<1x128xf32, #tpu.memory_space<vmem>>, vector<1x128xf32>
    %180 = vector.broadcast %179 : vector<1x128xf32> to vector<6x128xf32>
    %181 = arith.addf %178, %180 : vector<6x128xf32>
    %c0_154 = arith.constant 0 : index
    %c0_155 = arith.constant 0 : index
    %182 = vector.load %arg19[%c0_154, %c0_155] : memref<6x128xf32, #tpu.memory_space<vmem>>, vector<6x128xf32>
    tpu.vector_store %arg19[%c0_154, %c0_155], %181 {strides = array<i32>} : memref<6x128xf32, #tpu.memory_space<vmem>>, vector<6x128xf32>,
    return
  }
}

</mosaic_0001>

<llo_original>
// kernel: train_models_nce_forward.1
$region0: #{train_models_nce_forward.1}
  #allocation0 [shape = 'u32[]', space=smem, size = 0x4, offset = 0x4, fixed_abs, tag = 'smem constant byte address 0x4 - core index']
  #allocation1 [shape = 'u32[144,128]{1,0:T(1,128)}', space=vmem, size = 0x12000, scoped, tag = 'internal scratch']
  %s0 = inlined_call_operand.vmem [shape: bf16[192,96], index: 0, kind: input, shape index: {}]
  %s1 = inlined_call_operand.vmem [shape: bf16[3,96,192], index: 1, kind: input, shape index: {}]
  %s2 = inlined_call_operand.vmem [shape: bf16[3,96,128], index: 2, kind: input, shape index: {}]
  %s3 = inlined_call_operand.vmem [shape: f32[1,128], index: 3, kind: input, shape index: {}, may-alias: {3,11,18}]
  %s4 = inlined_call_operand.vmem [shape: bf16[3,48,96], index: 4, kind: input, shape index: {}]
  %s5 = inlined_call_operand.vmem [shape: bf16[3,128,128], index: 5, kind: input, shape index: {}]
  %s6 = inlined_call_operand.vmem [shape: f32[48,3], index: 6, kind: input, shape index: {}]
  %s7 = inlined_call_operand.vmem [shape: f32[3,48], index: 7, kind: input, shape index: {}]
  %s8 = inlined_call_operand.vmem [shape: f32[128,128], index: 8, kind: input, shape index: {}]
  %s9 = inlined_call_operand.vmem [shape: bf16[3,32,48], index: 9, kind: input, shape index: {}]
  %s10 = inlined_call_operand.vmem [shape: bf16[3,128,128], index: 10, kind: input, shape index: {}]
  %s11 = inlined_call_operand.vmem [shape: f32[1,128], index: 11, kind: input, shape index: {}, may-alias: {3,11,18}]
  %s12 = inlined_call_operand.vmem [shape: bf16[2,6,16], index: 12, kind: input, shape index: {}]
  %s13 = inlined_call_operand.vmem [shape: bf16[2,128,256], index: 13, kind: input, shape index: {}]
  %s14 = inlined_call_operand.vmem [shape: f32[6,3], index: 14, kind: input, shape index: {}]
  %s15 = inlined_call_operand.vmem [shape: f32[3,6], index: 15, kind: input, shape index: {}]
  %s16 = inlined_call_operand.vmem [shape: bf16[256,128], index: 16, kind: input, shape index: {}]
  %s17 = inlined_call_operand.vmem [shape: bf16[128,128], index: 17, kind: input, shape index: {}]
  %s18 = inlined_call_operand.vmem [shape: f32[1,128], index: 18, kind: input, shape index: {}, may-alias: {3,11,18}]
  %s19 = inlined_call_operand.vmem [shape: f32[6,128], index: 19, kind: output, shape index: {}]
  %s20 = sld [smem:[#allocation0]]
  $region86: #{train_models_nce_forward.1} parent=0
    _
  %s22 = ssub.s32 1, %s20
  %s23 = scalar_select 0, %s22, %s20
  // Predicated region
  $region2: #{train_models_nce_forward.1} parent=0 // pred_check
    _
  $region3: #{train_models_nce_forward.1} parent=0 // pred_check_branch
    %25 = sbr.rel (0) target = $region5
  $region4: #{train_models_nce_forward.1} parent=0 // pred_region
    _
  $region5: #{train_models_nce_forward.1} parent=0 // pred_fallthru
    _
  // Predicated region
  $region6: #{train_models_nce_forward.1} parent=0 // pred_check
    _
  $region7: #{train_models_nce_forward.1} parent=0 // pred_check_branch
    %27 = sbr.rel (0) target = $region9
  $region8: #{train_models_nce_forward.1} parent=0 // pred_region
    _
  $region9: #{train_models_nce_forward.1} parent=0 // pred_fallthru
    _
  // Predicated region
  $region10: #{train_models_nce_forward.1} parent=0 // pred_check
    _
  $region11: #{train_models_nce_forward.1} parent=0 // pred_check_branch
    %29 = sbr.rel (0) target = $region13
  $region12: #{train_models_nce_forward.1} parent=0 // pred_region
    _
  $region13: #{train_models_nce_forward.1} parent=0 // pred_fallthru
    _
  // Predicated region
  $region14: #{train_models_nce_forward.1} parent=0 // pred_check
    _
  $region15: #{train_models_nce_forward.1} parent=0 // pred_check_branch
    %31 = sbr.rel (0) target = $region17
  $region16: #{train_models_nce_forward.1} parent=0 // pred_region
    _
  $region17: #{train_models_nce_forward.1} parent=0 // pred_fallthru
    _
  // Predicated region
  $region18: #{train_models_nce_forward.1} parent=0 // pred_check
    _
  $region19: #{train_models_nce_forward.1} parent=0 // pred_check_branch
    %33 = sbr.rel (0) target = $region21
  $region20: #{train_models_nce_forward.1} parent=0 // pred_region
    _
  $region21: #{train_models_nce_forward.1} parent=0 // pred_fallthru
    _
  // Predicated region
  $region22: #{train_models_nce_forward.1} parent=0 // pred_check
    _
  $region23: #{train_models_nce_forward.1} parent=0 // pred_check_branch
    %35 = sbr.rel (0) target = $region25
  $region24: #{train_models_nce_forward.1} parent=0 // pred_region
    _
  $region25: #{train_models_nce_forward.1} parent=0 // pred_fallthru
    _
  // Predicated region
  $region26: #{train_models_nce_forward.1} parent=0 // pred_check
    _
  $region27: #{train_models_nce_forward.1} parent=0 // pred_check_branch
    %37 = sbr.rel (0) target = $region29
  $region28: #{train_models_nce_forward.1} parent=0 // pred_region
    _
  $region29: #{train_models_nce_forward.1} parent=0 // pred_fallthru
    _
  // Predicated region
  $region30: #{train_models_nce_forward.1} parent=0 // pred_check
    _
  $region31: #{train_models_nce_forward.1} parent=0 // pred_check_branch
    %39 = sbr.rel (0) target = $region33
  $region32: #{train_models_nce_forward.1} parent=0 // pred_region
    _
  $region33: #{train_models_nce_forward.1} parent=0 // pred_fallthru
    _
  // Predicated region
  $region34: #{train_models_nce_forward.1} parent=0 // pred_check
    _
  $region35: #{train_models_nce_forward.1} parent=0 // pred_check_branch
    %41 = sbr.rel (0) target = $region37
  $region36: #{train_models_nce_forward.1} parent=0 // pred_region
    _
  $region37: #{train_models_nce_forward.1} parent=0 // pred_fallthru
    _
  // Predicated region
  $region38: #{train_models_nce_forward.1} parent=0 // pred_check
    _
  $region39: #{train_models_nce_forward.1} parent=0 // pred_check_branch
    %43 = sbr.rel (0) target = $region41
  $region40: #{train_models_nce_forward.1} parent=0 // pred_region
    _
  $region41: #{train_models_nce_forward.1} parent=0 // pred_fallthru
    _
  // Predicated region
  $region42: #{train_models_nce_forward.1} parent=0 // pred_check
    _
  $region43: #{train_models_nce_forward.1} parent=0 // pred_check_branch
    %45 = sbr.rel (0) target = $region45
  $region44: #{train_models_nce_forward.1} parent=0 // pred_region
    _
  $region45: #{train_models_nce_forward.1} parent=0 // pred_fallthru
    _
  // Predicated region
  $region46: #{train_models_nce_forward.1} parent=0 // pred_check
    _
  $region47: #{train_models_nce_forward.1} parent=0 // pred_check_branch
    %47 = sbr.rel (0) target = $region49
  $region48: #{train_models_nce_forward.1} parent=0 // pred_region
    _
  $region49: #{train_models_nce_forward.1} parent=0 // pred_fallthru
    _
  // Predicated region
  $region50: #{train_models_nce_forward.1} parent=0 // pred_check
    _
  $region51: #{train_models_nce_forward.1} parent=0 // pred_check_branch
    %49 = sbr.rel (0) target = $region53
  $region52: #{train_models_nce_forward.1} parent=0 // pred_region
    _
  $region53: #{train_models_nce_forward.1} parent=0 // pred_fallthru
    _
  // Predicated region
  $region54: #{train_models_nce_forward.1} parent=0 // pred_check
    _
  $region55: #{train_models_nce_forward.1} parent=0 // pred_check_branch
    %51 = sbr.rel (0) target = $region57
  $region56: #{train_models_nce_forward.1} parent=0 // pred_region
    _
  $region57: #{train_models_nce_forward.1} parent=0 // pred_fallthru
    _
  // Predicated region
  $region58: #{train_models_nce_forward.1} parent=0 // pred_check
    _
  $region59: #{train_models_nce_forward.1} parent=0 // pred_check_branch
    %53 = sbr.rel (0) target = $region61
  $region60: #{train_models_nce_forward.1} parent=0 // pred_region
    _
  $region61: #{train_models_nce_forward.1} parent=0 // pred_fallthru
    _
  // Predicated region
  $region62: #{train_models_nce_forward.1} parent=0 // pred_check
    _
  $region63: #{train_models_nce_forward.1} parent=0 // pred_check_branch
    %55 = sbr.rel (0) target = $region65
  $region64: #{train_models_nce_forward.1} parent=0 // pred_region
    _
  $region65: #{train_models_nce_forward.1} parent=0 // pred_fallthru
    _
  // Predicated region
  $region66: #{train_models_nce_forward.1} parent=0 // pred_check
    _
  $region67: #{train_models_nce_forward.1} parent=0 // pred_check_branch
    %57 = sbr.rel (0) target = $region69
  $region68: #{train_models_nce_forward.1} parent=0 // pred_region
    _
  $region69: #{train_models_nce_forward.1} parent=0 // pred_fallthru
    _
  // Predicated region
  $region70: #{train_models_nce_forward.1} parent=0 // pred_check
    _
  $region71: #{train_models_nce_forward.1} parent=0 // pred_check_branch
    %59 = sbr.rel (0) target = $region73
  $region72: #{train_models_nce_forward.1} parent=0 // pred_region
    _
  $region73: #{train_models_nce_forward.1} parent=0 // pred_fallthru
    _
  // Predicated region
  $region74: #{train_models_nce_forward.1} parent=0 // pred_check
    _
  $region75: #{train_models_nce_forward.1} parent=0 // pred_check_branch
    %61 = sbr.rel (0) target = $region77
  $region76: #{train_models_nce_forward.1} parent=0 // pred_region
    _
  $region77: #{train_models_nce_forward.1} parent=0 // pred_fallthru
    _
  %v63 = vld [vmem:[%s0] sm:$0xf]
  %v64 = vld [vmem:[%s0 + $0x4] sm:$0xf]
  %v65 = vld [vmem:[%s0 + $0x8] sm:$0xf]
  %v66 = vld [vmem:[%s0 + $0xc] sm:$0xf]
  %v67 = vld [vmem:[%s0 + $0x10] sm:$0xf]
  %v68 = vld [vmem:[%s0 + $0x14] sm:$0xf]
  %v69 = vld [vmem:[%s0 + $0x18] sm:$0xf]
  %v70 = vld [vmem:[%s0 + $0x1c] sm:$0xf]
  %v71 = vld [vmem:[%s0 + $0x20] sm:$0xf]
  %v72 = vld [vmem:[%s0 + $0x24] sm:$0xf]
  %v73 = vld [vmem:[%s0 + $0x28] sm:$0xf]
  %v74 = vld [vmem:[%s0 + $0x2c] sm:$0xf]
  %v75 = vld [vmem:[%s0 + $0x30] sm:$0xf]
  %v76 = vld [vmem:[%s0 + $0x34] sm:$0xf]
  %v77 = vld [vmem:[%s0 + $0x38] sm:$0xf]
  %v78 = vld [vmem:[%s0 + $0x3c] sm:$0xf]
  %v79 = vld [vmem:[%s0 + $0x40] sm:$0xf]
  %v80 = vld [vmem:[%s0 + $0x44] sm:$0xf]
  %v81 = vld [vmem:[%s0 + $0x48] sm:$0xf]
  %v82 = vld [vmem:[%s0 + $0x4c] sm:$0xf]
  %v83 = vld [vmem:[%s0 + $0x50] sm:$0xf]
  %v84 = vld [vmem:[%s0 + $0x54] sm:$0xf]
  %v85 = vld [vmem:[%s0 + $0x58] sm:$0xf]
  %v86 = vld [vmem:[%s0 + $0x5c] sm:$0xf]
  %v87 = vld [vmem:[%s1] sm:$0xff]
  %v88 = vld [vmem:[%s1 + $0x8] sm:$0xff]
  %v89 = vld [vmem:[%s1 + $0x10] sm:$0xff]
  %v90 = vld [vmem:[%s1 + $0x18] sm:$0xff]
  %v91 = vld [vmem:[%s1 + $0x20] sm:$0xff]
  %v92 = vld [vmem:[%s1 + $0x28] sm:$0xff]
  %v93 = vld [vmem:[%s1 + $0x30] sm:$0xff]
  %v94 = vld [vmem:[%s1 + $0x38] sm:$0xff]
  %v95 = vld [vmem:[%s1 + $0x40] sm:$0xff]
  %v96 = vld [vmem:[%s1 + $0x48] sm:$0xff]
  %v97 = vld [vmem:[%s1 + $0x50] sm:$0xff]
  %v98 = vld [vmem:[%s1 + $0x58] sm:$0xff]
  %v111 = vunpack.c.l.b16 %v87
  %v112 = vunpack.c.h.b16 %v87
  %v113 = vunpack.c.l.b16 %v88
  %v114 = vunpack.c.h.b16 %v88
  %v115 = vunpack.c.l.b16 %v89
  %v116 = vunpack.c.h.b16 %v89
  %v117 = vunpack.c.l.b16 %v90
  %v118 = vunpack.c.h.b16 %v90
  %v119 = vunpack.c.l.b16 %v91
  %v120 = vunpack.c.h.b16 %v91
  %v121 = vunpack.c.l.b16 %v92
  %v122 = vunpack.c.h.b16 %v92
  %v123 = vunpack.c.l.b16 %v93
  %v124 = vunpack.c.h.b16 %v93
  %v125 = vunpack.c.l.b16 %v94
  %v126 = vunpack.c.h.b16 %v94
  %v127 = vunpack.c.l.b16 %v95
  %v128 = vunpack.c.h.b16 %v95
  %v129 = vunpack.c.l.b16 %v96
  %v130 = vunpack.c.h.b16 %v96
  %v131 = vunpack.c.l.b16 %v97
  %v132 = vunpack.c.h.b16 %v97
  %v133 = vunpack.c.l.b16 %v98
  %v134 = vunpack.c.h.b16 %v98
  %v135 = vpack.c.b16 %v113, %v111
  %v136 = vpack.c.b16 %v114, %v112
  %v137 = vpack.c.b16 %v117, %v115
  %v138 = vpack.c.b16 %v118, %v116
  %v139 = vpack.c.b16 %v121, %v119
  %v140 = vpack.c.b16 %v122, %v120
  %v141 = vpack.c.b16 %v125, %v123
  %v142 = vpack.c.b16 %v126, %v124
  %v143 = vpack.c.b16 %v129, %v127
  %v144 = vpack.c.b16 %v130, %v128
  %v145 = vpack.c.b16 %v133, %v131
  %v146 = vpack.c.b16 %v134, %v132
  %v177 = vunpack.c.l.b16 %v63
  %v178 = vunpack.c.l.b16 %v64
  %v179 = vunpack.c.l.b16 %v65
  %v180 = vunpack.c.l.b16 %v66
  %v181 = vunpack.c.l.b16 %v67
  %v182 = vunpack.c.l.b16 %v68
  %v183 = vunpack.c.l.b16 %v69
  %v184 = vunpack.c.l.b16 %v70
  %v185 = vunpack.c.l.b16 %v71
  %v186 = vunpack.c.l.b16 %v72
  %v187 = vunpack.c.l.b16 %v73
  %v188 = vunpack.c.l.b16 %v74
  %v189 = vunpack.c.l.b16 %v75
  %v190 = vunpack.c.l.b16 %v76
  %v191 = vunpack.c.l.b16 %v77
  %v192 = vunpack.c.l.b16 %v78
  %v193 = vunpack.c.l.b16 %v79
  %v194 = vunpack.c.l.b16 %v80
  %v195 = vunpack.c.l.b16 %v81
  %v196 = vunpack.c.l.b16 %v82
  %v197 = vunpack.c.l.b16 %v83
  %v198 = vunpack.c.l.b16 %v84
  %v199 = vunpack.c.l.b16 %v85
  %v200 = vunpack.c.l.b16 %v86
  %v201 = vpack.c.b16 %v178, %v177
  %v202 = vpack.c.b16 %v180, %v179
  %v203 = vpack.c.b16 %v182, %v181
  %v204 = vpack.c.b16 %v184, %v183
  %v205 = vpack.c.b16 %v186, %v185
  %v206 = vpack.c.b16 %v188, %v187
  %v207 = vpack.c.b16 %v190, %v189
  %v208 = vpack.c.b16 %v192, %v191
  %v209 = vpack.c.b16 %v194, %v193
  %v210 = vpack.c.b16 %v196, %v195
  %v211 = vpack.c.b16 %v198, %v197
  %v212 = vpack.c.b16 %v200, %v199
  %vm225 = vcmask 523264
  %v227 = vsel %vm225, %v136, 0
  %v230 = vsel %vm225, %v138, 0
  %v233 = vsel %vm225, %v140, 0
  %v236 = vsel %vm225, %v142, 0
  %v239 = vsel %vm225, %v144, 0
  %v242 = vsel %vm225, %v146, 0
  %244 = vmatprep.subr.bf16.mxu0 0
  %245 = vmatpush1.bf16.msra.mxu0 %v208
  %246 = vmatprep.subr.bf16.mxu0 0
  %247 = vmatpush1.bf16.msra.mxu0 %v207
  %248 = vmatprep.subr.bf16.mxu0 0
  %249 = vmatpush1.bf16.msra.mxu0 %v206
  %250 = vmatprep.subr.bf16.mxu0 0
  %251 = vmatpush1.bf16.msra.mxu0 %v205
  %252 = vmatprep.subr.bf16.mxu0 0
  %253 = vmatpush1.bf16.msra.mxu0 %v204
  %254 = vmatprep.subr.bf16.mxu0 0
  %255 = vmatpush1.bf16.msra.mxu0 %v203
  %256 = vmatprep.subr.bf16.mxu0 0
  %257 = vmatpush1.bf16.msra.mxu0 %v202
  %258 = vmatprep.subr.bf16.mxu0 0
  %259 = vmatpush1.bf16.msra.mxu0 %v201
  %260 = vmatprep.subr.bf16.mxu0 0
  %261 = vmatpush2.bf16.msra.mxu0 0
  %262 = vmatprep.subr.bf16.mxu0 0
  %263 = vmatpush2.bf16.msra.mxu0 0
  %264 = vmatprep.subr.bf16.mxu0 0
  %265 = vmatpush2.bf16.msra.mxu0 0
  %266 = vmatprep.subr.bf16.mxu0 0
  %267 = vmatpush2.bf16.msra.mxu0 0
  %268 = vmatprep.subr.bf16.mxu0 0
  %269 = vmatpush2.bf16.msra.mxu0 %v212
  %270 = vmatprep.subr.bf16.mxu0 0
  %271 = vmatpush2.bf16.msra.mxu0 %v211
  %272 = vmatprep.subr.bf16.mxu0 0
  %273 = vmatpush2.bf16.msra.mxu0 %v210
  %274 = vmatprep.subr.bf16.mxu0 0
  %275 = vmatpush2.bf16.msra.mxu0 %v209
  %276 = vmatprep.mubr.bf16.mxu0 %v227
  %277 = vmatmul.mubr.bf16.gmra.mxu0 %v135
  %v278 = vpop.f32.mrf.mxu0
  %v279 = vadd.f32 0.0, %v278
  %v280 = vpop.f32.mrf.mxu0
  %v281 = vpop.f32.mrf.mxu0
  %v282 = vadd.f32 0.0, %v281
  %v283 = vpop.f32.mrf.mxu0
  %284 = vmatprep.mubr.bf16.mxu0 %v230
  %285 = vmatmul.mubr.bf16.gmra.mxu0 %v137
  %v286 = vpop.f32.mrf.mxu0
  %v287 = vadd.f32 0.0, %v286
  %v288 = vpop.f32.mrf.mxu0
  %v289 = vpop.f32.mrf.mxu0
  %v290 = vadd.f32 0.0, %v289
  %v291 = vpop.f32.mrf.mxu0
  %292 = vmatprep.mubr.bf16.mxu0 %v233
  %293 = vmatmul.mubr.bf16.gmra.mxu0 %v139
  %v294 = vpop.f32.mrf.mxu0
  %v295 = vadd.f32 0.0, %v294
  %v296 = vpop.f32.mrf.mxu0
  %v297 = vpop.f32.mrf.mxu0
  %v298 = vadd.f32 0.0, %v297
  %v299 = vpop.f32.mrf.mxu0
  %300 = vmatprep.mubr.bf16.mxu0 %v236
  %301 = vmatmul.mubr.bf16.gmra.mxu0 %v141
  %v302 = vpop.f32.mrf.mxu0
  %v303 = vadd.f32 0.0, %v302
  %v304 = vpop.f32.mrf.mxu0
  %v305 = vpop.f32.mrf.mxu0
  %v306 = vadd.f32 0.0, %v305
  %v307 = vpop.f32.mrf.mxu0
  %308 = vmatprep.mubr.bf16.mxu0 %v239
  %309 = vmatmul.mubr.bf16.gmra.mxu0 %v143
  %v310 = vpop.f32.mrf.mxu0
  %v311 = vadd.f32 0.0, %v310
  %v312 = vpop.f32.mrf.mxu0
  %v313 = vpop.f32.mrf.mxu0
  %v314 = vadd.f32 0.0, %v313
  %v315 = vpop.f32.mrf.mxu0
  %316 = vmatprep.mubr.bf16.mxu0 %v242
  %317 = vmatmul.mubr.bf16.gmra.mxu0 %v145
  %v318 = vpop.f32.mrf.mxu0
  %v319 = vadd.f32 0.0, %v318
  %v320 = vpop.f32.mrf.mxu0
  %v321 = vpop.f32.mrf.mxu0
  %v322 = vadd.f32 0.0, %v321
  %v323 = vpop.f32.mrf.mxu0
  %324 = vdwg.mxu0
  %v325 = vpack.c.bf16 %v282, %v279
  %v326 = vpack.c.bf16 %v290, %v287
  %v327 = vpack.c.bf16 %v298, %v295
  %v328 = vpack.c.bf16 %v306, %v303
  %v329 = vpack.c.bf16 %v314, %v311
  %v330 = vpack.c.bf16 %v322, %v319
  %v331 = vld [vmem:[%s2] sm:$0xf]
  %v332 = vld [vmem:[%s2 + $0x4] sm:$0xf]
  %v333 = vld [vmem:[%s2 + $0x8] sm:$0xf]
  %v334 = vld [vmem:[%s2 + $0xc] sm:$0xf]
  %v335 = vld [vmem:[%s2 + $0x10] sm:$0xf]
  %v336 = vld [vmem:[%s2 + $0x14] sm:$0xf]
  %v337 = vld [vmem:[%s2 + $0x18] sm:$0xf]
  %v338 = vld [vmem:[%s2 + $0x1c] sm:$0xf]
  %v339 = vld [vmem:[%s2 + $0x20] sm:$0xf]
  %v340 = vld [vmem:[%s2 + $0x24] sm:$0xf]
  %v341 = vld [vmem:[%s2 + $0x28] sm:$0xf]
  %v342 = vld [vmem:[%s2 + $0x2c] sm:$0xf]
  %s343 = scalar_lea.vmem %s1, 96
  %v344 = vld [vmem:[%s343] sm:$0xff]
  %v345 = vld [vmem:[%s343 + $0x8] sm:$0xff]
  %v346 = vld [vmem:[%s343 + $0x10] sm:$0xff]
  %v347 = vld [vmem:[%s343 + $0x18] sm:$0xff]
  %v348 = vld [vmem:[%s343 + $0x20] sm:$0xff]
  %v349 = vld [vmem:[%s343 + $0x28] sm:$0xff]
  %v350 = vld [vmem:[%s343 + $0x30] sm:$0xff]
  %v351 = vld [vmem:[%s343 + $0x38] sm:$0xff]
  %v352 = vld [vmem:[%s343 + $0x40] sm:$0xff]
  %v353 = vld [vmem:[%s343 + $0x48] sm:$0xff]
  %v354 = vld [vmem:[%s343 + $0x50] sm:$0xff]
  %v355 = vld [vmem:[%s343 + $0x58] sm:$0xff]
  %v368 = vunpack.c.l.b16 %v344
  %v369 = vunpack.c.h.b16 %v344
  %v370 = vunpack.c.l.b16 %v345
  %v371 = vunpack.c.h.b16 %v345
  %v372 = vunpack.c.l.b16 %v346
  %v373 = vunpack.c.h.b16 %v346
  %v374 = vunpack.c.l.b16 %v347
  %v375 = vunpack.c.h.b16 %v347
  %v376 = vunpack.c.l.b16 %v348
  %v377 = vunpack.c.h.b16 %v348
  %v378 = vunpack.c.l.b16 %v349
  %v379 = vunpack.c.h.b16 %v349
  %v380 = vunpack.c.l.b16 %v350
  %v381 = vunpack.c.h.b16 %v350
  %v382 = vunpack.c.l.b16 %v351
  %v383 = vunpack.c.h.b16 %v351
  %v384 = vunpack.c.l.b16 %v352
  %v385 = vunpack.c.h.b16 %v352
  %v386 = vunpack.c.l.b16 %v353
  %v387 = vunpack.c.h.b16 %v353
  %v388 = vunpack.c.l.b16 %v354
  %v389 = vunpack.c.h.b16 %v354
  %v390 = vunpack.c.l.b16 %v355
  %v391 = vunpack.c.h.b16 %v355
  %v392 = vpack.c.b16 %v370, %v368
  %v393 = vpack.c.b16 %v371, %v369
  %v394 = vpack.c.b16 %v374, %v372
  %v395 = vpack.c.b16 %v375, %v373
  %v396 = vpack.c.b16 %v378, %v376
  %v397 = vpack.c.b16 %v379, %v377
  %v398 = vpack.c.b16 %v382, %v380
  %v399 = vpack.c.b16 %v383, %v381
  %v400 = vpack.c.b16 %v386, %v384
  %v401 = vpack.c.b16 %v387, %v385
  %v402 = vpack.c.b16 %v390, %v388
  %v403 = vpack.c.b16 %v391, %v389
  %v411 = vsel %vm225, %v393, 0
  %v414 = vsel %vm225, %v395, 0
  %v417 = vsel %vm225, %v397, 0
  %v420 = vsel %vm225, %v399, 0
  %v423 = vsel %vm225, %v401, 0
  %v426 = vsel %vm225, %v403, 0
  %428 = vmatprep.subr.bf16.mxu0 0
  %429 = vmatpush1.bf16.msra.mxu0 %v208
  %430 = vmatprep.subr.bf16.mxu0 0
  %431 = vmatpush1.bf16.msra.mxu0 %v207
  %432 = vmatprep.subr.bf16.mxu0 0
  %433 = vmatpush1.bf16.msra.mxu0 %v206
  %434 = vmatprep.subr.bf16.mxu0 0
  %435 = vmatpush1.bf16.msra.mxu0 %v205
  %436 = vmatprep.subr.bf16.mxu0 0
  %437 = vmatpush1.bf16.msra.mxu0 %v204
  %438 = vmatprep.subr.bf16.mxu0 0
  %439 = vmatpush1.bf16.msra.mxu0 %v203
  %440 = vmatprep.subr.bf16.mxu0 0
  %441 = vmatpush1.bf16.msra.mxu0 %v202
  %442 = vmatprep.subr.bf16.mxu0 0
  %443 = vmatpush1.bf16.msra.mxu0 %v201
  %444 = vmatprep.subr.bf16.mxu0 0
  %445 = vmatpush2.bf16.msra.mxu0 0
  %446 = vmatprep.subr.bf16.mxu0 0
  %447 = vmatpush2.bf16.msra.mxu0 0
  %448 = vmatprep.subr.bf16.mxu0 0
  %449 = vmatpush2.bf16.msra.mxu0 0
  %450 = vmatprep.subr.bf16.mxu0 0
  %451 = vmatpush2.bf16.msra.mxu0 0
  %452 = vmatprep.subr.bf16.mxu0 0
  %453 = vmatpush2.bf16.msra.mxu0 %v212
  %454 = vmatprep.subr.bf16.mxu0 0
  %455 = vmatpush2.bf16.msra.mxu0 %v211
  %456 = vmatprep.subr.bf16.mxu0 0
  %457 = vmatpush2.bf16.msra.mxu0 %v210
  %458 = vmatprep.subr.bf16.mxu0 0
  %459 = vmatpush2.bf16.msra.mxu0 %v209
  %460 = vmatprep.mubr.bf16.mxu0 %v411
  %461 = vmatmul.mubr.bf16.gmra.mxu0 %v392
  %v462 = vpop.f32.mrf.mxu0
  %v463 = vadd.f32 0.0, %v462
  %v464 = vpop.f32.mrf.mxu0
  %v465 = vpop.f32.mrf.mxu0
  %v466 = vadd.f32 0.0, %v465
  %v467 = vpop.f32.mrf.mxu0
  %468 = vmatprep.mubr.bf16.mxu0 %v414
  %469 = vmatmul.mubr.bf16.gmra.mxu0 %v394
  %v470 = vpop.f32.mrf.mxu0
  %v471 = vadd.f32 0.0, %v470
  %v472 = vpop.f32.mrf.mxu0
  %v473 = vpop.f32.mrf.mxu0
  %v474 = vadd.f32 0.0, %v473
  %v475 = vpop.f32.mrf.mxu0
  %476 = vmatprep.mubr.bf16.mxu0 %v417
  %477 = vmatmul.mubr.bf16.gmra.mxu0 %v396
  %v478 = vpop.f32.mrf.mxu0
  %v479 = vadd.f32 0.0, %v478
  %v480 = vpop.f32.mrf.mxu0
  %v481 = vpop.f32.mrf.mxu0
  %v482 = vadd.f32 0.0, %v481
  %v483 = vpop.f32.mrf.mxu0
  %484 = vmatprep.mubr.bf16.mxu0 %v420
  %485 = vmatmul.mubr.bf16.gmra.mxu0 %v398
  %v486 = vpop.f32.mrf.mxu0
  %v487 = vadd.f32 0.0, %v486
  %v488 = vpop.f32.mrf.mxu0
  %v489 = vpop.f32.mrf.mxu0
  %v490 = vadd.f32 0.0, %v489
  %v491 = vpop.f32.mrf.mxu0
  %492 = vmatprep.mubr.bf16.mxu0 %v423
  %493 = vmatmul.mubr.bf16.gmra.mxu0 %v400
  %v494 = vpop.f32.mrf.mxu0
  %v495 = vadd.f32 0.0, %v494
  %v496 = vpop.f32.mrf.mxu0
  %v497 = vpop.f32.mrf.mxu0
  %v498 = vadd.f32 0.0, %v497
  %v499 = vpop.f32.mrf.mxu0
  %500 = vmatprep.mubr.bf16.mxu0 %v426
  %501 = vmatmul.mubr.bf16.gmra.mxu0 %v402
  %v502 = vpop.f32.mrf.mxu0
  %v503 = vadd.f32 0.0, %v502
  %v504 = vpop.f32.mrf.mxu0
  %v505 = vpop.f32.mrf.mxu0
  %v506 = vadd.f32 0.0, %v505
  %v507 = vpop.f32.mrf.mxu0
  %508 = vdwg.mxu0
  %v509 = vpack.c.bf16 %v466, %v463
  %v510 = vpack.c.bf16 %v474, %v471
  %v511 = vpack.c.bf16 %v482, %v479
  %v512 = vpack.c.bf16 %v490, %v487
  %v513 = vpack.c.bf16 %v498, %v495
  %v514 = vpack.c.bf16 %v506, %v503
  %s515 = scalar_lea.vmem %s2, 48
  %v516 = vld [vmem:[%s515] sm:$0xf]
  %v517 = vld [vmem:[%s515 + $0x4] sm:$0xf]
  %v518 = vld [vmem:[%s515 + $0x8] sm:$0xf]
  %v519 = vld [vmem:[%s515 + $0xc] sm:$0xf]
  %v520 = vld [vmem:[%s515 + $0x10] sm:$0xf]
  %v521 = vld [vmem:[%s515 + $0x14] sm:$0xf]
  %v522 = vld [vmem:[%s515 + $0x18] sm:$0xf]
  %v523 = vld [vmem:[%s515 + $0x1c] sm:$0xf]
  %v524 = vld [vmem:[%s515 + $0x20] sm:$0xf]
  %v525 = vld [vmem:[%s515 + $0x24] sm:$0xf]
  %v526 = vld [vmem:[%s515 + $0x28] sm:$0xf]
  %v527 = vld [vmem:[%s515 + $0x2c] sm:$0xf]
  %v540 = vunpack.c.l.b16 %v516
  %v541 = vunpack.c.l.b16 %v517
  %v542 = vunpack.c.l.b16 %v518
  %v543 = vunpack.c.l.b16 %v519
  %v544 = vunpack.c.l.b16 %v520
  %v545 = vunpack.c.l.b16 %v521
  %v546 = vunpack.c.l.b16 %v522
  %v547 = vunpack.c.l.b16 %v523
  %v548 = vunpack.c.l.b16 %v524
  %v549 = vunpack.c.l.b16 %v525
  %v550 = vunpack.c.l.b16 %v526
  %v551 = vunpack.c.l.b16 %v527
  %v552 = vpack.c.b16 %v541, %v540
  %v553 = vpack.c.b16 %v543, %v542
  %v554 = vpack.c.b16 %v545, %v544
  %v555 = vpack.c.b16 %v547, %v546
  %v556 = vpack.c.b16 %v549, %v548
  %v557 = vpack.c.b16 %v551, %v550
  %vm564 = vcmask 785408
  %v566 = vsel %vm564, %v509, 0
  %v569 = vsel %vm564, %v510, 0
  %v572 = vsel %vm564, %v511, 0
  %v575 = vsel %vm564, %v512, 0
  %v578 = vsel %vm564, %v513, 0
  %v581 = vsel %vm564, %v514, 0
  %583 = vmatprep.subr.bf16.mxu0 0
  %584 = vmatpush1.bf16.msra.mxu0 0
  %585 = vmatprep.subr.bf16.mxu0 0
  %586 = vmatpush1.bf16.msra.mxu0 0
  %587 = vmatprep.subr.bf16.mxu0 0
  %588 = vmatpush1.bf16.msra.mxu0 %v557
  %589 = vmatprep.subr.bf16.mxu0 0
  %590 = vmatpush1.bf16.msra.mxu0 %v556
  %591 = vmatprep.subr.bf16.mxu0 0
  %592 = vmatpush1.bf16.msra.mxu0 %v555
  %593 = vmatprep.subr.bf16.mxu0 0
  %594 = vmatpush1.bf16.msra.mxu0 %v554
  %595 = vmatprep.subr.bf16.mxu0 0
  %596 = vmatpush1.bf16.msra.mxu0 %v553
  %597 = vmatprep.subr.bf16.mxu0 0
  %598 = vmatpush1.bf16.msra.mxu0 %v552
  %599 = vmatprep.subr.bf16.mxu0 0
  %600 = vmatpush2.bf16.msra.mxu0 0
  %601 = vmatprep.subr.bf16.mxu0 0
  %602 = vmatpush2.bf16.msra.mxu0 0
  %603 = vmatprep.subr.bf16.mxu0 0
  %604 = vmatpush2.bf16.msra.mxu0 0
  %605 = vmatprep.subr.bf16.mxu0 0
  %606 = vmatpush2.bf16.msra.mxu0 0
  %607 = vmatprep.subr.bf16.mxu0 0
  %608 = vmatpush2.bf16.msra.mxu0 0
  %609 = vmatprep.subr.bf16.mxu0 0
  %610 = vmatpush2.bf16.msra.mxu0 0
  %611 = vmatprep.subr.bf16.mxu0 0
  %612 = vmatpush2.bf16.msra.mxu0 0
  %613 = vmatprep.subr.bf16.mxu0 0
  %614 = vmatpush2.bf16.msra.mxu0 0
  %615 = vmatprep.mubr.bf16.mxu0 0
  %616 = vmatmul.mubr.bf16.gmra.mxu0 %v566
  %v617 = vpop.f32.mrf.mxu0
  %v618 = vadd.f32 0.0, %v617
  %v619 = vpop.f32.mrf.mxu0
  %v620 = vpop.f32.mrf.mxu0
  %v621 = vadd.f32 0.0, %v620
  %v622 = vpop.f32.mrf.mxu0
  %623 = vmatprep.mubr.bf16.mxu0 0
  %624 = vmatmul.mubr.bf16.gmra.mxu0 %v569
  %v625 = vpop.f32.mrf.mxu0
  %v626 = vadd.f32 0.0, %v625
  %v627 = vpop.f32.mrf.mxu0
  %v628 = vpop.f32.mrf.mxu0
  %v629 = vadd.f32 0.0, %v628
  %v630 = vpop.f32.mrf.mxu0
  %631 = vmatprep.mubr.bf16.mxu0 0
  %632 = vmatmul.mubr.bf16.gmra.mxu0 %v572
  %v633 = vpop.f32.mrf.mxu0
  %v634 = vadd.f32 0.0, %v633
  %v635 = vpop.f32.mrf.mxu0
  %v636 = vpop.f32.mrf.mxu0
  %v637 = vadd.f32 0.0, %v636
  %v638 = vpop.f32.mrf.mxu0
  %639 = vmatprep.mubr.bf16.mxu0 0
  %640 = vmatmul.mubr.bf16.gmra.mxu0 %v575
  %v641 = vpop.f32.mrf.mxu0
  %v642 = vadd.f32 0.0, %v641
  %v643 = vpop.f32.mrf.mxu0
  %v644 = vpop.f32.mrf.mxu0
  %v645 = vadd.f32 0.0, %v644
  %v646 = vpop.f32.mrf.mxu0
  %647 = vmatprep.mubr.bf16.mxu0 0
  %648 = vmatmul.mubr.bf16.gmra.mxu0 %v578
  %v649 = vpop.f32.mrf.mxu0
  %v650 = vadd.f32 0.0, %v649
  %v651 = vpop.f32.mrf.mxu0
  %v652 = vpop.f32.mrf.mxu0
  %v653 = vadd.f32 0.0, %v652
  %v654 = vpop.f32.mrf.mxu0
  %655 = vmatprep.mubr.bf16.mxu0 0
  %656 = vmatmul.mubr.bf16.gmra.mxu0 %v581
  %v657 = vpop.f32.mrf.mxu0
  %v658 = vadd.f32 0.0, %v657
  %v659 = vpop.f32.mrf.mxu0
  %v660 = vpop.f32.mrf.mxu0
  %v661 = vadd.f32 0.0, %v660
  %v662 = vpop.f32.mrf.mxu0
  %663 = vdwg.mxu0
  %v676 = vunpack.c.l.b16 %v331
  %v677 = vunpack.c.l.b16 %v332
  %v678 = vunpack.c.l.b16 %v333
  %v679 = vunpack.c.l.b16 %v334
  %v680 = vunpack.c.l.b16 %v335
  %v681 = vunpack.c.l.b16 %v336
  %v682 = vunpack.c.l.b16 %v337
  %v683 = vunpack.c.l.b16 %v338
  %v684 = vunpack.c.l.b16 %v339
  %v685 = vunpack.c.l.b16 %v340
  %v686 = vunpack.c.l.b16 %v341
  %v687 = vunpack.c.l.b16 %v342
  %v688 = vpack.c.b16 %v677, %v676
  %v689 = vpack.c.b16 %v679, %v678
  %v690 = vpack.c.b16 %v681, %v680
  %v691 = vpack.c.b16 %v683, %v682
  %v692 = vpack.c.b16 %v685, %v684
  %v693 = vpack.c.b16 %v687, %v686
  %v701 = vsel %vm564, %v325, 0
  %v704 = vsel %vm564, %v326, 0
  %v707 = vsel %vm564, %v327, 0
  %v710 = vsel %vm564, %v328, 0
  %v713 = vsel %vm564, %v329, 0
  %v716 = vsel %vm564, %v330, 0
  %718 = vmatprep.subr.bf16.mxu0 0
  %719 = vmatpush1.bf16.msra.mxu0 0
  %720 = vmatprep.subr.bf16.mxu0 0
  %721 = vmatpush1.bf16.msra.mxu0 0
  %722 = vmatprep.subr.bf16.mxu0 0
  %723 = vmatpush1.bf16.msra.mxu0 %v693
  %724 = vmatprep.subr.bf16.mxu0 0
  %725 = vmatpush1.bf16.msra.mxu0 %v692
  %726 = vmatprep.subr.bf16.mxu0 0
  %727 = vmatpush1.bf16.msra.mxu0 %v691
  %728 = vmatprep.subr.bf16.mxu0 0
  %729 = vmatpush1.bf16.msra.mxu0 %v690
  %730 = vmatprep.subr.bf16.mxu0 0
  %731 = vmatpush1.bf16.msra.mxu0 %v689
  %732 = vmatprep.subr.bf16.mxu0 0
  %733 = vmatpush1.bf16.msra.mxu0 %v688
  %734 = vmatprep.subr.bf16.mxu0 0
  %735 = vmatpush2.bf16.msra.mxu0 0
  %736 = vmatprep.subr.bf16.mxu0 0
  %737 = vmatpush2.bf16.msra.mxu0 0
  %738 = vmatprep.subr.bf16.mxu0 0
  %739 = vmatpush2.bf16.msra.mxu0 0
  %740 = vmatprep.subr.bf16.mxu0 0
  %741 = vmatpush2.bf16.msra.mxu0 0
  %742 = vmatprep.subr.bf16.mxu0 0
  %743 = vmatpush2.bf16.msra.mxu0 0
  %744 = vmatprep.subr.bf16.mxu0 0
  %745 = vmatpush2.bf16.msra.mxu0 0
  %746 = vmatprep.subr.bf16.mxu0 0
  %747 = vmatpush2.bf16.msra.mxu0 0
  %748 = vmatprep.subr.bf16.mxu0 0
  %749 = vmatpush2.bf16.msra.mxu0 0
  %750 = vmatprep.mubr.bf16.mxu0 0
  %751 = vmatmul.mubr.bf16.gmra.mxu0 %v701
  %v752 = vpop.f32.mrf.mxu0
  %v753 = vadd.f32 %v618, %v752
  %v754 = vpop.f32.mrf.mxu0
  %v755 = vpop.f32.mrf.mxu0
  %v756 = vadd.f32 %v621, %v755
  %v757 = vpop.f32.mrf.mxu0
  %758 = vmatprep.mubr.bf16.mxu0 0
  %759 = vmatmul.mubr.bf16.gmra.mxu0 %v704
  %v760 = vpop.f32.mrf.mxu0
  %v761 = vadd.f32 %v626, %v760
  %v762 = vpop.f32.mrf.mxu0
  %v763 = vpop.f32.mrf.mxu0
  %v764 = vadd.f32 %v629, %v763
  %v765 = vpop.f32.mrf.mxu0
  %766 = vmatprep.mubr.bf16.mxu0 0
  %767 = vmatmul.mubr.bf16.gmra.mxu0 %v707
  %v768 = vpop.f32.mrf.mxu0
  %v769 = vadd.f32 %v634, %v768
  %v770 = vpop.f32.mrf.mxu0
  %v771 = vpop.f32.mrf.mxu0
  %v772 = vadd.f32 %v637, %v771
  %v773 = vpop.f32.mrf.mxu0
  %774 = vmatprep.mubr.bf16.mxu0 0
  %775 = vmatmul.mubr.bf16.gmra.mxu0 %v710
  %v776 = vpop.f32.mrf.mxu0
  %v777 = vadd.f32 %v642, %v776
  %v778 = vpop.f32.mrf.mxu0
  %v779 = vpop.f32.mrf.mxu0
  %v780 = vadd.f32 %v645, %v779
  %v781 = vpop.f32.mrf.mxu0
  %782 = vmatprep.mubr.bf16.mxu0 0
  %783 = vmatmul.mubr.bf16.gmra.mxu0 %v713
  %v784 = vpop.f32.mrf.mxu0
  %v785 = vadd.f32 %v650, %v784
  %v786 = vpop.f32.mrf.mxu0
  %v787 = vpop.f32.mrf.mxu0
  %v788 = vadd.f32 %v653, %v787
  %v789 = vpop.f32.mrf.mxu0
  %790 = vmatprep.mubr.bf16.mxu0 0
  %791 = vmatmul.mubr.bf16.gmra.mxu0 %v716
  %v792 = vpop.f32.mrf.mxu0
  %v793 = vadd.f32 %v658, %v792
  %v794 = vpop.f32.mrf.mxu0
  %v795 = vpop.f32.mrf.mxu0
  %v796 = vadd.f32 %v661, %v795
  %v797 = vpop.f32.mrf.mxu0
  %798 = vdwg.mxu0
  %s799 = scalar_lea.vmem %s1, 192
  %v800 = vld [vmem:[%s799] sm:$0xff]
  %v801 = vld [vmem:[%s799 + $0x8] sm:$0xff]
  %v802 = vld [vmem:[%s799 + $0x10] sm:$0xff]
  %v803 = vld [vmem:[%s799 + $0x18] sm:$0xff]
  %v804 = vld [vmem:[%s799 + $0x20] sm:$0xff]
  %v805 = vld [vmem:[%s799 + $0x28] sm:$0xff]
  %v806 = vld [vmem:[%s799 + $0x30] sm:$0xff]
  %v807 = vld [vmem:[%s799 + $0x38] sm:$0xff]
  %v808 = vld [vmem:[%s799 + $0x40] sm:$0xff]
  %v809 = vld [vmem:[%s799 + $0x48] sm:$0xff]
  %v810 = vld [vmem:[%s799 + $0x50] sm:$0xff]
  %v811 = vld [vmem:[%s799 + $0x58] sm:$0xff]
  %v824 = vunpack.c.l.b16 %v800
  %v825 = vunpack.c.h.b16 %v800
  %v826 = vunpack.c.l.b16 %v801
  %v827 = vunpack.c.h.b16 %v801
  %v828 = vunpack.c.l.b16 %v802
  %v829 = vunpack.c.h.b16 %v802
  %v830 = vunpack.c.l.b16 %v803
  %v831 = vunpack.c.h.b16 %v803
  %v832 = vunpack.c.l.b16 %v804
  %v833 = vunpack.c.h.b16 %v804
  %v834 = vunpack.c.l.b16 %v805
  %v835 = vunpack.c.h.b16 %v805
  %v836 = vunpack.c.l.b16 %v806
  %v837 = vunpack.c.h.b16 %v806
  %v838 = vunpack.c.l.b16 %v807
  %v839 = vunpack.c.h.b16 %v807
  %v840 = vunpack.c.l.b16 %v808
  %v841 = vunpack.c.h.b16 %v808
  %v842 = vunpack.c.l.b16 %v809
  %v843 = vunpack.c.h.b16 %v809
  %v844 = vunpack.c.l.b16 %v810
  %v845 = vunpack.c.h.b16 %v810
  %v846 = vunpack.c.l.b16 %v811
  %v847 = vunpack.c.h.b16 %v811
  %v848 = vpack.c.b16 %v826, %v824
  %v849 = vpack.c.b16 %v827, %v825
  %v850 = vpack.c.b16 %v830, %v828
  %v851 = vpack.c.b16 %v831, %v829
  %v852 = vpack.c.b16 %v834, %v832
  %v853 = vpack.c.b16 %v835, %v833
  %v854 = vpack.c.b16 %v838, %v836
  %v855 = vpack.c.b16 %v839, %v837
  %v856 = vpack.c.b16 %v842, %v840
  %v857 = vpack.c.b16 %v843, %v841
  %v858 = vpack.c.b16 %v846, %v844
  %v859 = vpack.c.b16 %v847, %v845
  %v867 = vsel %vm225, %v849, 0
  %v870 = vsel %vm225, %v851, 0
  %v873 = vsel %vm225, %v853, 0
  %v876 = vsel %vm225, %v855, 0
  %v879 = vsel %vm225, %v857, 0
  %v882 = vsel %vm225, %v859, 0
  %884 = vmatprep.subr.bf16.mxu0 0
  %885 = vmatpush1.bf16.msra.mxu0 %v208
  %886 = vmatprep.subr.bf16.mxu0 0
  %887 = vmatpush1.bf16.msra.mxu0 %v207
  %888 = vmatprep.subr.bf16.mxu0 0
  %889 = vmatpush1.bf16.msra.mxu0 %v206
  %890 = vmatprep.subr.bf16.mxu0 0
  %891 = vmatpush1.bf16.msra.mxu0 %v205
  %892 = vmatprep.subr.bf16.mxu0 0
  %893 = vmatpush1.bf16.msra.mxu0 %v204
  %894 = vmatprep.subr.bf16.mxu0 0
  %895 = vmatpush1.bf16.msra.mxu0 %v203
  %896 = vmatprep.subr.bf16.mxu0 0
  %897 = vmatpush1.bf16.msra.mxu0 %v202
  %898 = vmatprep.subr.bf16.mxu0 0
  %899 = vmatpush1.bf16.msra.mxu0 %v201
  %900 = vmatprep.subr.bf16.mxu0 0
  %901 = vmatpush2.bf16.msra.mxu0 0
  %902 = vmatprep.subr.bf16.mxu0 0
  %903 = vmatpush2.bf16.msra.mxu0 0
  %904 = vmatprep.subr.bf16.mxu0 0
  %905 = vmatpush2.bf16.msra.mxu0 0
  %906 = vmatprep.subr.bf16.mxu0 0
  %907 = vmatpush2.bf16.msra.mxu0 0
  %908 = vmatprep.subr.bf16.mxu0 0
  %909 = vmatpush2.bf16.msra.mxu0 %v212
  %910 = vmatprep.subr.bf16.mxu0 0
  %911 = vmatpush2.bf16.msra.mxu0 %v211
  %912 = vmatprep.subr.bf16.mxu0 0
  %913 = vmatpush2.bf16.msra.mxu0 %v210
  %914 = vmatprep.subr.bf16.mxu0 0
  %915 = vmatpush2.bf16.msra.mxu0 %v209
  %916 = vmatprep.mubr.bf16.mxu0 %v867
  %917 = vmatmul.mubr.bf16.gmra.mxu0 %v848
  %v918 = vpop.f32.mrf.mxu0
  %v919 = vadd.f32 0.0, %v918
  %v920 = vpop.f32.mrf.mxu0
  %v921 = vpop.f32.mrf.mxu0
  %v922 = vadd.f32 0.0, %v921
  %v923 = vpop.f32.mrf.mxu0
  %924 = vmatprep.mubr.bf16.mxu0 %v870
  %925 = vmatmul.mubr.bf16.gmra.mxu0 %v850
  %v926 = vpop.f32.mrf.mxu0
  %v927 = vadd.f32 0.0, %v926
  %v928 = vpop.f32.mrf.mxu0
  %v929 = vpop.f32.mrf.mxu0
  %v930 = vadd.f32 0.0, %v929
  %v931 = vpop.f32.mrf.mxu0
  %932 = vmatprep.mubr.bf16.mxu0 %v873
  %933 = vmatmul.mubr.bf16.gmra.mxu0 %v852
  %v934 = vpop.f32.mrf.mxu0
  %v935 = vadd.f32 0.0, %v934
  %v936 = vpop.f32.mrf.mxu0
  %v937 = vpop.f32.mrf.mxu0
  %v938 = vadd.f32 0.0, %v937
  %v939 = vpop.f32.mrf.mxu0
  %940 = vmatprep.mubr.bf16.mxu0 %v876
  %941 = vmatmul.mubr.bf16.gmra.mxu0 %v854
  %v942 = vpop.f32.mrf.mxu0
  %v943 = vadd.f32 0.0, %v942
  %v944 = vpop.f32.mrf.mxu0
  %v945 = vpop.f32.mrf.mxu0
  %v946 = vadd.f32 0.0, %v945
  %v947 = vpop.f32.mrf.mxu0
  %948 = vmatprep.mubr.bf16.mxu0 %v879
  %949 = vmatmul.mubr.bf16.gmra.mxu0 %v856
  %v950 = vpop.f32.mrf.mxu0
  %v951 = vadd.f32 0.0, %v950
  %v952 = vpop.f32.mrf.mxu0
  %v953 = vpop.f32.mrf.mxu0
  %v954 = vadd.f32 0.0, %v953
  %v955 = vpop.f32.mrf.mxu0
  %956 = vmatprep.mubr.bf16.mxu0 %v882
  %957 = vmatmul.mubr.bf16.gmra.mxu0 %v858
  %v958 = vpop.f32.mrf.mxu0
  %v959 = vadd.f32 0.0, %v958
  %v960 = vpop.f32.mrf.mxu0
  %v961 = vpop.f32.mrf.mxu0
  %v962 = vadd.f32 0.0, %v961
  %v963 = vpop.f32.mrf.mxu0
  %964 = vdwg.mxu0
  %v965 = vpack.c.bf16 %v922, %v919
  %v966 = vpack.c.bf16 %v930, %v927
  %v967 = vpack.c.bf16 %v938, %v935
  %v968 = vpack.c.bf16 %v946, %v943
  %v969 = vpack.c.bf16 %v954, %v951
  %v970 = vpack.c.bf16 %v962, %v959
  %s971 = scalar_lea.vmem %s2, 96
  %v972 = vld [vmem:[%s971] sm:$0xf]
  %v973 = vld [vmem:[%s971 + $0x4] sm:$0xf]
  %v974 = vld [vmem:[%s971 + $0x8] sm:$0xf]
  %v975 = vld [vmem:[%s971 + $0xc] sm:$0xf]
  %v976 = vld [vmem:[%s971 + $0x10] sm:$0xf]
  %v977 = vld [vmem:[%s971 + $0x14] sm:$0xf]
  %v978 = vld [vmem:[%s971 + $0x18] sm:$0xf]
  %v979 = vld [vmem:[%s971 + $0x1c] sm:$0xf]
  %v980 = vld [vmem:[%s971 + $0x20] sm:$0xf]
  %v981 = vld [vmem:[%s971 + $0x24] sm:$0xf]
  %v982 = vld [vmem:[%s971 + $0x28] sm:$0xf]
  %v983 = vld [vmem:[%s971 + $0x2c] sm:$0xf]
  %v996 = vunpack.c.l.b16 %v972
  %v997 = vunpack.c.l.b16 %v973
  %v998 = vunpack.c.l.b16 %v974
  %v999 = vunpack.c.l.b16 %v975
  %v1000 = vunpack.c.l.b16 %v976
  %v1001 = vunpack.c.l.b16 %v977
  %v1002 = vunpack.c.l.b16 %v978
  %v1003 = vunpack.c.l.b16 %v979
  %v1004 = vunpack.c.l.b16 %v980
  %v1005 = vunpack.c.l.b16 %v981
  %v1006 = vunpack.c.l.b16 %v982
  %v1007 = vunpack.c.l.b16 %v983
  %v1008 = vpack.c.b16 %v997, %v996
  %v1009 = vpack.c.b16 %v999, %v998
  %v1010 = vpack.c.b16 %v1001, %v1000
  %v1011 = vpack.c.b16 %v1003, %v1002
  %v1012 = vpack.c.b16 %v1005, %v1004
  %v1013 = vpack.c.b16 %v1007, %v1006
  %v1021 = vsel %vm564, %v965, 0
  %v1024 = vsel %vm564, %v966, 0
  %v1027 = vsel %vm564, %v967, 0
  %v1030 = vsel %vm564, %v968, 0
  %v1033 = vsel %vm564, %v969, 0
  %v1036 = vsel %vm564, %v970, 0
  %1038 = vmatprep.subr.bf16.mxu0 0
  %1039 = vmatpush1.bf16.msra.mxu0 0
  %1040 = vmatprep.subr.bf16.mxu0 0
  %1041 = vmatpush1.bf16.msra.mxu0 0
  %1042 = vmatprep.subr.bf16.mxu0 0
  %1043 = vmatpush1.bf16.msra.mxu0 %v1013
  %1044 = vmatprep.subr.bf16.mxu0 0
  %1045 = vmatpush1.bf16.msra.mxu0 %v1012
  %1046 = vmatprep.subr.bf16.mxu0 0
  %1047 = vmatpush1.bf16.msra.mxu0 %v1011
  %1048 = vmatprep.subr.bf16.mxu0 0
  %1049 = vmatpush1.bf16.msra.mxu0 %v1010
  %1050 = vmatprep.subr.bf16.mxu0 0
  %1051 = vmatpush1.bf16.msra.mxu0 %v1009
  %1052 = vmatprep.subr.bf16.mxu0 0
  %1053 = vmatpush1.bf16.msra.mxu0 %v1008
  %1054 = vmatprep.subr.bf16.mxu0 0
  %1055 = vmatpush2.bf16.msra.mxu0 0
  %1056 = vmatprep.subr.bf16.mxu0 0
  %1057 = vmatpush2.bf16.msra.mxu0 0
  %1058 = vmatprep.subr.bf16.mxu0 0
  %1059 = vmatpush2.bf16.msra.mxu0 0
  %1060 = vmatprep.subr.bf16.mxu0 0
  %1061 = vmatpush2.bf16.msra.mxu0 0
  %1062 = vmatprep.subr.bf16.mxu0 0
  %1063 = vmatpush2.bf16.msra.mxu0 0
  %1064 = vmatprep.subr.bf16.mxu0 0
  %1065 = vmatpush2.bf16.msra.mxu0 0
  %1066 = vmatprep.subr.bf16.mxu0 0
  %1067 = vmatpush2.bf16.msra.mxu0 0
  %1068 = vmatprep.subr.bf16.mxu0 0
  %1069 = vmatpush2.bf16.msra.mxu0 0
  %1070 = vmatprep.mubr.bf16.mxu0 0
  %1071 = vmatmul.mubr.bf16.gmra.mxu0 %v1021
  %v1072 = vpop.f32.mrf.mxu0
  %v1073 = vadd.f32 0.0, %v1072
  %v1074 = vpop.f32.mrf.mxu0
  %v1075 = vpop.f32.mrf.mxu0
  %v1076 = vadd.f32 0.0, %v1075
  %v1077 = vpop.f32.mrf.mxu0
  %1078 = vmatprep.mubr.bf16.mxu0 0
  %1079 = vmatmul.mubr.bf16.gmra.mxu0 %v1024
  %v1080 = vpop.f32.mrf.mxu0
  %v1081 = vadd.f32 0.0, %v1080
  %v1082 = vpop.f32.mrf.mxu0
  %v1083 = vpop.f32.mrf.mxu0
  %v1084 = vadd.f32 0.0, %v1083
  %v1085 = vpop.f32.mrf.mxu0
  %1086 = vmatprep.mubr.bf16.mxu0 0
  %1087 = vmatmul.mubr.bf16.gmra.mxu0 %v1027
  %v1088 = vpop.f32.mrf.mxu0
  %v1089 = vadd.f32 0.0, %v1088
  %v1090 = vpop.f32.mrf.mxu0
  %v1091 = vpop.f32.mrf.mxu0
  %v1092 = vadd.f32 0.0, %v1091
  %v1093 = vpop.f32.mrf.mxu0
  %1094 = vmatprep.mubr.bf16.mxu0 0
  %1095 = vmatmul.mubr.bf16.gmra.mxu0 %v1030
  %v1096 = vpop.f32.mrf.mxu0
  %v1097 = vadd.f32 0.0, %v1096
  %v1098 = vpop.f32.mrf.mxu0
  %v1099 = vpop.f32.mrf.mxu0
  %v1100 = vadd.f32 0.0, %v1099
  %v1101 = vpop.f32.mrf.mxu0
  %1102 = vmatprep.mubr.bf16.mxu0 0
  %1103 = vmatmul.mubr.bf16.gmra.mxu0 %v1033
  %v1104 = vpop.f32.mrf.mxu0
  %v1105 = vadd.f32 0.0, %v1104
  %v1106 = vpop.f32.mrf.mxu0
  %v1107 = vpop.f32.mrf.mxu0
  %v1108 = vadd.f32 0.0, %v1107
  %v1109 = vpop.f32.mrf.mxu0
  %1110 = vmatprep.mubr.bf16.mxu0 0
  %1111 = vmatmul.mubr.bf16.gmra.mxu0 %v1036
  %v1112 = vpop.f32.mrf.mxu0
  %v1113 = vadd.f32 0.0, %v1112
  %v1114 = vpop.f32.mrf.mxu0
  %v1115 = vpop.f32.mrf.mxu0
  %v1116 = vadd.f32 0.0, %v1115
  %v1117 = vpop.f32.mrf.mxu0
  %1118 = vdwg.mxu0
  %v1119 = vadd.f32 %v753, %v1073
  %v1120 = vadd.f32 %v756, %v1076
  %v1121 = vadd.f32 %v761, %v1081
  %v1122 = vadd.f32 %v764, %v1084
  %v1123 = vadd.f32 %v769, %v1089
  %v1124 = vadd.f32 %v772, %v1092
  %v1125 = vadd.f32 %v777, %v1097
  %v1126 = vadd.f32 %v780, %v1100
  %v1127 = vadd.f32 %v785, %v1105
  %v1128 = vadd.f32 %v788, %v1108
  %v1129 = vadd.f32 %v793, %v1113
  %v1130 = vadd.f32 %v796, %v1116
  %v1131 = vld [vmem:[%s3] sm:$0x1]
  %v1133 = vlaneseq
  %v1134 = vshrl.u32 %v1133, 7
  %v1135 = vsub.s32 0, %v1134
  %v1136 = vrot.slane %v1131, %v1135
  %v1138 = vadd.f32 %v1119, %v1136
  %v1139 = vadd.f32 %v1120, %v1136
  %v1140 = vadd.f32 %v1121, %v1136
  %v1141 = vadd.f32 %v1122, %v1136
  %v1142 = vadd.f32 %v1123, %v1136
  %v1143 = vadd.f32 %v1124, %v1136
  %v1144 = vadd.f32 %v1125, %v1136
  %v1145 = vadd.f32 %v1126, %v1136
  %v1146 = vadd.f32 %v1127, %v1136
  %v1147 = vadd.f32 %v1128, %v1136
  %v1148 = vadd.f32 %v1129, %v1136
  %v1149 = vadd.f32 %v1130, %v1136
  %v1150 = vmax.f32 %v1138, 0.0
  %v1151 = vmax.f32 %v1139, 0.0
  %v1152 = vmax.f32 %v1140, 0.0
  %v1153 = vmax.f32 %v1141, 0.0
  %v1154 = vmax.f32 %v1142, 0.0
  %v1155 = vmax.f32 %v1143, 0.0
  %v1156 = vmax.f32 %v1144, 0.0
  %v1157 = vmax.f32 %v1145, 0.0
  %v1158 = vmax.f32 %v1146, 0.0
  %v1159 = vmax.f32 %v1147, 0.0
  %v1160 = vmax.f32 %v1148, 0.0
  %v1161 = vmax.f32 %v1149, 0.0
  %v1162 = vpack.c.bf16 %v1151, %v1150
  %v1163 = vpack.c.bf16 %v1153, %v1152
  %v1164 = vpack.c.bf16 %v1155, %v1154
  %v1165 = vpack.c.bf16 %v1157, %v1156
  %v1166 = vpack.c.bf16 %v1159, %v1158
  %v1167 = vpack.c.bf16 %v1161, %v1160
  %v1168 = vld [vmem:[%s4] sm:$0xf]
  %v1169 = vld [vmem:[%s4 + $0x4] sm:$0xf]
  %v1170 = vld [vmem:[%s4 + $0x8] sm:$0xf]
  %v1171 = vld [vmem:[%s4 + $0xc] sm:$0xf]
  %v1172 = vld [vmem:[%s4 + $0x10] sm:$0xf]
  %v1173 = vld [vmem:[%s4 + $0x14] sm:$0xf]
  %v1180 = vunpack.c.l.b16 %v1168
  %v1181 = vunpack.c.l.b16 %v1169
  %v1182 = vunpack.c.l.b16 %v1170
  %v1183 = vunpack.c.l.b16 %v1171
  %v1184 = vunpack.c.l.b16 %v1172
  %v1185 = vunpack.c.l.b16 %v1173
  %v1186 = vpack.c.b16 %v1181, %v1180
  %v1187 = vpack.c.b16 %v1183, %v1182
  %v1188 = vpack.c.b16 %v1185, %v1184
  %v1190 = vsel %vm564, %v1186, 0
  %v1193 = vsel %vm564, %v1187, 0
  %v1196 = vsel %vm564, %v1188, 0
  %1198 = vmatprep.subr.bf16.mxu0 0
  %1199 = vmatpush1.bf16.msra.mxu0 0
  %1200 = vmatprep.subr.bf16.mxu0 0
  %1201 = vmatpush1.bf16.msra.mxu0 0
  %1202 = vmatprep.subr.bf16.mxu0 0
  %1203 = vmatpush1.bf16.msra.mxu0 %v1167
  %1204 = vmatprep.subr.bf16.mxu0 0
  %1205 = vmatpush1.bf16.msra.mxu0 %v1166
  %1206 = vmatprep.subr.bf16.mxu0 0
  %1207 = vmatpush1.bf16.msra.mxu0 %v1165
  %1208 = vmatprep.subr.bf16.mxu0 0
  %1209 = vmatpush1.bf16.msra.mxu0 %v1164
  %1210 = vmatprep.subr.bf16.mxu0 0
  %1211 = vmatpush1.bf16.msra.mxu0 %v1163
  %1212 = vmatprep.subr.bf16.mxu0 0
  %1213 = vmatpush1.bf16.msra.mxu0 %v1162
  %1214 = vmatprep.subr.bf16.mxu0 0
  %1215 = vmatpush2.bf16.msra.mxu0 0
  %1216 = vmatprep.subr.bf16.mxu0 0
  %1217 = vmatpush2.bf16.msra.mxu0 0
  %1218 = vmatprep.subr.bf16.mxu0 0
  %1219 = vmatpush2.bf16.msra.mxu0 0
  %1220 = vmatprep.subr.bf16.mxu0 0
  %1221 = vmatpush2.bf16.msra.mxu0 0
  %1222 = vmatprep.subr.bf16.mxu0 0
  %1223 = vmatpush2.bf16.msra.mxu0 0
  %1224 = vmatprep.subr.bf16.mxu0 0
  %1225 = vmatpush2.bf16.msra.mxu0 0
  %1226 = vmatprep.subr.bf16.mxu0 0
  %1227 = vmatpush2.bf16.msra.mxu0 0
  %1228 = vmatprep.subr.bf16.mxu0 0
  %1229 = vmatpush2.bf16.msra.mxu0 0
  %1230 = vmatprep.mubr.bf16.mxu0 0
  %1231 = vmatmul.mubr.bf16.gmra.mxu0 %v1190
  %v1232 = vpop.f32.mrf.mxu0
  %v1233 = vadd.f32 0.0, %v1232
  %v1234 = vpop.f32.mrf.mxu0
  %v1235 = vpop.f32.mrf.mxu0
  %v1236 = vadd.f32 0.0, %v1235
  %v1237 = vpop.f32.mrf.mxu0
  %1238 = vmatprep.mubr.bf16.mxu0 0
  %1239 = vmatmul.mubr.bf16.gmra.mxu0 %v1193
  %v1240 = vpop.f32.mrf.mxu0
  %v1241 = vadd.f32 0.0, %v1240
  %v1242 = vpop.f32.mrf.mxu0
  %v1243 = vpop.f32.mrf.mxu0
  %v1244 = vadd.f32 0.0, %v1243
  %v1245 = vpop.f32.mrf.mxu0
  %1246 = vmatprep.mubr.bf16.mxu0 0
  %1247 = vmatmul.mubr.bf16.gmra.mxu0 %v1196
  %v1248 = vpop.f32.mrf.mxu0
  %v1249 = vadd.f32 0.0, %v1248
  %v1250 = vpop.f32.mrf.mxu0
  %v1251 = vpop.f32.mrf.mxu0
  %v1252 = vadd.f32 0.0, %v1251
  %v1253 = vpop.f32.mrf.mxu0
  %1254 = vdwg.mxu0
  %v1255 = vpack.c.bf16 %v1236, %v1233
  %v1256 = vpack.c.bf16 %v1244, %v1241
  %v1257 = vpack.c.bf16 %v1252, %v1249
  %v1258 = vld [vmem:[%s5] sm:$0xf]
  %v1259 = vld [vmem:[%s5 + $0x4] sm:$0xf]
  %v1260 = vld [vmem:[%s5 + $0x8] sm:$0xf]
  %v1261 = vld [vmem:[%s5 + $0xc] sm:$0xf]
  %v1262 = vld [vmem:[%s5 + $0x10] sm:$0xf]
  %v1263 = vld [vmem:[%s5 + $0x14] sm:$0xf]
  %v1264 = vld [vmem:[%s5 + $0x18] sm:$0xf]
  %v1265 = vld [vmem:[%s5 + $0x1c] sm:$0xf]
  %v1266 = vld [vmem:[%s5 + $0x20] sm:$0xf]
  %v1267 = vld [vmem:[%s5 + $0x24] sm:$0xf]
  %v1268 = vld [vmem:[%s5 + $0x28] sm:$0xf]
  %v1269 = vld [vmem:[%s5 + $0x2c] sm:$0xf]
  %v1270 = vld [vmem:[%s5 + $0x30] sm:$0xf]
  %v1271 = vld [vmem:[%s5 + $0x34] sm:$0xf]
  %v1272 = vld [vmem:[%s5 + $0x38] sm:$0xf]
  %v1273 = vld [vmem:[%s5 + $0x3c] sm:$0xf]
  %s1274 = scalar_lea.vmem %s4, 24
  %v1275 = vld [vmem:[%s1274] sm:$0xf]
  %v1276 = vld [vmem:[%s1274 + $0x4] sm:$0xf]
  %v1277 = vld [vmem:[%s1274 + $0x8] sm:$0xf]
  %v1278 = vld [vmem:[%s1274 + $0xc] sm:$0xf]
  %v1279 = vld [vmem:[%s1274 + $0x10] sm:$0xf]
  %v1280 = vld [vmem:[%s1274 + $0x14] sm:$0xf]
  %v1287 = vunpack.c.l.b16 %v1275
  %v1288 = vunpack.c.l.b16 %v1276
  %v1289 = vunpack.c.l.b16 %v1277
  %v1290 = vunpack.c.l.b16 %v1278
  %v1291 = vunpack.c.l.b16 %v1279
  %v1292 = vunpack.c.l.b16 %v1280
  %v1293 = vpack.c.b16 %v1288, %v1287
  %v1294 = vpack.c.b16 %v1290, %v1289
  %v1295 = vpack.c.b16 %v1292, %v1291
  %v1297 = vsel %vm564, %v1293, 0
  %v1300 = vsel %vm564, %v1294, 0
  %v1303 = vsel %vm564, %v1295, 0
  %1305 = vmatprep.subr.bf16.mxu0 0
  %1306 = vmatpush1.bf16.msra.mxu0 0
  %1307 = vmatprep.subr.bf16.mxu0 0
  %1308 = vmatpush1.bf16.msra.mxu0 0
  %1309 = vmatprep.subr.bf16.mxu0 0
  %1310 = vmatpush1.bf16.msra.mxu0 %v1167
  %1311 = vmatprep.subr.bf16.mxu0 0
  %1312 = vmatpush1.bf16.msra.mxu0 %v1166
  %1313 = vmatprep.subr.bf16.mxu0 0
  %1314 = vmatpush1.bf16.msra.mxu0 %v1165
  %1315 = vmatprep.subr.bf16.mxu0 0
  %1316 = vmatpush1.bf16.msra.mxu0 %v1164
  %1317 = vmatprep.subr.bf16.mxu0 0
  %1318 = vmatpush1.bf16.msra.mxu0 %v1163
  %1319 = vmatprep.subr.bf16.mxu0 0
  %1320 = vmatpush1.bf16.msra.mxu0 %v1162
  %1321 = vmatprep.subr.bf16.mxu0 0
  %1322 = vmatpush2.bf16.msra.mxu0 0
  %1323 = vmatprep.subr.bf16.mxu0 0
  %1324 = vmatpush2.bf16.msra.mxu0 0
  %1325 = vmatprep.subr.bf16.mxu0 0
  %1326 = vmatpush2.bf16.msra.mxu0 0
  %1327 = vmatprep.subr.bf16.mxu0 0
  %1328 = vmatpush2.bf16.msra.mxu0 0
  %1329 = vmatprep.subr.bf16.mxu0 0
  %1330 = vmatpush2.bf16.msra.mxu0 0
  %1331 = vmatprep.subr.bf16.mxu0 0
  %1332 = vmatpush2.bf16.msra.mxu0 0
  %1333 = vmatprep.subr.bf16.mxu0 0
  %1334 = vmatpush2.bf16.msra.mxu0 0
  %1335 = vmatprep.subr.bf16.mxu0 0
  %1336 = vmatpush2.bf16.msra.mxu0 0
  %1337 = vmatprep.mubr.bf16.mxu0 0
  %1338 = vmatmul.mubr.bf16.gmra.mxu0 %v1297
  %v1339 = vpop.f32.mrf.mxu0
  %v1340 = vadd.f32 0.0, %v1339
  %v1341 = vpop.f32.mrf.mxu0
  %v1342 = vpop.f32.mrf.mxu0
  %v1343 = vadd.f32 0.0, %v1342
  %v1344 = vpop.f32.mrf.mxu0
  %1345 = vmatprep.mubr.bf16.mxu0 0
  %1346 = vmatmul.mubr.bf16.gmra.mxu0 %v1300
  %v1347 = vpop.f32.mrf.mxu0
  %v1348 = vadd.f32 0.0, %v1347
  %v1349 = vpop.f32.mrf.mxu0
  %v1350 = vpop.f32.mrf.mxu0
  %v1351 = vadd.f32 0.0, %v1350
  %v1352 = vpop.f32.mrf.mxu0
  %1353 = vmatprep.mubr.bf16.mxu0 0
  %1354 = vmatmul.mubr.bf16.gmra.mxu0 %v1303
  %v1355 = vpop.f32.mrf.mxu0
  %v1356 = vadd.f32 0.0, %v1355
  %v1357 = vpop.f32.mrf.mxu0
  %v1358 = vpop.f32.mrf.mxu0
  %v1359 = vadd.f32 0.0, %v1358
  %v1360 = vpop.f32.mrf.mxu0
  %1361 = vdwg.mxu0
  %v1362 = vpack.c.bf16 %v1343, %v1340
  %v1363 = vpack.c.bf16 %v1351, %v1348
  %v1364 = vpack.c.bf16 %v1359, %v1356
  %s1365 = scalar_lea.vmem %s5, 64
  %v1366 = vld [vmem:[%s1365] sm:$0xf]
  %v1367 = vld [vmem:[%s1365 + $0x4] sm:$0xf]
  %v1368 = vld [vmem:[%s1365 + $0x8] sm:$0xf]
  %v1369 = vld [vmem:[%s1365 + $0xc] sm:$0xf]
  %v1370 = vld [vmem:[%s1365 + $0x10] sm:$0xf]
  %v1371 = vld [vmem:[%s1365 + $0x14] sm:$0xf]
  %v1372 = vld [vmem:[%s1365 + $0x18] sm:$0xf]
  %v1373 = vld [vmem:[%s1365 + $0x1c] sm:$0xf]
  %v1374 = vld [vmem:[%s1365 + $0x20] sm:$0xf]
  %v1375 = vld [vmem:[%s1365 + $0x24] sm:$0xf]
  %v1376 = vld [vmem:[%s1365 + $0x28] sm:$0xf]
  %v1377 = vld [vmem:[%s1365 + $0x2c] sm:$0xf]
  %v1378 = vld [vmem:[%s1365 + $0x30] sm:$0xf]
  %v1379 = vld [vmem:[%s1365 + $0x34] sm:$0xf]
  %v1380 = vld [vmem:[%s1365 + $0x38] sm:$0xf]
  %v1381 = vld [vmem:[%s1365 + $0x3c] sm:$0xf]
  %v1398 = vunpack.c.l.b16 %v1366
  %v1399 = vunpack.c.l.b16 %v1367
  %v1400 = vunpack.c.l.b16 %v1368
  %v1401 = vunpack.c.l.b16 %v1369
  %v1402 = vunpack.c.l.b16 %v1370
  %v1403 = vunpack.c.l.b16 %v1371
  %v1404 = vunpack.c.l.b16 %v1372
  %v1405 = vunpack.c.l.b16 %v1373
  %v1406 = vunpack.c.l.b16 %v1374
  %v1407 = vunpack.c.l.b16 %v1375
  %v1408 = vunpack.c.l.b16 %v1376
  %v1409 = vunpack.c.l.b16 %v1377
  %v1410 = vunpack.c.l.b16 %v1378
  %v1411 = vunpack.c.l.b16 %v1379
  %v1412 = vunpack.c.l.b16 %v1380
  %v1413 = vunpack.c.l.b16 %v1381
  %v1414 = vpack.c.b16 %v1399, %v1398
  %v1415 = vpack.c.b16 %v1401, %v1400
  %v1416 = vpack.c.b16 %v1403, %v1402
  %v1417 = vpack.c.b16 %v1405, %v1404
  %v1418 = vpack.c.b16 %v1407, %v1406
  %v1419 = vpack.c.b16 %v1409, %v1408
  %v1420 = vpack.c.b16 %v1411, %v1410
  %v1421 = vpack.c.b16 %v1413, %v1412
  %1430 = vmatprep.subr.bf16.mxu0 0
  %1431 = vmatpush1.bf16.msra.mxu0 %v1421
  %1432 = vmatprep.subr.bf16.mxu0 0
  %1433 = vmatpush1.bf16.msra.mxu0 %v1420
  %1434 = vmatprep.subr.bf16.mxu0 0
  %1435 = vmatpush1.bf16.msra.mxu0 %v1419
  %1436 = vmatprep.subr.bf16.mxu0 0
  %1437 = vmatpush1.bf16.msra.mxu0 %v1418
  %1438 = vmatprep.subr.bf16.mxu0 0
  %1439 = vmatpush1.bf16.msra.mxu0 %v1417
  %1440 = vmatprep.subr.bf16.mxu0 0
  %1441 = vmatpush1.bf16.msra.mxu0 %v1416
  %1442 = vmatprep.subr.bf16.mxu0 0
  %1443 = vmatpush1.bf16.msra.mxu0 %v1415
  %1444 = vmatprep.subr.bf16.mxu0 0
  %1445 = vmatpush1.bf16.msra.mxu0 %v1414
  %1446 = vmatprep.subr.bf16.mxu0 0
  %1447 = vmatpush2.bf16.msra.mxu0 0
  %1448 = vmatprep.subr.bf16.mxu0 0
  %1449 = vmatpush2.bf16.msra.mxu0 0
  %1450 = vmatprep.subr.bf16.mxu0 0
  %1451 = vmatpush2.bf16.msra.mxu0 0
  %1452 = vmatprep.subr.bf16.mxu0 0
  %1453 = vmatpush2.bf16.msra.mxu0 0
  %1454 = vmatprep.subr.bf16.mxu0 0
  %1455 = vmatpush2.bf16.msra.mxu0 0
  %1456 = vmatprep.subr.bf16.mxu0 0
  %1457 = vmatpush2.bf16.msra.mxu0 0
  %1458 = vmatprep.subr.bf16.mxu0 0
  %1459 = vmatpush2.bf16.msra.mxu0 0
  %1460 = vmatprep.subr.bf16.mxu0 0
  %1461 = vmatpush2.bf16.msra.mxu0 0
  %1462 = vmatprep.mubr.bf16.mxu0 0
  %1463 = vmatmul.mubr.bf16.gmra.mxu0 %v1362
  %v1464 = vpop.f32.mrf.mxu0
  %v1465 = vadd.f32 0.0, %v1464
  %v1466 = vpop.f32.mrf.mxu0
  %v1467 = vpop.f32.mrf.mxu0
  %v1468 = vadd.f32 0.0, %v1467
  %v1469 = vpop.f32.mrf.mxu0
  %1470 = vmatprep.mubr.bf16.mxu0 0
  %1471 = vmatmul.mubr.bf16.gmra.mxu0 %v1363
  %v1472 = vpop.f32.mrf.mxu0
  %v1473 = vadd.f32 0.0, %v1472
  %v1474 = vpop.f32.mrf.mxu0
  %v1475 = vpop.f32.mrf.mxu0
  %v1476 = vadd.f32 0.0, %v1475
  %v1477 = vpop.f32.mrf.mxu0
  %1478 = vmatprep.mubr.bf16.mxu0 0
  %1479 = vmatmul.mubr.bf16.gmra.mxu0 %v1364
  %v1480 = vpop.f32.mrf.mxu0
  %v1481 = vadd.f32 0.0, %v1480
  %v1482 = vpop.f32.mrf.mxu0
  %v1483 = vpop.f32.mrf.mxu0
  %v1484 = vadd.f32 0.0, %v1483
  %v1485 = vpop.f32.mrf.mxu0
  %1486 = vdwg.mxu0
  %v1503 = vunpack.c.l.b16 %v1258
  %v1504 = vunpack.c.l.b16 %v1259
  %v1505 = vunpack.c.l.b16 %v1260
  %v1506 = vunpack.c.l.b16 %v1261
  %v1507 = vunpack.c.l.b16 %v1262
  %v1508 = vunpack.c.l.b16 %v1263
  %v1509 = vunpack.c.l.b16 %v1264
  %v1510 = vunpack.c.l.b16 %v1265
  %v1511 = vunpack.c.l.b16 %v1266
  %v1512 = vunpack.c.l.b16 %v1267
  %v1513 = vunpack.c.l.b16 %v1268
  %v1514 = vunpack.c.l.b16 %v1269
  %v1515 = vunpack.c.l.b16 %v1270
  %v1516 = vunpack.c.l.b16 %v1271
  %v1517 = vunpack.c.l.b16 %v1272
  %v1518 = vunpack.c.l.b16 %v1273
  %v1519 = vpack.c.b16 %v1504, %v1503
  %v1520 = vpack.c.b16 %v1506, %v1505
  %v1521 = vpack.c.b16 %v1508, %v1507
  %v1522 = vpack.c.b16 %v1510, %v1509
  %v1523 = vpack.c.b16 %v1512, %v1511
  %v1524 = vpack.c.b16 %v1514, %v1513
  %v1525 = vpack.c.b16 %v1516, %v1515
  %v1526 = vpack.c.b16 %v1518, %v1517
  %1535 = vmatprep.subr.bf16.mxu0 0
  %1536 = vmatpush1.bf16.msra.mxu0 %v1526
  %1537 = vmatprep.subr.bf16.mxu0 0
  %1538 = vmatpush1.bf16.msra.mxu0 %v1525
  %1539 = vmatprep.subr.bf16.mxu0 0
  %1540 = vmatpush1.bf16.msra.mxu0 %v1524
  %1541 = vmatprep.subr.bf16.mxu0 0
  %1542 = vmatpush1.bf16.msra.mxu0 %v1523
  %1543 = vmatprep.subr.bf16.mxu0 0
  %1544 = vmatpush1.bf16.msra.mxu0 %v1522
  %1545 = vmatprep.subr.bf16.mxu0 0
  %1546 = vmatpush1.bf16.msra.mxu0 %v1521
  %1547 = vmatprep.subr.bf16.mxu0 0
  %1548 = vmatpush1.bf16.msra.mxu0 %v1520
  %1549 = vmatprep.subr.bf16.mxu0 0
  %1550 = vmatpush1.bf16.msra.mxu0 %v1519
  %1551 = vmatprep.subr.bf16.mxu0 0
  %1552 = vmatpush2.bf16.msra.mxu0 0
  %1553 = vmatprep.subr.bf16.mxu0 0
  %1554 = vmatpush2.bf16.msra.mxu0 0
  %1555 = vmatprep.subr.bf16.mxu0 0
  %1556 = vmatpush2.bf16.msra.mxu0 0
  %1557 = vmatprep.subr.bf16.mxu0 0
  %1558 = vmatpush2.bf16.msra.mxu0 0
  %1559 = vmatprep.subr.bf16.mxu0 0
  %1560 = vmatpush2.bf16.msra.mxu0 0
  %1561 = vmatprep.subr.bf16.mxu0 0
  %1562 = vmatpush2.bf16.msra.mxu0 0
  %1563 = vmatprep.subr.bf16.mxu0 0
  %1564 = vmatpush2.bf16.msra.mxu0 0
  %1565 = vmatprep.subr.bf16.mxu0 0
  %1566 = vmatpush2.bf16.msra.mxu0 0
  %1567 = vmatprep.mubr.bf16.mxu0 0
  %1568 = vmatmul.mubr.bf16.gmra.mxu0 %v1255
  %v1569 = vpop.f32.mrf.mxu0
  %v1570 = vadd.f32 %v1465, %v1569
  %v1571 = vpop.f32.mrf.mxu0
  %v1572 = vpop.f32.mrf.mxu0
  %v1573 = vadd.f32 %v1468, %v1572
  %v1574 = vpop.f32.mrf.mxu0
  %1575 = vmatprep.mubr.bf16.mxu0 0
  %1576 = vmatmul.mubr.bf16.gmra.mxu0 %v1256
  %v1577 = vpop.f32.mrf.mxu0
  %v1578 = vadd.f32 %v1473, %v1577
  %v1579 = vpop.f32.mrf.mxu0
  %v1580 = vpop.f32.mrf.mxu0
  %v1581 = vadd.f32 %v1476, %v1580
  %v1582 = vpop.f32.mrf.mxu0
  %1583 = vmatprep.mubr.bf16.mxu0 0
  %1584 = vmatmul.mubr.bf16.gmra.mxu0 %v1257
  %v1585 = vpop.f32.mrf.mxu0
  %v1586 = vadd.f32 %v1481, %v1585
  %v1587 = vpop.f32.mrf.mxu0
  %v1588 = vpop.f32.mrf.mxu0
  %v1589 = vadd.f32 %v1484, %v1588
  %v1590 = vpop.f32.mrf.mxu0
  %1591 = vdwg.mxu0
  %s1592 = scalar_lea.vmem %s4, 48
  %v1593 = vld [vmem:[%s1592] sm:$0xf]
  %v1594 = vld [vmem:[%s1592 + $0x4] sm:$0xf]
  %v1595 = vld [vmem:[%s1592 + $0x8] sm:$0xf]
  %v1596 = vld [vmem:[%s1592 + $0xc] sm:$0xf]
  %v1597 = vld [vmem:[%s1592 + $0x10] sm:$0xf]
  %v1598 = vld [vmem:[%s1592 + $0x14] sm:$0xf]
  %v1605 = vunpack.c.l.b16 %v1593
  %v1606 = vunpack.c.l.b16 %v1594
  %v1607 = vunpack.c.l.b16 %v1595
  %v1608 = vunpack.c.l.b16 %v1596
  %v1609 = vunpack.c.l.b16 %v1597
  %v1610 = vunpack.c.l.b16 %v1598
  %v1611 = vpack.c.b16 %v1606, %v1605
  %v1612 = vpack.c.b16 %v1608, %v1607
  %v1613 = vpack.c.b16 %v1610, %v1609
  %v1615 = vsel %vm564, %v1611, 0
  %v1618 = vsel %vm564, %v1612, 0
  %v1621 = vsel %vm564, %v1613, 0
  %1623 = vmatprep.subr.bf16.mxu0 0
  %1624 = vmatpush1.bf16.msra.mxu0 0
  %1625 = vmatprep.subr.bf16.mxu0 0
  %1626 = vmatpush1.bf16.msra.mxu0 0
  %1627 = vmatprep.subr.bf16.mxu0 0
  %1628 = vmatpush1.bf16.msra.mxu0 %v1167
  %1629 = vmatprep.subr.bf16.mxu0 0
  %1630 = vmatpush1.bf16.msra.mxu0 %v1166
  %1631 = vmatprep.subr.bf16.mxu0 0
  %1632 = vmatpush1.bf16.msra.mxu0 %v1165
  %1633 = vmatprep.subr.bf16.mxu0 0
  %1634 = vmatpush1.bf16.msra.mxu0 %v1164
  %1635 = vmatprep.subr.bf16.mxu0 0
  %1636 = vmatpush1.bf16.msra.mxu0 %v1163
  %1637 = vmatprep.subr.bf16.mxu0 0
  %1638 = vmatpush1.bf16.msra.mxu0 %v1162
  %1639 = vmatprep.subr.bf16.mxu0 0
  %1640 = vmatpush2.bf16.msra.mxu0 0
  %1641 = vmatprep.subr.bf16.mxu0 0
  %1642 = vmatpush2.bf16.msra.mxu0 0
  %1643 = vmatprep.subr.bf16.mxu0 0
  %1644 = vmatpush2.bf16.msra.mxu0 0
  %1645 = vmatprep.subr.bf16.mxu0 0
  %1646 = vmatpush2.bf16.msra.mxu0 0
  %1647 = vmatprep.subr.bf16.mxu0 0
  %1648 = vmatpush2.bf16.msra.mxu0 0
  %1649 = vmatprep.subr.bf16.mxu0 0
  %1650 = vmatpush2.bf16.msra.mxu0 0
  %1651 = vmatprep.subr.bf16.mxu0 0
  %1652 = vmatpush2.bf16.msra.mxu0 0
  %1653 = vmatprep.subr.bf16.mxu0 0
  %1654 = vmatpush2.bf16.msra.mxu0 0
  %1655 = vmatprep.mubr.bf16.mxu0 0
  %1656 = vmatmul.mubr.bf16.gmra.mxu0 %v1615
  %v1657 = vpop.f32.mrf.mxu0
  %v1658 = vadd.f32 0.0, %v1657
  %v1659 = vpop.f32.mrf.mxu0
  %v1660 = vpop.f32.mrf.mxu0
  %v1661 = vadd.f32 0.0, %v1660
  %v1662 = vpop.f32.mrf.mxu0
  %1663 = vmatprep.mubr.bf16.mxu0 0
  %1664 = vmatmul.mubr.bf16.gmra.mxu0 %v1618
  %v1665 = vpop.f32.mrf.mxu0
  %v1666 = vadd.f32 0.0, %v1665
  %v1667 = vpop.f32.mrf.mxu0
  %v1668 = vpop.f32.mrf.mxu0
  %v1669 = vadd.f32 0.0, %v1668
  %v1670 = vpop.f32.mrf.mxu0
  %1671 = vmatprep.mubr.bf16.mxu0 0
  %1672 = vmatmul.mubr.bf16.gmra.mxu0 %v1621
  %v1673 = vpop.f32.mrf.mxu0
  %v1674 = vadd.f32 0.0, %v1673
  %v1675 = vpop.f32.mrf.mxu0
  %v1676 = vpop.f32.mrf.mxu0
  %v1677 = vadd.f32 0.0, %v1676
  %v1678 = vpop.f32.mrf.mxu0
  %1679 = vdwg.mxu0
  %v1680 = vpack.c.bf16 %v1661, %v1658
  %v1681 = vpack.c.bf16 %v1669, %v1666
  %v1682 = vpack.c.bf16 %v1677, %v1674
  %s1683 = scalar_lea.vmem %s5, 128
  %v1684 = vld [vmem:[%s1683] sm:$0xf]
  %v1685 = vld [vmem:[%s1683 + $0x4] sm:$0xf]
  %v1686 = vld [vmem:[%s1683 + $0x8] sm:$0xf]
  %v1687 = vld [vmem:[%s1683 + $0xc] sm:$0xf]
  %v1688 = vld [vmem:[%s1683 + $0x10] sm:$0xf]
  %v1689 = vld [vmem:[%s1683 + $0x14] sm:$0xf]
  %v1690 = vld [vmem:[%s1683 + $0x18] sm:$0xf]
  %v1691 = vld [vmem:[%s1683 + $0x1c] sm:$0xf]
  %v1692 = vld [vmem:[%s1683 + $0x20] sm:$0xf]
  %v1693 = vld [vmem:[%s1683 + $0x24] sm:$0xf]
  %v1694 = vld [vmem:[%s1683 + $0x28] sm:$0xf]
  %v1695 = vld [vmem:[%s1683 + $0x2c] sm:$0xf]
  %v1696 = vld [vmem:[%s1683 + $0x30] sm:$0xf]
  %v1697 = vld [vmem:[%s1683 + $0x34] sm:$0xf]
  %v1698 = vld [vmem:[%s1683 + $0x38] sm:$0xf]
  %v1699 = vld [vmem:[%s1683 + $0x3c] sm:$0xf]
  %v1716 = vunpack.c.l.b16 %v1684
  %v1717 = vunpack.c.l.b16 %v1685
  %v1718 = vunpack.c.l.b16 %v1686
  %v1719 = vunpack.c.l.b16 %v1687
  %v1720 = vunpack.c.l.b16 %v1688
  %v1721 = vunpack.c.l.b16 %v1689
  %v1722 = vunpack.c.l.b16 %v1690
  %v1723 = vunpack.c.l.b16 %v1691
  %v1724 = vunpack.c.l.b16 %v1692
  %v1725 = vunpack.c.l.b16 %v1693
  %v1726 = vunpack.c.l.b16 %v1694
  %v1727 = vunpack.c.l.b16 %v1695
  %v1728 = vunpack.c.l.b16 %v1696
  %v1729 = vunpack.c.l.b16 %v1697
  %v1730 = vunpack.c.l.b16 %v1698
  %v1731 = vunpack.c.l.b16 %v1699
  %v1732 = vpack.c.b16 %v1717, %v1716
  %v1733 = vpack.c.b16 %v1719, %v1718
  %v1734 = vpack.c.b16 %v1721, %v1720
  %v1735 = vpack.c.b16 %v1723, %v1722
  %v1736 = vpack.c.b16 %v1725, %v1724
  %v1737 = vpack.c.b16 %v1727, %v1726
  %v1738 = vpack.c.b16 %v1729, %v1728
  %v1739 = vpack.c.b16 %v1731, %v1730
  %1748 = vmatprep.subr.bf16.mxu0 0
  %1749 = vmatpush1.bf16.msra.mxu0 %v1739
  %1750 = vmatprep.subr.bf16.mxu0 0
  %1751 = vmatpush1.bf16.msra.mxu0 %v1738
  %1752 = vmatprep.subr.bf16.mxu0 0
  %1753 = vmatpush1.bf16.msra.mxu0 %v1737
  %1754 = vmatprep.subr.bf16.mxu0 0
  %1755 = vmatpush1.bf16.msra.mxu0 %v1736
  %1756 = vmatprep.subr.bf16.mxu0 0
  %1757 = vmatpush1.bf16.msra.mxu0 %v1735
  %1758 = vmatprep.subr.bf16.mxu0 0
  %1759 = vmatpush1.bf16.msra.mxu0 %v1734
  %1760 = vmatprep.subr.bf16.mxu0 0
  %1761 = vmatpush1.bf16.msra.mxu0 %v1733
  %1762 = vmatprep.subr.bf16.mxu0 0
  %1763 = vmatpush1.bf16.msra.mxu0 %v1732
  %1764 = vmatprep.subr.bf16.mxu0 0
  %1765 = vmatpush2.bf16.msra.mxu0 0
  %1766 = vmatprep.subr.bf16.mxu0 0
  %1767 = vmatpush2.bf16.msra.mxu0 0
  %1768 = vmatprep.subr.bf16.mxu0 0
  %1769 = vmatpush2.bf16.msra.mxu0 0
  %1770 = vmatprep.subr.bf16.mxu0 0
  %1771 = vmatpush2.bf16.msra.mxu0 0
  %1772 = vmatprep.subr.bf16.mxu0 0
  %1773 = vmatpush2.bf16.msra.mxu0 0
  %1774 = vmatprep.subr.bf16.mxu0 0
  %1775 = vmatpush2.bf16.msra.mxu0 0
  %1776 = vmatprep.subr.bf16.mxu0 0
  %1777 = vmatpush2.bf16.msra.mxu0 0
  %1778 = vmatprep.subr.bf16.mxu0 0
  %1779 = vmatpush2.bf16.msra.mxu0 0
  %1780 = vmatprep.mubr.bf16.mxu0 0
  %1781 = vmatmul.mubr.bf16.gmra.mxu0 %v1680
  %v1782 = vpop.f32.mrf.mxu0
  %v1783 = vadd.f32 0.0, %v1782
  %v1784 = vpop.f32.mrf.mxu0
  %v1785 = vpop.f32.mrf.mxu0
  %v1786 = vadd.f32 0.0, %v1785
  %v1787 = vpop.f32.mrf.mxu0
  %1788 = vmatprep.mubr.bf16.mxu0 0
  %1789 = vmatmul.mubr.bf16.gmra.mxu0 %v1681
  %v1790 = vpop.f32.mrf.mxu0
  %v1791 = vadd.f32 0.0, %v1790
  %v1792 = vpop.f32.mrf.mxu0
  %v1793 = vpop.f32.mrf.mxu0
  %v1794 = vadd.f32 0.0, %v1793
  %v1795 = vpop.f32.mrf.mxu0
  %1796 = vmatprep.mubr.bf16.mxu0 0
  %1797 = vmatmul.mubr.bf16.gmra.mxu0 %v1682
  %v1798 = vpop.f32.mrf.mxu0
  %v1799 = vadd.f32 0.0, %v1798
  %v1800 = vpop.f32.mrf.mxu0
  %v1801 = vpop.f32.mrf.mxu0
  %v1802 = vadd.f32 0.0, %v1801
  %v1803 = vpop.f32.mrf.mxu0
  %1804 = vdwg.mxu0
  %v1805 = vadd.f32 %v1570, %v1783
  %v1806 = vadd.f32 %v1573, %v1786
  %v1807 = vadd.f32 %v1578, %v1791
  %v1808 = vadd.f32 %v1581, %v1794
  %v1809 = vadd.f32 %v1586, %v1799
  %v1810 = vadd.f32 %v1589, %v1802
  %v1811 = vld [vmem:[%s7] sm:$0x7]
  %vm1812 = vcmask 392192
  %v1814 = vsel %vm1812, %v1811, 0
  %1816 = vmatprep.subr.mxu0 0.0
  %1817 = vmatpush1.msra.mxu0 0.0
  %1818 = vmatprep.subr.mxu0 0.0
  %1819 = vmatpush1.msra.mxu0 0.0
  %1820 = vmatprep.subr.mxu0 0.0
  %1821 = vmatpush1.msra.mxu0 0.0
  %1822 = vmatprep.subr.mxu0 0.0
  %1823 = vmatpush1.msra.mxu0 0.0
  %1824 = vmatprep.subr.mxu0 0.0
  %1825 = vmatpush1.msra.mxu0 0.0
  %1826 = vmatprep.subr.mxu0 0.0
  %1827 = vmatpush1.msra.mxu0 0.0
  %1828 = vmatprep.subr.mxu0 0.0
  %1829 = vmatpush1.msra.mxu0 0.0
  %1830 = vmatprep.subr.mxu0 0.0
  %1831 = vmatpush1.msra.mxu0 0.0
  %1832 = vmatprep.subr.mxu0 0.0
  %1833 = vmatpush1.msra.mxu0 0.0
  %1834 = vmatprep.subr.mxu0 0.0
  %1835 = vmatpush1.msra.mxu0 0.0
  %1836 = vmatprep.subr.mxu0 0.0
  %1837 = vmatpush1.msra.mxu0 %v1810
  %1838 = vmatprep.subr.mxu0 0.0
  %1839 = vmatpush1.msra.mxu0 %v1809
  %1840 = vmatprep.subr.mxu0 0.0
  %1841 = vmatpush1.msra.mxu0 %v1808
  %1842 = vmatprep.subr.mxu0 0.0
  %1843 = vmatpush1.msra.mxu0 %v1807
  %1844 = vmatprep.subr.mxu0 0.0
  %1845 = vmatpush1.msra.mxu0 %v1806
  %1846 = vmatprep.subr.mxu0 0.0
  %1847 = vmatpush1.msra.mxu0 %v1805
  %1848 = vmatprep.subr.mxu0 0.0
  %1849 = vmatpush2.msra.mxu0 0.0
  %1850 = vmatprep.subr.mxu0 0.0
  %1851 = vmatpush2.msra.mxu0 0.0
  %1852 = vmatprep.subr.mxu0 0.0
  %1853 = vmatpush2.msra.mxu0 0.0
  %1854 = vmatprep.subr.mxu0 0.0
  %1855 = vmatpush2.msra.mxu0 0.0
  %1856 = vmatprep.subr.mxu0 0.0
  %1857 = vmatpush2.msra.mxu0 0.0
  %1858 = vmatprep.subr.mxu0 0.0
  %1859 = vmatpush2.msra.mxu0 0.0
  %1860 = vmatprep.subr.mxu0 0.0
  %1861 = vmatpush2.msra.mxu0 0.0
  %1862 = vmatprep.subr.mxu0 0.0
  %1863 = vmatpush2.msra.mxu0 0.0
  %1864 = vmatprep.subr.mxu0 0.0
  %1865 = vmatpush2.msra.mxu0 0.0
  %1866 = vmatprep.subr.mxu0 0.0
  %1867 = vmatpush2.msra.mxu0 0.0
  %1868 = vmatprep.subr.mxu0 0.0
  %1869 = vmatpush2.msra.mxu0 0.0
  %1870 = vmatprep.subr.mxu0 0.0
  %1871 = vmatpush2.msra.mxu0 0.0
  %1872 = vmatprep.subr.mxu0 0.0
  %1873 = vmatpush2.msra.mxu0 0.0
  %1874 = vmatprep.subr.mxu0 0.0
  %1875 = vmatpush2.msra.mxu0 0.0
  %1876 = vmatprep.subr.mxu0 0.0
  %1877 = vmatpush2.msra.mxu0 0.0
  %1878 = vmatprep.subr.mxu0 0.0
  %1879 = vmatpush2.msra.mxu0 0.0
  %1880 = vmatprep.mubr.f32.mxu0 0.0
  %1881 = vmatmul.mubr.f32.gmra.mxu0 %v1814
  %v1882 = vpop.f32.mrf.mxu0
  %v1883 = vadd.f32 0.0, %v1882
  %v1884 = vpop.f32.mrf.mxu0
  %1885 = vdwg.mxu0
  %v1886 = vmul.f32 %v1805, %v1805
  %v1887 = vmul.f32 %v1806, %v1806
  %v1888 = vmul.f32 %v1807, %v1807
  %v1889 = vmul.f32 %v1808, %v1808
  %v1890 = vmul.f32 %v1809, %v1809
  %v1891 = vmul.f32 %v1810, %v1810
  %1892 = vmatprep.subr.mxu0 0.0
  %1893 = vmatpush1.msra.mxu0 0.0
  %1894 = vmatprep.subr.mxu0 0.0
  %1895 = vmatpush1.msra.mxu0 0.0
  %1896 = vmatprep.subr.mxu0 0.0
  %1897 = vmatpush1.msra.mxu0 0.0
  %1898 = vmatprep.subr.mxu0 0.0
  %1899 = vmatpush1.msra.mxu0 0.0
  %1900 = vmatprep.subr.mxu0 0.0
  %1901 = vmatpush1.msra.mxu0 0.0
  %1902 = vmatprep.subr.mxu0 0.0
  %1903 = vmatpush1.msra.mxu0 0.0
  %1904 = vmatprep.subr.mxu0 0.0
  %1905 = vmatpush1.msra.mxu0 0.0
  %1906 = vmatprep.subr.mxu0 0.0
  %1907 = vmatpush1.msra.mxu0 0.0
  %1908 = vmatprep.subr.mxu0 0.0
  %1909 = vmatpush1.msra.mxu0 0.0
  %1910 = vmatprep.subr.mxu0 0.0
  %1911 = vmatpush1.msra.mxu0 0.0
  %1912 = vmatprep.subr.mxu0 0.0
  %1913 = vmatpush1.msra.mxu0 %v1891
  %1914 = vmatprep.subr.mxu0 0.0
  %1915 = vmatpush1.msra.mxu0 %v1890
  %1916 = vmatprep.subr.mxu0 0.0
  %1917 = vmatpush1.msra.mxu0 %v1889
  %1918 = vmatprep.subr.mxu0 0.0
  %1919 = vmatpush1.msra.mxu0 %v1888
  %1920 = vmatprep.subr.mxu0 0.0
  %1921 = vmatpush1.msra.mxu0 %v1887
  %1922 = vmatprep.subr.mxu0 0.0
  %1923 = vmatpush1.msra.mxu0 %v1886
  %1924 = vmatprep.subr.mxu0 0.0
  %1925 = vmatpush2.msra.mxu0 0.0
  %1926 = vmatprep.subr.mxu0 0.0
  %1927 = vmatpush2.msra.mxu0 0.0
  %1928 = vmatprep.subr.mxu0 0.0
  %1929 = vmatpush2.msra.mxu0 0.0
  %1930 = vmatprep.subr.mxu0 0.0
  %1931 = vmatpush2.msra.mxu0 0.0
  %1932 = vmatprep.subr.mxu0 0.0
  %1933 = vmatpush2.msra.mxu0 0.0
  %1934 = vmatprep.subr.mxu0 0.0
  %1935 = vmatpush2.msra.mxu0 0.0
  %1936 = vmatprep.subr.mxu0 0.0
  %1937 = vmatpush2.msra.mxu0 0.0
  %1938 = vmatprep.subr.mxu0 0.0
  %1939 = vmatpush2.msra.mxu0 0.0
  %1940 = vmatprep.subr.mxu0 0.0
  %1941 = vmatpush2.msra.mxu0 0.0
  %1942 = vmatprep.subr.mxu0 0.0
  %1943 = vmatpush2.msra.mxu0 0.0
  %1944 = vmatprep.subr.mxu0 0.0
  %1945 = vmatpush2.msra.mxu0 0.0
  %1946 = vmatprep.subr.mxu0 0.0
  %1947 = vmatpush2.msra.mxu0 0.0
  %1948 = vmatprep.subr.mxu0 0.0
  %1949 = vmatpush2.msra.mxu0 0.0
  %1950 = vmatprep.subr.mxu0 0.0
  %1951 = vmatpush2.msra.mxu0 0.0
  %1952 = vmatprep.subr.mxu0 0.0
  %1953 = vmatpush2.msra.mxu0 0.0
  %1954 = vmatprep.subr.mxu0 0.0
  %1955 = vmatpush2.msra.mxu0 0.0
  %1956 = vmatprep.mubr.f32.mxu0 0.0
  %1957 = vmatmul.mubr.f32.gmra.mxu0 %v1814
  %v1958 = vpop.f32.mrf.mxu0
  %v1959 = vadd.f32 0.0, %v1958
  %v1960 = vpop.f32.mrf.mxu0
  %1961 = vdwg.mxu0
  %v1962 = vld [vmem:[%s8] sm:$0xff]
  %v1963 = vld [vmem:[%s8 + $0x8] sm:$0xff]
  %v1964 = vld [vmem:[%s8 + $0x10] sm:$0xff]
  %v1965 = vld [vmem:[%s8 + $0x18] sm:$0xff]
  %v1966 = vld [vmem:[%s8 + $0x20] sm:$0xff]
  %v1967 = vld [vmem:[%s8 + $0x28] sm:$0xff]
  %v1968 = vld [vmem:[%s8 + $0x30] sm:$0xff]
  %v1969 = vld [vmem:[%s8 + $0x38] sm:$0xff]
  %v1970 = vld [vmem:[%s8 + $0x40] sm:$0xff]
  %v1971 = vld [vmem:[%s8 + $0x48] sm:$0xff]
  %v1972 = vld [vmem:[%s8 + $0x50] sm:$0xff]
  %v1973 = vld [vmem:[%s8 + $0x58] sm:$0xff]
  %v1974 = vld [vmem:[%s8 + $0x60] sm:$0xff]
  %v1975 = vld [vmem:[%s8 + $0x68] sm:$0xff]
  %v1976 = vld [vmem:[%s8 + $0x70] sm:$0xff]
  %v1977 = vld [vmem:[%s8 + $0x78] sm:$0xff]
  %1978 = vmatprep.subr.mxu0 0.0
  %1979 = vmatpush1.msra.mxu0 %v1977
  %1980 = vmatprep.subr.mxu0 0.0
  %1981 = vmatpush1.msra.mxu0 %v1976
  %1982 = vmatprep.subr.mxu0 0.0
  %1983 = vmatpush1.msra.mxu0 %v1975
  %1984 = vmatprep.subr.mxu0 0.0
  %1985 = vmatpush1.msra.mxu0 %v1974
  %1986 = vmatprep.subr.mxu0 0.0
  %1987 = vmatpush1.msra.mxu0 %v1973
  %1988 = vmatprep.subr.mxu0 0.0
  %1989 = vmatpush1.msra.mxu0 %v1972
  %1990 = vmatprep.subr.mxu0 0.0
  %1991 = vmatpush1.msra.mxu0 %v1971
  %1992 = vmatprep.subr.mxu0 0.0
  %1993 = vmatpush1.msra.mxu0 %v1970
  %1994 = vmatprep.subr.mxu0 0.0
  %1995 = vmatpush1.msra.mxu0 %v1969
  %1996 = vmatprep.subr.mxu0 0.0
  %1997 = vmatpush1.msra.mxu0 %v1968
  %1998 = vmatprep.subr.mxu0 0.0
  %1999 = vmatpush1.msra.mxu0 %v1967
  %2000 = vmatprep.subr.mxu0 0.0
  %2001 = vmatpush1.msra.mxu0 %v1966
  %2002 = vmatprep.subr.mxu0 0.0
  %2003 = vmatpush1.msra.mxu0 %v1965
  %2004 = vmatprep.subr.mxu0 0.0
  %2005 = vmatpush1.msra.mxu0 %v1964
  %2006 = vmatprep.subr.mxu0 0.0
  %2007 = vmatpush1.msra.mxu0 %v1963
  %2008 = vmatprep.subr.mxu0 0.0
  %2009 = vmatpush1.msra.mxu0 %v1962
  %2010 = vmatprep.subr.mxu0 0.0
  %2011 = vmatpush2.msra.mxu0 0.0
  %2012 = vmatprep.subr.mxu0 0.0
  %2013 = vmatpush2.msra.mxu0 0.0
  %2014 = vmatprep.subr.mxu0 0.0
  %2015 = vmatpush2.msra.mxu0 0.0
  %2016 = vmatprep.subr.mxu0 0.0
  %2017 = vmatpush2.msra.mxu0 0.0
  %2018 = vmatprep.subr.mxu0 0.0
  %2019 = vmatpush2.msra.mxu0 0.0
  %2020 = vmatprep.subr.mxu0 0.0
  %2021 = vmatpush2.msra.mxu0 0.0
  %2022 = vmatprep.subr.mxu0 0.0
  %2023 = vmatpush2.msra.mxu0 0.0
  %2024 = vmatprep.subr.mxu0 0.0
  %2025 = vmatpush2.msra.mxu0 0.0
  %2026 = vmatprep.subr.mxu0 0.0
  %2027 = vmatpush2.msra.mxu0 0.0
  %2028 = vmatprep.subr.mxu0 0.0
  %2029 = vmatpush2.msra.mxu0 0.0
  %2030 = vmatprep.subr.mxu0 0.0
  %2031 = vmatpush2.msra.mxu0 0.0
  %2032 = vmatprep.subr.mxu0 0.0
  %2033 = vmatpush2.msra.mxu0 0.0
  %2034 = vmatprep.subr.mxu0 0.0
  %2035 = vmatpush2.msra.mxu0 0.0
  %2036 = vmatprep.subr.mxu0 0.0
  %2037 = vmatpush2.msra.mxu0 0.0
  %2038 = vmatprep.subr.mxu0 0.0
  %2039 = vmatpush2.msra.mxu0 0.0
  %2040 = vmatprep.subr.mxu0 0.0
  %2041 = vmatpush2.msra.mxu0 0.0
  %2042 = vmatprep.mubr.f32.mxu0 0.0
  %2043 = vmatmul.mubr.f32.gmra.mxu0 %v1883
  %v2044 = vpop.f32.mrf.mxu0
  %v2045 = vadd.f32 0.0, %v2044
  %v2046 = vpop.f32.mrf.mxu0
  %2047 = vdwg.mxu0
  %v2048 = vrcp.pop 128.0
  %v2049 = vmul.f32 %v2045, %v2048
  %2050 = vmatprep.subr.mxu0 0.0
  %2051 = vmatpush1.msra.mxu0 %v1977
  %2052 = vmatprep.subr.mxu0 0.0
  %2053 = vmatpush1.msra.mxu0 %v1976
  %2054 = vmatprep.subr.mxu0 0.0
  %2055 = vmatpush1.msra.mxu0 %v1975
  %2056 = vmatprep.subr.mxu0 0.0
  %2057 = vmatpush1.msra.mxu0 %v1974
  %2058 = vmatprep.subr.mxu0 0.0
  %2059 = vmatpush1.msra.mxu0 %v1973
  %2060 = vmatprep.subr.mxu0 0.0
  %2061 = vmatpush1.msra.mxu0 %v1972
  %2062 = vmatprep.subr.mxu0 0.0
  %2063 = vmatpush1.msra.mxu0 %v1971
  %2064 = vmatprep.subr.mxu0 0.0
  %2065 = vmatpush1.msra.mxu0 %v1970
  %2066 = vmatprep.subr.mxu0 0.0
  %2067 = vmatpush1.msra.mxu0 %v1969
  %2068 = vmatprep.subr.mxu0 0.0
  %2069 = vmatpush1.msra.mxu0 %v1968
  %2070 = vmatprep.subr.mxu0 0.0
  %2071 = vmatpush1.msra.mxu0 %v1967
  %2072 = vmatprep.subr.mxu0 0.0
  %2073 = vmatpush1.msra.mxu0 %v1966
  %2074 = vmatprep.subr.mxu0 0.0
  %2075 = vmatpush1.msra.mxu0 %v1965
  %2076 = vmatprep.subr.mxu0 0.0
  %2077 = vmatpush1.msra.mxu0 %v1964
  %2078 = vmatprep.subr.mxu0 0.0
  %2079 = vmatpush1.msra.mxu0 %v1963
  %2080 = vmatprep.subr.mxu0 0.0
  %2081 = vmatpush1.msra.mxu0 %v1962
  %2082 = vmatprep.subr.mxu0 0.0
  %2083 = vmatpush2.msra.mxu0 0.0
  %2084 = vmatprep.subr.mxu0 0.0
  %2085 = vmatpush2.msra.mxu0 0.0
  %2086 = vmatprep.subr.mxu0 0.0
  %2087 = vmatpush2.msra.mxu0 0.0
  %2088 = vmatprep.subr.mxu0 0.0
  %2089 = vmatpush2.msra.mxu0 0.0
  %2090 = vmatprep.subr.mxu0 0.0
  %2091 = vmatpush2.msra.mxu0 0.0
  %2092 = vmatprep.subr.mxu0 0.0
  %2093 = vmatpush2.msra.mxu0 0.0
  %2094 = vmatprep.subr.mxu0 0.0
  %2095 = vmatpush2.msra.mxu0 0.0
  %2096 = vmatprep.subr.mxu0 0.0
  %2097 = vmatpush2.msra.mxu0 0.0
  %2098 = vmatprep.subr.mxu0 0.0
  %2099 = vmatpush2.msra.mxu0 0.0
  %2100 = vmatprep.subr.mxu0 0.0
  %2101 = vmatpush2.msra.mxu0 0.0
  %2102 = vmatprep.subr.mxu0 0.0
  %2103 = vmatpush2.msra.mxu0 0.0
  %2104 = vmatprep.subr.mxu0 0.0
  %2105 = vmatpush2.msra.mxu0 0.0
  %2106 = vmatprep.subr.mxu0 0.0
  %2107 = vmatpush2.msra.mxu0 0.0
  %2108 = vmatprep.subr.mxu0 0.0
  %2109 = vmatpush2.msra.mxu0 0.0
  %2110 = vmatprep.subr.mxu0 0.0
  %2111 = vmatpush2.msra.mxu0 0.0
  %2112 = vmatprep.subr.mxu0 0.0
  %2113 = vmatpush2.msra.mxu0 0.0
  %2114 = vmatprep.mubr.f32.mxu0 0.0
  %2115 = vmatmul.mubr.f32.gmra.mxu0 %v1959
  %v2116 = vpop.f32.mrf.mxu0
  %v2117 = vadd.f32 0.0, %v2116
  %v2118 = vpop.f32.mrf.mxu0
  %2119 = vdwg.mxu0
  %v2120 = vmul.f32 %v2117, %v2048
  %v2121 = vld [vmem:[%s6] sm:$0xff]
  %v2122 = vld [vmem:[%s6 + $0x8] sm:$0xff]
  %v2123 = vld [vmem:[%s6 + $0x10] sm:$0xff]
  %v2124 = vld [vmem:[%s6 + $0x18] sm:$0xff]
  %v2125 = vld [vmem:[%s6 + $0x20] sm:$0xff]
  %v2126 = vld [vmem:[%s6 + $0x28] sm:$0xff]
  %vm2127 = vcmask 23552
  %v2129 = vsel %vm2127, %v2121, 0
  %v2132 = vsel %vm2127, %v2122, 0
  %v2135 = vsel %vm2127, %v2123, 0
  %v2138 = vsel %vm2127, %v2124, 0
  %v2141 = vsel %vm2127, %v2125, 0
  %v2144 = vsel %vm2127, %v2126, 0
  %vm2146 = vcmask 1042432
  %v2148 = vsel %vm2146, %v2049, 0
  %2150 = vmatprep.subr.mxu0 0.0
  %2151 = vmatpush1.msra.mxu0 0.0
  %2152 = vmatprep.subr.mxu0 0.0
  %2153 = vmatpush1.msra.mxu0 0.0
  %2154 = vmatprep.subr.mxu0 0.0
  %2155 = vmatpush1.msra.mxu0 0.0
  %2156 = vmatprep.subr.mxu0 0.0
  %2157 = vmatpush1.msra.mxu0 0.0
  %2158 = vmatprep.subr.mxu0 0.0
  %2159 = vmatpush1.msra.mxu0 0.0
  %2160 = vmatprep.subr.mxu0 0.0
  %2161 = vmatpush1.msra.mxu0 0.0
  %2162 = vmatprep.subr.mxu0 0.0
  %2163 = vmatpush1.msra.mxu0 0.0
  %2164 = vmatprep.subr.mxu0 0.0
  %2165 = vmatpush1.msra.mxu0 0.0
  %2166 = vmatprep.subr.mxu0 0.0
  %2167 = vmatpush1.msra.mxu0 0.0
  %2168 = vmatprep.subr.mxu0 0.0
  %2169 = vmatpush1.msra.mxu0 0.0
  %2170 = vmatprep.subr.mxu0 0.0
  %2171 = vmatpush1.msra.mxu0 0.0
  %2172 = vmatprep.subr.mxu0 0.0
  %2173 = vmatpush1.msra.mxu0 0.0
  %2174 = vmatprep.subr.mxu0 0.0
  %2175 = vmatpush1.msra.mxu0 0.0
  %2176 = vmatprep.subr.mxu0 0.0
  %2177 = vmatpush1.msra.mxu0 0.0
  %2178 = vmatprep.subr.mxu0 0.0
  %2179 = vmatpush1.msra.mxu0 0.0
  %2180 = vmatprep.subr.mxu0 0.0
  %2181 = vmatpush1.msra.mxu0 %v2148
  %2182 = vmatprep.subr.mxu0 0.0
  %2183 = vmatpush2.msra.mxu0 0.0
  %2184 = vmatprep.subr.mxu0 0.0
  %2185 = vmatpush2.msra.mxu0 0.0
  %2186 = vmatprep.subr.mxu0 0.0
  %2187 = vmatpush2.msra.mxu0 0.0
  %2188 = vmatprep.subr.mxu0 0.0
  %2189 = vmatpush2.msra.mxu0 0.0
  %2190 = vmatprep.subr.mxu0 0.0
  %2191 = vmatpush2.msra.mxu0 0.0
  %2192 = vmatprep.subr.mxu0 0.0
  %2193 = vmatpush2.msra.mxu0 0.0
  %2194 = vmatprep.subr.mxu0 0.0
  %2195 = vmatpush2.msra.mxu0 0.0
  %2196 = vmatprep.subr.mxu0 0.0
  %2197 = vmatpush2.msra.mxu0 0.0
  %2198 = vmatprep.subr.mxu0 0.0
  %2199 = vmatpush2.msra.mxu0 0.0
  %2200 = vmatprep.subr.mxu0 0.0
  %2201 = vmatpush2.msra.mxu0 0.0
  %2202 = vmatprep.subr.mxu0 0.0
  %2203 = vmatpush2.msra.mxu0 0.0
  %2204 = vmatprep.subr.mxu0 0.0
  %2205 = vmatpush2.msra.mxu0 0.0
  %2206 = vmatprep.subr.mxu0 0.0
  %2207 = vmatpush2.msra.mxu0 0.0
  %2208 = vmatprep.subr.mxu0 0.0
  %2209 = vmatpush2.msra.mxu0 0.0
  %2210 = vmatprep.subr.mxu0 0.0
  %2211 = vmatpush2.msra.mxu0 0.0
  %2212 = vmatprep.subr.mxu0 0.0
  %2213 = vmatpush2.msra.mxu0 0.0
  %2214 = vmatprep.mubr.f32.mxu0 0.0
  %2215 = vmatmul.mubr.f32.gmra.mxu0 %v2129
  %v2216 = vpop.f32.mrf.mxu0
  %v2217 = vadd.f32 0.0, %v2216
  %v2218 = vpop.f32.mrf.mxu0
  %2219 = vmatprep.mubr.f32.mxu0 0.0
  %2220 = vmatmul.mubr.f32.gmra.mxu0 %v2132
  %v2221 = vpop.f32.mrf.mxu0
  %v2222 = vadd.f32 0.0, %v2221
  %v2223 = vpop.f32.mrf.mxu0
  %2224 = vmatprep.mubr.f32.mxu0 0.0
  %2225 = vmatmul.mubr.f32.gmra.mxu0 %v2135
  %v2226 = vpop.f32.mrf.mxu0
  %v2227 = vadd.f32 0.0, %v2226
  %v2228 = vpop.f32.mrf.mxu0
  %2229 = vmatprep.mubr.f32.mxu0 0.0
  %2230 = vmatmul.mubr.f32.gmra.mxu0 %v2138
  %v2231 = vpop.f32.mrf.mxu0
  %v2232 = vadd.f32 0.0, %v2231
  %v2233 = vpop.f32.mrf.mxu0
  %2234 = vmatprep.mubr.f32.mxu0 0.0
  %2235 = vmatmul.mubr.f32.gmra.mxu0 %v2141
  %v2236 = vpop.f32.mrf.mxu0
  %v2237 = vadd.f32 0.0, %v2236
  %v2238 = vpop.f32.mrf.mxu0
  %2239 = vmatprep.mubr.f32.mxu0 0.0
  %2240 = vmatmul.mubr.f32.gmra.mxu0 %v2144
  %v2241 = vpop.f32.mrf.mxu0
  %v2242 = vadd.f32 0.0, %v2241
  %v2243 = vpop.f32.mrf.mxu0
  %2244 = vdwg.mxu0
  %v2246 = vsel %vm2146, %v2120, 0
  %2248 = vmatprep.subr.mxu0 0.0
  %2249 = vmatpush1.msra.mxu0 0.0
  %2250 = vmatprep.subr.mxu0 0.0
  %2251 = vmatpush1.msra.mxu0 0.0
  %2252 = vmatprep.subr.mxu0 0.0
  %2253 = vmatpush1.msra.mxu0 0.0
  %2254 = vmatprep.subr.mxu0 0.0
  %2255 = vmatpush1.msra.mxu0 0.0
  %2256 = vmatprep.subr.mxu0 0.0
  %2257 = vmatpush1.msra.mxu0 0.0
  %2258 = vmatprep.subr.mxu0 0.0
  %2259 = vmatpush1.msra.mxu0 0.0
  %2260 = vmatprep.subr.mxu0 0.0
  %2261 = vmatpush1.msra.mxu0 0.0
  %2262 = vmatprep.subr.mxu0 0.0
  %2263 = vmatpush1.msra.mxu0 0.0
  %2264 = vmatprep.subr.mxu0 0.0
  %2265 = vmatpush1.msra.mxu0 0.0
  %2266 = vmatprep.subr.mxu0 0.0
  %2267 = vmatpush1.msra.mxu0 0.0
  %2268 = vmatprep.subr.mxu0 0.0
  %2269 = vmatpush1.msra.mxu0 0.0
  %2270 = vmatprep.subr.mxu0 0.0
  %2271 = vmatpush1.msra.mxu0 0.0
  %2272 = vmatprep.subr.mxu0 0.0
  %2273 = vmatpush1.msra.mxu0 0.0
  %2274 = vmatprep.subr.mxu0 0.0
  %2275 = vmatpush1.msra.mxu0 0.0
  %2276 = vmatprep.subr.mxu0 0.0
  %2277 = vmatpush1.msra.mxu0 0.0
  %2278 = vmatprep.subr.mxu0 0.0
  %2279 = vmatpush1.msra.mxu0 %v2246
  %2280 = vmatprep.subr.mxu0 0.0
  %2281 = vmatpush2.msra.mxu0 0.0
  %2282 = vmatprep.subr.mxu0 0.0
  %2283 = vmatpush2.msra.mxu0 0.0
  %2284 = vmatprep.subr.mxu0 0.0
  %2285 = vmatpush2.msra.mxu0 0.0
  %2286 = vmatprep.subr.mxu0 0.0
  %2287 = vmatpush2.msra.mxu0 0.0
  %2288 = vmatprep.subr.mxu0 0.0
  %2289 = vmatpush2.msra.mxu0 0.0
  %2290 = vmatprep.subr.mxu0 0.0
  %2291 = vmatpush2.msra.mxu0 0.0
  %2292 = vmatprep.subr.mxu0 0.0
  %2293 = vmatpush2.msra.mxu0 0.0
  %2294 = vmatprep.subr.mxu0 0.0
  %2295 = vmatpush2.msra.mxu0 0.0
  %2296 = vmatprep.subr.mxu0 0.0
  %2297 = vmatpush2.msra.mxu0 0.0
  %2298 = vmatprep.subr.mxu0 0.0
  %2299 = vmatpush2.msra.mxu0 0.0
  %2300 = vmatprep.subr.mxu0 0.0
  %2301 = vmatpush2.msra.mxu0 0.0
  %2302 = vmatprep.subr.mxu0 0.0
  %2303 = vmatpush2.msra.mxu0 0.0
  %2304 = vmatprep.subr.mxu0 0.0
  %2305 = vmatpush2.msra.mxu0 0.0
  %2306 = vmatprep.subr.mxu0 0.0
  %2307 = vmatpush2.msra.mxu0 0.0
  %2308 = vmatprep.subr.mxu0 0.0
  %2309 = vmatpush2.msra.mxu0 0.0
  %2310 = vmatprep.subr.mxu0 0.0
  %2311 = vmatpush2.msra.mxu0 0.0
  %2312 = vmatprep.mubr.f32.mxu0 0.0
  %2313 = vmatmul.mubr.f32.gmra.mxu0 %v2129
  %v2314 = vpop.f32.mrf.mxu0
  %v2315 = vadd.f32 0.0, %v2314
  %v2316 = vpop.f32.mrf.mxu0
  %2317 = vmatprep.mubr.f32.mxu0 0.0
  %2318 = vmatmul.mubr.f32.gmra.mxu0 %v2132
  %v2319 = vpop.f32.mrf.mxu0
  %v2320 = vadd.f32 0.0, %v2319
  %v2321 = vpop.f32.mrf.mxu0
  %2322 = vmatprep.mubr.f32.mxu0 0.0
  %2323 = vmatmul.mubr.f32.gmra.mxu0 %v2135
  %v2324 = vpop.f32.mrf.mxu0
  %v2325 = vadd.f32 0.0, %v2324
  %v2326 = vpop.f32.mrf.mxu0
  %2327 = vmatprep.mubr.f32.mxu0 0.0
  %2328 = vmatmul.mubr.f32.gmra.mxu0 %v2138
  %v2329 = vpop.f32.mrf.mxu0
  %v2330 = vadd.f32 0.0, %v2329
  %v2331 = vpop.f32.mrf.mxu0
  %2332 = vmatprep.mubr.f32.mxu0 0.0
  %2333 = vmatmul.mubr.f32.gmra.mxu0 %v2141
  %v2334 = vpop.f32.mrf.mxu0
  %v2335 = vadd.f32 0.0, %v2334
  %v2336 = vpop.f32.mrf.mxu0
  %2337 = vmatprep.mubr.f32.mxu0 0.0
  %2338 = vmatmul.mubr.f32.gmra.mxu0 %v2144
  %v2339 = vpop.f32.mrf.mxu0
  %v2340 = vadd.f32 0.0, %v2339
  %v2341 = vpop.f32.mrf.mxu0
  %2342 = vdwg.mxu0
  %v2343 = vsub.f32 %v1805, %v2217
  %v2344 = vsub.f32 %v1806, %v2222
  %v2345 = vsub.f32 %v1807, %v2227
  %v2346 = vsub.f32 %v1808, %v2232
  %v2347 = vsub.f32 %v1809, %v2237
  %v2348 = vsub.f32 %v1810, %v2242
  %v2349 = vmul.f32 %v2217, %v2217
  %v2350 = vmul.f32 %v2222, %v2222
  %v2351 = vmul.f32 %v2227, %v2227
  %v2352 = vmul.f32 %v2232, %v2232
  %v2353 = vmul.f32 %v2237, %v2237
  %v2354 = vmul.f32 %v2242, %v2242
  %v2355 = vsub.f32 %v2315, %v2349
  %v2356 = vsub.f32 %v2320, %v2350
  %v2357 = vsub.f32 %v2325, %v2351
  %v2358 = vsub.f32 %v2330, %v2352
  %v2359 = vsub.f32 %v2335, %v2353
  %v2360 = vsub.f32 %v2340, %v2354
  %v2361 = vadd.f32 %v2355, 1e-05
  %v2362 = vadd.f32 %v2356, 1e-05
  %v2363 = vadd.f32 %v2357, 1e-05
  %v2364 = vadd.f32 %v2358, 1e-05
  %v2365 = vadd.f32 %v2359, 1e-05
  %v2366 = vadd.f32 %v2360, 1e-05
  %v2367 = vrsqrt.pop %v2361
  %v2368 = vrsqrt.pop %v2362
  %v2369 = vrsqrt.pop %v2363
  %v2370 = vrsqrt.pop %v2364
  %v2371 = vrsqrt.pop %v2365
  %v2372 = vrsqrt.pop %v2366
  %v2373 = vmul.f32 %v2343, %v2367
  %v2374 = vmul.f32 %v2344, %v2368
  %v2375 = vmul.f32 %v2345, %v2369
  %v2376 = vmul.f32 %v2346, %v2370
  %v2377 = vmul.f32 %v2347, %v2371
  %v2378 = vmul.f32 %v2348, %v2372
  %v2379 = vmax.f32 %v2373, 0.0
  %v2380 = vmax.f32 %v2374, 0.0
  %v2381 = vmax.f32 %v2375, 0.0
  %v2382 = vmax.f32 %v2376, 0.0
  %v2383 = vmax.f32 %v2377, 0.0
  %v2384 = vmax.f32 %v2378, 0.0
  %v2385 = vpack.c.bf16 %v2380, %v2379
  %v2386 = vpack.c.bf16 %v2382, %v2381
  %v2387 = vpack.c.bf16 %v2384, %v2383
  %v2388 = vld [vmem:[%s9] sm:$0xf]
  %v2389 = vld [vmem:[%s9 + $0x4] sm:$0xf]
  %v2390 = vld [vmem:[%s9 + $0x8] sm:$0xf]
  %v2391 = vld [vmem:[%s9 + $0xc] sm:$0xf]
  %v2396 = vunpack.c.l.b16 %v2388
  %v2397 = vunpack.c.l.b16 %v2389
  %v2398 = vunpack.c.l.b16 %v2390
  %v2399 = vunpack.c.l.b16 %v2391
  %v2400 = vpack.c.b16 %v2397, %v2396
  %v2401 = vpack.c.b16 %v2399, %v2398
  %v2403 = vsel %vm1812, %v2400, 0
  %v2406 = vsel %vm1812, %v2401, 0
  %2408 = vmatprep.subr.bf16.mxu0 0
  %2409 = vmatpush1.bf16.msra.mxu0 0
  %2410 = vmatprep.subr.bf16.mxu0 0
  %2411 = vmatpush1.bf16.msra.mxu0 0
  %2412 = vmatprep.subr.bf16.mxu0 0
  %2413 = vmatpush1.bf16.msra.mxu0 0
  %2414 = vmatprep.subr.bf16.mxu0 0
  %2415 = vmatpush1.bf16.msra.mxu0 0
  %2416 = vmatprep.subr.bf16.mxu0 0
  %2417 = vmatpush1.bf16.msra.mxu0 0
  %2418 = vmatprep.subr.bf16.mxu0 0
  %2419 = vmatpush1.bf16.msra.mxu0 %v2387
  %2420 = vmatprep.subr.bf16.mxu0 0
  %2421 = vmatpush1.bf16.msra.mxu0 %v2386
  %2422 = vmatprep.subr.bf16.mxu0 0
  %2423 = vmatpush1.bf16.msra.mxu0 %v2385
  %2424 = vmatprep.subr.bf16.mxu0 0
  %2425 = vmatpush2.bf16.msra.mxu0 0
  %2426 = vmatprep.subr.bf16.mxu0 0
  %2427 = vmatpush2.bf16.msra.mxu0 0
  %2428 = vmatprep.subr.bf16.mxu0 0
  %2429 = vmatpush2.bf16.msra.mxu0 0
  %2430 = vmatprep.subr.bf16.mxu0 0
  %2431 = vmatpush2.bf16.msra.mxu0 0
  %2432 = vmatprep.subr.bf16.mxu0 0
  %2433 = vmatpush2.bf16.msra.mxu0 0
  %2434 = vmatprep.subr.bf16.mxu0 0
  %2435 = vmatpush2.bf16.msra.mxu0 0
  %2436 = vmatprep.subr.bf16.mxu0 0
  %2437 = vmatpush2.bf16.msra.mxu0 0
  %2438 = vmatprep.subr.bf16.mxu0 0
  %2439 = vmatpush2.bf16.msra.mxu0 0
  %2440 = vmatprep.mubr.bf16.mxu0 0
  %2441 = vmatmul.mubr.bf16.gmra.mxu0 %v2403
  %v2442 = vpop.f32.mrf.mxu0
  %v2443 = vadd.f32 0.0, %v2442
  %v2444 = vpop.f32.mrf.mxu0
  %v2445 = vpop.f32.mrf.mxu0
  %v2446 = vadd.f32 0.0, %v2445
  %v2447 = vpop.f32.mrf.mxu0
  %2448 = vmatprep.mubr.bf16.mxu0 0
  %2449 = vmatmul.mubr.bf16.gmra.mxu0 %v2406
  %v2450 = vpop.f32.mrf.mxu0
  %v2451 = vadd.f32 0.0, %v2450
  %v2452 = vpop.f32.mrf.mxu0
  %v2453 = vpop.f32.mrf.mxu0
  %v2454 = vadd.f32 0.0, %v2453
  %v2455 = vpop.f32.mrf.mxu0
  %2456 = vdwg.mxu0
  %v2457 = vpack.c.bf16 %v2446, %v2443
  %v2458 = vpack.c.bf16 %v2454, %v2451
  %v2459 = vld [vmem:[%s10] sm:$0xf]
  %v2460 = vld [vmem:[%s10 + $0x4] sm:$0xf]
  %v2461 = vld [vmem:[%s10 + $0x8] sm:$0xf]
  %v2462 = vld [vmem:[%s10 + $0xc] sm:$0xf]
  %v2463 = vld [vmem:[%s10 + $0x10] sm:$0xf]
  %v2464 = vld [vmem:[%s10 + $0x14] sm:$0xf]
  %v2465 = vld [vmem:[%s10 + $0x18] sm:$0xf]
  %v2466 = vld [vmem:[%s10 + $0x1c] sm:$0xf]
  %v2467 = vld [vmem:[%s10 + $0x20] sm:$0xf]
  %v2468 = vld [vmem:[%s10 + $0x24] sm:$0xf]
  %v2469 = vld [vmem:[%s10 + $0x28] sm:$0xf]
  %v2470 = vld [vmem:[%s10 + $0x2c] sm:$0xf]
  %v2471 = vld [vmem:[%s10 + $0x30] sm:$0xf]
  %v2472 = vld [vmem:[%s10 + $0x34] sm:$0xf]
  %v2473 = vld [vmem:[%s10 + $0x38] sm:$0xf]
  %v2474 = vld [vmem:[%s10 + $0x3c] sm:$0xf]
  %s2475 = scalar_lea.vmem %s9, 16
  %v2476 = vld [vmem:[%s2475] sm:$0xf]
  %v2477 = vld [vmem:[%s2475 + $0x4] sm:$0xf]
  %v2478 = vld [vmem:[%s2475 + $0x8] sm:$0xf]
  %v2479 = vld [vmem:[%s2475 + $0xc] sm:$0xf]
  %v2484 = vunpack.c.l.b16 %v2476
  %v2485 = vunpack.c.l.b16 %v2477
  %v2486 = vunpack.c.l.b16 %v2478
  %v2487 = vunpack.c.l.b16 %v2479
  %v2488 = vpack.c.b16 %v2485, %v2484
  %v2489 = vpack.c.b16 %v2487, %v2486
  %v2491 = vsel %vm1812, %v2488, 0
  %v2494 = vsel %vm1812, %v2489, 0
  %2496 = vmatprep.subr.bf16.mxu0 0
  %2497 = vmatpush1.bf16.msra.mxu0 0
  %2498 = vmatprep.subr.bf16.mxu0 0
  %2499 = vmatpush1.bf16.msra.mxu0 0
  %2500 = vmatprep.subr.bf16.mxu0 0
  %2501 = vmatpush1.bf16.msra.mxu0 0
  %2502 = vmatprep.subr.bf16.mxu0 0
  %2503 = vmatpush1.bf16.msra.mxu0 0
  %2504 = vmatprep.subr.bf16.mxu0 0
  %2505 = vmatpush1.bf16.msra.mxu0 0
  %2506 = vmatprep.subr.bf16.mxu0 0
  %2507 = vmatpush1.bf16.msra.mxu0 %v2387
  %2508 = vmatprep.subr.bf16.mxu0 0
  %2509 = vmatpush1.bf16.msra.mxu0 %v2386
  %2510 = vmatprep.subr.bf16.mxu0 0
  %2511 = vmatpush1.bf16.msra.mxu0 %v2385
  %2512 = vmatprep.subr.bf16.mxu0 0
  %2513 = vmatpush2.bf16.msra.mxu0 0
  %2514 = vmatprep.subr.bf16.mxu0 0
  %2515 = vmatpush2.bf16.msra.mxu0 0
  %2516 = vmatprep.subr.bf16.mxu0 0
  %2517 = vmatpush2.bf16.msra.mxu0 0
  %2518 = vmatprep.subr.bf16.mxu0 0
  %2519 = vmatpush2.bf16.msra.mxu0 0
  %2520 = vmatprep.subr.bf16.mxu0 0
  %2521 = vmatpush2.bf16.msra.mxu0 0
  %2522 = vmatprep.subr.bf16.mxu0 0
  %2523 = vmatpush2.bf16.msra.mxu0 0
  %2524 = vmatprep.subr.bf16.mxu0 0
  %2525 = vmatpush2.bf16.msra.mxu0 0
  %2526 = vmatprep.subr.bf16.mxu0 0
  %2527 = vmatpush2.bf16.msra.mxu0 0
  %2528 = vmatprep.mubr.bf16.mxu0 0
  %2529 = vmatmul.mubr.bf16.gmra.mxu0 %v2491
  %v2530 = vpop.f32.mrf.mxu0
  %v2531 = vadd.f32 0.0, %v2530
  %v2532 = vpop.f32.mrf.mxu0
  %v2533 = vpop.f32.mrf.mxu0
  %v2534 = vadd.f32 0.0, %v2533
  %v2535 = vpop.f32.mrf.mxu0
  %2536 = vmatprep.mubr.bf16.mxu0 0
  %2537 = vmatmul.mubr.bf16.gmra.mxu0 %v2494
  %v2538 = vpop.f32.mrf.mxu0
  %v2539 = vadd.f32 0.0, %v2538
  %v2540 = vpop.f32.mrf.mxu0
  %v2541 = vpop.f32.mrf.mxu0
  %v2542 = vadd.f32 0.0, %v2541
  %v2543 = vpop.f32.mrf.mxu0
  %2544 = vdwg.mxu0
  %v2545 = vpack.c.bf16 %v2534, %v2531
  %v2546 = vpack.c.bf16 %v2542, %v2539
  %s2547 = scalar_lea.vmem %s10, 64
  %v2548 = vld [vmem:[%s2547] sm:$0xf]
  %v2549 = vld [vmem:[%s2547 + $0x4] sm:$0xf]
  %v2550 = vld [vmem:[%s2547 + $0x8] sm:$0xf]
  %v2551 = vld [vmem:[%s2547 + $0xc] sm:$0xf]
  %v2552 = vld [vmem:[%s2547 + $0x10] sm:$0xf]
  %v2553 = vld [vmem:[%s2547 + $0x14] sm:$0xf]
  %v2554 = vld [vmem:[%s2547 + $0x18] sm:$0xf]
  %v2555 = vld [vmem:[%s2547 + $0x1c] sm:$0xf]
  %v2556 = vld [vmem:[%s2547 + $0x20] sm:$0xf]
  %v2557 = vld [vmem:[%s2547 + $0x24] sm:$0xf]
  %v2558 = vld [vmem:[%s2547 + $0x28] sm:$0xf]
  %v2559 = vld [vmem:[%s2547 + $0x2c] sm:$0xf]
  %v2560 = vld [vmem:[%s2547 + $0x30] sm:$0xf]
  %v2561 = vld [vmem:[%s2547 + $0x34] sm:$0xf]
  %v2562 = vld [vmem:[%s2547 + $0x38] sm:$0xf]
  %v2563 = vld [vmem:[%s2547 + $0x3c] sm:$0xf]
  %v2580 = vunpack.c.l.b16 %v2548
  %v2581 = vunpack.c.l.b16 %v2549
  %v2582 = vunpack.c.l.b16 %v2550
  %v2583 = vunpack.c.l.b16 %v2551
  %v2584 = vunpack.c.l.b16 %v2552
  %v2585 = vunpack.c.l.b16 %v2553
  %v2586 = vunpack.c.l.b16 %v2554
  %v2587 = vunpack.c.l.b16 %v2555
  %v2588 = vunpack.c.l.b16 %v2556
  %v2589 = vunpack.c.l.b16 %v2557
  %v2590 = vunpack.c.l.b16 %v2558
  %v2591 = vunpack.c.l.b16 %v2559
  %v2592 = vunpack.c.l.b16 %v2560
  %v2593 = vunpack.c.l.b16 %v2561
  %v2594 = vunpack.c.l.b16 %v2562
  %v2595 = vunpack.c.l.b16 %v2563
  %v2596 = vpack.c.b16 %v2581, %v2580
  %v2597 = vpack.c.b16 %v2583, %v2582
  %v2598 = vpack.c.b16 %v2585, %v2584
  %v2599 = vpack.c.b16 %v2587, %v2586
  %v2600 = vpack.c.b16 %v2589, %v2588
  %v2601 = vpack.c.b16 %v2591, %v2590
  %v2602 = vpack.c.b16 %v2593, %v2592
  %v2603 = vpack.c.b16 %v2595, %v2594
  %2612 = vmatprep.subr.bf16.mxu0 0
  %2613 = vmatpush1.bf16.msra.mxu0 %v2603
  %2614 = vmatprep.subr.bf16.mxu0 0
  %2615 = vmatpush1.bf16.msra.mxu0 %v2602
  %2616 = vmatprep.subr.bf16.mxu0 0
  %2617 = vmatpush1.bf16.msra.mxu0 %v2601
  %2618 = vmatprep.subr.bf16.mxu0 0
  %2619 = vmatpush1.bf16.msra.mxu0 %v2600
  %2620 = vmatprep.subr.bf16.mxu0 0
  %2621 = vmatpush1.bf16.msra.mxu0 %v2599
  %2622 = vmatprep.subr.bf16.mxu0 0
  %2623 = vmatpush1.bf16.msra.mxu0 %v2598
  %2624 = vmatprep.subr.bf16.mxu0 0
  %2625 = vmatpush1.bf16.msra.mxu0 %v2597
  %2626 = vmatprep.subr.bf16.mxu0 0
  %2627 = vmatpush1.bf16.msra.mxu0 %v2596
  %2628 = vmatprep.subr.bf16.mxu0 0
  %2629 = vmatpush2.bf16.msra.mxu0 0
  %2630 = vmatprep.subr.bf16.mxu0 0
  %2631 = vmatpush2.bf16.msra.mxu0 0
  %2632 = vmatprep.subr.bf16.mxu0 0
  %2633 = vmatpush2.bf16.msra.mxu0 0
  %2634 = vmatprep.subr.bf16.mxu0 0
  %2635 = vmatpush2.bf16.msra.mxu0 0
  %2636 = vmatprep.subr.bf16.mxu0 0
  %2637 = vmatpush2.bf16.msra.mxu0 0
  %2638 = vmatprep.subr.bf16.mxu0 0
  %2639 = vmatpush2.bf16.msra.mxu0 0
  %2640 = vmatprep.subr.bf16.mxu0 0
  %2641 = vmatpush2.bf16.msra.mxu0 0
  %2642 = vmatprep.subr.bf16.mxu0 0
  %2643 = vmatpush2.bf16.msra.mxu0 0
  %2644 = vmatprep.mubr.bf16.mxu0 0
  %2645 = vmatmul.mubr.bf16.gmra.mxu0 %v2545
  %v2646 = vpop.f32.mrf.mxu0
  %v2647 = vadd.f32 0.0, %v2646
  %v2648 = vpop.f32.mrf.mxu0
  %v2649 = vpop.f32.mrf.mxu0
  %v2650 = vadd.f32 0.0, %v2649
  %v2651 = vpop.f32.mrf.mxu0
  %2652 = vmatprep.mubr.bf16.mxu0 0
  %2653 = vmatmul.mubr.bf16.gmra.mxu0 %v2546
  %v2654 = vpop.f32.mrf.mxu0
  %v2655 = vadd.f32 0.0, %v2654
  %v2656 = vpop.f32.mrf.mxu0
  %v2657 = vpop.f32.mrf.mxu0
  %v2658 = vadd.f32 0.0, %v2657
  %v2659 = vpop.f32.mrf.mxu0
  %2660 = vdwg.mxu0
  %v2677 = vunpack.c.l.b16 %v2459
  %v2678 = vunpack.c.l.b16 %v2460
  %v2679 = vunpack.c.l.b16 %v2461
  %v2680 = vunpack.c.l.b16 %v2462
  %v2681 = vunpack.c.l.b16 %v2463
  %v2682 = vunpack.c.l.b16 %v2464
  %v2683 = vunpack.c.l.b16 %v2465
  %v2684 = vunpack.c.l.b16 %v2466
  %v2685 = vunpack.c.l.b16 %v2467
  %v2686 = vunpack.c.l.b16 %v2468
  %v2687 = vunpack.c.l.b16 %v2469
  %v2688 = vunpack.c.l.b16 %v2470
  %v2689 = vunpack.c.l.b16 %v2471
  %v2690 = vunpack.c.l.b16 %v2472
  %v2691 = vunpack.c.l.b16 %v2473
  %v2692 = vunpack.c.l.b16 %v2474
  %v2693 = vpack.c.b16 %v2678, %v2677
  %v2694 = vpack.c.b16 %v2680, %v2679
  %v2695 = vpack.c.b16 %v2682, %v2681
  %v2696 = vpack.c.b16 %v2684, %v2683
  %v2697 = vpack.c.b16 %v2686, %v2685
  %v2698 = vpack.c.b16 %v2688, %v2687
  %v2699 = vpack.c.b16 %v2690, %v2689
  %v2700 = vpack.c.b16 %v2692, %v2691
  %2709 = vmatprep.subr.bf16.mxu0 0
  %2710 = vmatpush1.bf16.msra.mxu0 %v2700
  %2711 = vmatprep.subr.bf16.mxu0 0
  %2712 = vmatpush1.bf16.msra.mxu0 %v2699
  %2713 = vmatprep.subr.bf16.mxu0 0
  %2714 = vmatpush1.bf16.msra.mxu0 %v2698
  %2715 = vmatprep.subr.bf16.mxu0 0
  %2716 = vmatpush1.bf16.msra.mxu0 %v2697
  %2717 = vmatprep.subr.bf16.mxu0 0
  %2718 = vmatpush1.bf16.msra.mxu0 %v2696
  %2719 = vmatprep.subr.bf16.mxu0 0
  %2720 = vmatpush1.bf16.msra.mxu0 %v2695
  %2721 = vmatprep.subr.bf16.mxu0 0
  %2722 = vmatpush1.bf16.msra.mxu0 %v2694
  %2723 = vmatprep.subr.bf16.mxu0 0
  %2724 = vmatpush1.bf16.msra.mxu0 %v2693
  %2725 = vmatprep.subr.bf16.mxu0 0
  %2726 = vmatpush2.bf16.msra.mxu0 0
  %2727 = vmatprep.subr.bf16.mxu0 0
  %2728 = vmatpush2.bf16.msra.mxu0 0
  %2729 = vmatprep.subr.bf16.mxu0 0
  %2730 = vmatpush2.bf16.msra.mxu0 0
  %2731 = vmatprep.subr.bf16.mxu0 0
  %2732 = vmatpush2.bf16.msra.mxu0 0
  %2733 = vmatprep.subr.bf16.mxu0 0
  %2734 = vmatpush2.bf16.msra.mxu0 0
  %2735 = vmatprep.subr.bf16.mxu0 0
  %2736 = vmatpush2.bf16.msra.mxu0 0
  %2737 = vmatprep.subr.bf16.mxu0 0
  %2738 = vmatpush2.bf16.msra.mxu0 0
  %2739 = vmatprep.subr.bf16.mxu0 0
  %2740 = vmatpush2.bf16.msra.mxu0 0
  %2741 = vmatprep.mubr.bf16.mxu0 0
  %2742 = vmatmul.mubr.bf16.gmra.mxu0 %v2457
  %v2743 = vpop.f32.mrf.mxu0
  %v2744 = vadd.f32 %v2647, %v2743
  %v2745 = vpop.f32.mrf.mxu0
  %v2746 = vpop.f32.mrf.mxu0
  %v2747 = vadd.f32 %v2650, %v2746
  %v2748 = vpop.f32.mrf.mxu0
  %2749 = vmatprep.mubr.bf16.mxu0 0
  %2750 = vmatmul.mubr.bf16.gmra.mxu0 %v2458
  %v2751 = vpop.f32.mrf.mxu0
  %v2752 = vadd.f32 %v2655, %v2751
  %v2753 = vpop.f32.mrf.mxu0
  %v2754 = vpop.f32.mrf.mxu0
  %v2755 = vadd.f32 %v2658, %v2754
  %v2756 = vpop.f32.mrf.mxu0
  %2757 = vdwg.mxu0
  %s2758 = scalar_lea.vmem %s9, 32
  %v2759 = vld [vmem:[%s2758] sm:$0xf]
  %v2760 = vld [vmem:[%s2758 + $0x4] sm:$0xf]
  %v2761 = vld [vmem:[%s2758 + $0x8] sm:$0xf]
  %v2762 = vld [vmem:[%s2758 + $0xc] sm:$0xf]
  %v2767 = vunpack.c.l.b16 %v2759
  %v2768 = vunpack.c.l.b16 %v2760
  %v2769 = vunpack.c.l.b16 %v2761
  %v2770 = vunpack.c.l.b16 %v2762
  %v2771 = vpack.c.b16 %v2768, %v2767
  %v2772 = vpack.c.b16 %v2770, %v2769
  %v2774 = vsel %vm1812, %v2771, 0
  %v2777 = vsel %vm1812, %v2772, 0
  %2779 = vmatprep.subr.bf16.mxu0 0
  %2780 = vmatpush1.bf16.msra.mxu0 0
  %2781 = vmatprep.subr.bf16.mxu0 0
  %2782 = vmatpush1.bf16.msra.mxu0 0
  %2783 = vmatprep.subr.bf16.mxu0 0
  %2784 = vmatpush1.bf16.msra.mxu0 0
  %2785 = vmatprep.subr.bf16.mxu0 0
  %2786 = vmatpush1.bf16.msra.mxu0 0
  %2787 = vmatprep.subr.bf16.mxu0 0
  %2788 = vmatpush1.bf16.msra.mxu0 0
  %2789 = vmatprep.subr.bf16.mxu0 0
  %2790 = vmatpush1.bf16.msra.mxu0 %v2387
  %2791 = vmatprep.subr.bf16.mxu0 0
  %2792 = vmatpush1.bf16.msra.mxu0 %v2386
  %2793 = vmatprep.subr.bf16.mxu0 0
  %2794 = vmatpush1.bf16.msra.mxu0 %v2385
  %2795 = vmatprep.subr.bf16.mxu0 0
  %2796 = vmatpush2.bf16.msra.mxu0 0
  %2797 = vmatprep.subr.bf16.mxu0 0
  %2798 = vmatpush2.bf16.msra.mxu0 0
  %2799 = vmatprep.subr.bf16.mxu0 0
  %2800 = vmatpush2.bf16.msra.mxu0 0
  %2801 = vmatprep.subr.bf16.mxu0 0
  %2802 = vmatpush2.bf16.msra.mxu0 0
  %2803 = vmatprep.subr.bf16.mxu0 0
  %2804 = vmatpush2.bf16.msra.mxu0 0
  %2805 = vmatprep.subr.bf16.mxu0 0
  %2806 = vmatpush2.bf16.msra.mxu0 0
  %2807 = vmatprep.subr.bf16.mxu0 0
  %2808 = vmatpush2.bf16.msra.mxu0 0
  %2809 = vmatprep.subr.bf16.mxu0 0
  %2810 = vmatpush2.bf16.msra.mxu0 0
  %2811 = vmatprep.mubr.bf16.mxu0 0
  %2812 = vmatmul.mubr.bf16.gmra.mxu0 %v2774
  %v2813 = vpop.f32.mrf.mxu0
  %v2814 = vadd.f32 0.0, %v2813
  %v2815 = vpop.f32.mrf.mxu0
  %v2816 = vpop.f32.mrf.mxu0
  %v2817 = vadd.f32 0.0, %v2816
  %v2818 = vpop.f32.mrf.mxu0
  %2819 = vmatprep.mubr.bf16.mxu0 0
  %2820 = vmatmul.mubr.bf16.gmra.mxu0 %v2777
  %v2821 = vpop.f32.mrf.mxu0
  %v2822 = vadd.f32 0.0, %v2821
  %v2823 = vpop.f32.mrf.mxu0
  %v2824 = vpop.f32.mrf.mxu0
  %v2825 = vadd.f32 0.0, %v2824
  %v2826 = vpop.f32.mrf.mxu0
  %2827 = vdwg.mxu0
  %v2828 = vpack.c.bf16 %v2817, %v2814
  %v2829 = vpack.c.bf16 %v2825, %v2822
  %s2830 = scalar_lea.vmem %s10, 128
  %v2831 = vld [vmem:[%s2830] sm:$0xf]
  %v2832 = vld [vmem:[%s2830 + $0x4] sm:$0xf]
  %v2833 = vld [vmem:[%s2830 + $0x8] sm:$0xf]
  %v2834 = vld [vmem:[%s2830 + $0xc] sm:$0xf]
  %v2835 = vld [vmem:[%s2830 + $0x10] sm:$0xf]
  %v2836 = vld [vmem:[%s2830 + $0x14] sm:$0xf]
  %v2837 = vld [vmem:[%s2830 + $0x18] sm:$0xf]
  %v2838 = vld [vmem:[%s2830 + $0x1c] sm:$0xf]
  %v2839 = vld [vmem:[%s2830 + $0x20] sm:$0xf]
  %v2840 = vld [vmem:[%s2830 + $0x24] sm:$0xf]
  %v2841 = vld [vmem:[%s2830 + $0x28] sm:$0xf]
  %v2842 = vld [vmem:[%s2830 + $0x2c] sm:$0xf]
  %v2843 = vld [vmem:[%s2830 + $0x30] sm:$0xf]
  %v2844 = vld [vmem:[%s2830 + $0x34] sm:$0xf]
  %v2845 = vld [vmem:[%s2830 + $0x38] sm:$0xf]
  %v2846 = vld [vmem:[%s2830 + $0x3c] sm:$0xf]
  %v2863 = vunpack.c.l.b16 %v2831
  %v2864 = vunpack.c.l.b16 %v2832
  %v2865 = vunpack.c.l.b16 %v2833
  %v2866 = vunpack.c.l.b16 %v2834
  %v2867 = vunpack.c.l.b16 %v2835
  %v2868 = vunpack.c.l.b16 %v2836
  %v2869 = vunpack.c.l.b16 %v2837
  %v2870 = vunpack.c.l.b16 %v2838
  %v2871 = vunpack.c.l.b16 %v2839
  %v2872 = vunpack.c.l.b16 %v2840
  %v2873 = vunpack.c.l.b16 %v2841
  %v2874 = vunpack.c.l.b16 %v2842
  %v2875 = vunpack.c.l.b16 %v2843
  %v2876 = vunpack.c.l.b16 %v2844
  %v2877 = vunpack.c.l.b16 %v2845
  %v2878 = vunpack.c.l.b16 %v2846
  %v2879 = vpack.c.b16 %v2864, %v2863
  %v2880 = vpack.c.b16 %v2866, %v2865
  %v2881 = vpack.c.b16 %v2868, %v2867
  %v2882 = vpack.c.b16 %v2870, %v2869
  %v2883 = vpack.c.b16 %v2872, %v2871
  %v2884 = vpack.c.b16 %v2874, %v2873
  %v2885 = vpack.c.b16 %v2876, %v2875
  %v2886 = vpack.c.b16 %v2878, %v2877
  %2895 = vmatprep.subr.bf16.mxu0 0
  %2896 = vmatpush1.bf16.msra.mxu0 %v2886
  %2897 = vmatprep.subr.bf16.mxu0 0
  %2898 = vmatpush1.bf16.msra.mxu0 %v2885
  %2899 = vmatprep.subr.bf16.mxu0 0
  %2900 = vmatpush1.bf16.msra.mxu0 %v2884
  %2901 = vmatprep.subr.bf16.mxu0 0
  %2902 = vmatpush1.bf16.msra.mxu0 %v2883
  %2903 = vmatprep.subr.bf16.mxu0 0
  %2904 = vmatpush1.bf16.msra.mxu0 %v2882
  %2905 = vmatprep.subr.bf16.mxu0 0
  %2906 = vmatpush1.bf16.msra.mxu0 %v2881
  %2907 = vmatprep.subr.bf16.mxu0 0
  %2908 = vmatpush1.bf16.msra.mxu0 %v2880
  %2909 = vmatprep.subr.bf16.mxu0 0
  %2910 = vmatpush1.bf16.msra.mxu0 %v2879
  %2911 = vmatprep.subr.bf16.mxu0 0
  %2912 = vmatpush2.bf16.msra.mxu0 0
  %2913 = vmatprep.subr.bf16.mxu0 0
  %2914 = vmatpush2.bf16.msra.mxu0 0
  %2915 = vmatprep.subr.bf16.mxu0 0
  %2916 = vmatpush2.bf16.msra.mxu0 0
  %2917 = vmatprep.subr.bf16.mxu0 0
  %2918 = vmatpush2.bf16.msra.mxu0 0
  %2919 = vmatprep.subr.bf16.mxu0 0
  %2920 = vmatpush2.bf16.msra.mxu0 0
  %2921 = vmatprep.subr.bf16.mxu0 0
  %2922 = vmatpush2.bf16.msra.mxu0 0
  %2923 = vmatprep.subr.bf16.mxu0 0
  %2924 = vmatpush2.bf16.msra.mxu0 0
  %2925 = vmatprep.subr.bf16.mxu0 0
  %2926 = vmatpush2.bf16.msra.mxu0 0
  %2927 = vmatprep.mubr.bf16.mxu0 0
  %2928 = vmatmul.mubr.bf16.gmra.mxu0 %v2828
  %v2929 = vpop.f32.mrf.mxu0
  %v2930 = vadd.f32 0.0, %v2929
  %v2931 = vpop.f32.mrf.mxu0
  %v2932 = vpop.f32.mrf.mxu0
  %v2933 = vadd.f32 0.0, %v2932
  %v2934 = vpop.f32.mrf.mxu0
  %2935 = vmatprep.mubr.bf16.mxu0 0
  %2936 = vmatmul.mubr.bf16.gmra.mxu0 %v2829
  %v2937 = vpop.f32.mrf.mxu0
  %v2938 = vadd.f32 0.0, %v2937
  %v2939 = vpop.f32.mrf.mxu0
  %v2940 = vpop.f32.mrf.mxu0
  %v2941 = vadd.f32 0.0, %v2940
  %v2942 = vpop.f32.mrf.mxu0
  %2943 = vdwg.mxu0
  %v2944 = vadd.f32 %v2744, %v2930
  %v2945 = vadd.f32 %v2747, %v2933
  %v2946 = vadd.f32 %v2752, %v2938
  %v2947 = vadd.f32 %v2755, %v2941
  %v2948 = vld [vmem:[%s11] sm:$0x1]
  %v2950 = vlaneseq
  %v2951 = vshrl.u32 %v2950, 7
  %v2952 = vsub.s32 0, %v2951
  %v2953 = vrot.slane %v2948, %v2952
  %v2955 = vadd.f32 %v2944, %v2953
  %v2956 = vadd.f32 %v2945, %v2953
  %v2957 = vadd.f32 %v2946, %v2953
  %v2958 = vadd.f32 %v2947, %v2953
  %v2959 = vmax.f32 %v2955, 0.0
  %v2960 = vmax.f32 %v2956, 0.0
  %v2961 = vmax.f32 %v2957, 0.0
  %v2962 = vmax.f32 %v2958, 0.0
  %v2963 = vmax.f32 %v2959, %v2961
  %v2964 = vmax.f32 %v2960, %v2962
  %2965 = vrot.lane.b32.xlu0 %v2963, 64
  %v2966 = vpop.permute.xlu0 %2965
  %2967 = vrot.lane.b32.xlu0 %v2964, 64
  %v2968 = vpop.permute.xlu0 %2967
  %v2969 = vmax.f32 %v2963, %v2966
  %v2970 = vmax.f32 %v2964, %v2968
  %v2971 = vpack.c.bf16 %v2970, %v2969
  %v2972 = vld [vmem:[%s12] sm:$0x7]
  %vm2973 = vcmask 130048
  %v2975 = vsel %vm2973, %v2972, 0
  %2977 = vmatprep.subr.bf16.mxu0 0
  %2978 = vmatpush1.bf16.msra.mxu0 0
  %2979 = vmatprep.subr.bf16.mxu0 0
  %2980 = vmatpush1.bf16.msra.mxu0 0
  %2981 = vmatprep.subr.bf16.mxu0 0
  %2982 = vmatpush1.bf16.msra.mxu0 0
  %2983 = vmatprep.subr.bf16.mxu0 0
  %2984 = vmatpush1.bf16.msra.mxu0 0
  %2985 = vmatprep.subr.bf16.mxu0 0
  %2986 = vmatpush1.bf16.msra.mxu0 0
  %2987 = vmatprep.subr.bf16.mxu0 0
  %2988 = vmatpush1.bf16.msra.mxu0 0
  %2989 = vmatprep.subr.bf16.mxu0 0
  %2990 = vmatpush1.bf16.msra.mxu0 0
  %2991 = vmatprep.subr.bf16.mxu0 0
  %2992 = vmatpush1.bf16.msra.mxu0 %v2971
  %2993 = vmatprep.subr.bf16.mxu0 0
  %2994 = vmatpush2.bf16.msra.mxu0 0
  %2995 = vmatprep.subr.bf16.mxu0 0
  %2996 = vmatpush2.bf16.msra.mxu0 0
  %2997 = vmatprep.subr.bf16.mxu0 0
  %2998 = vmatpush2.bf16.msra.mxu0 0
  %2999 = vmatprep.subr.bf16.mxu0 0
  %3000 = vmatpush2.bf16.msra.mxu0 0
  %3001 = vmatprep.subr.bf16.mxu0 0
  %3002 = vmatpush2.bf16.msra.mxu0 0
  %3003 = vmatprep.subr.bf16.mxu0 0
  %3004 = vmatpush2.bf16.msra.mxu0 0
  %3005 = vmatprep.subr.bf16.mxu0 0
  %3006 = vmatpush2.bf16.msra.mxu0 0
  %3007 = vmatprep.subr.bf16.mxu0 0
  %3008 = vmatpush2.bf16.msra.mxu0 0
  %3009 = vmatprep.mubr.bf16.mxu0 0
  %3010 = vmatmul.mubr.bf16.gmra.mxu0 %v2975
  %v3011 = vpop.f32.mrf.mxu0
  %v3012 = vadd.f32 0.0, %v3011
  %v3013 = vpop.f32.mrf.mxu0
  %v3014 = vpop.f32.mrf.mxu0
  %v3015 = vpop.f32.mrf.mxu0
  %3016 = vdwg.mxu0
  %v3017 = vpack.c.bf16 %v3012, %v3012
  %v3018 = vld [vmem:[%s13] sm:$0xff]
  %v3019 = vld [vmem:[%s13 + $0x8] sm:$0xff]
  %v3020 = vld [vmem:[%s13 + $0x10] sm:$0xff]
  %v3021 = vld [vmem:[%s13 + $0x18] sm:$0xff]
  %v3022 = vld [vmem:[%s13 + $0x20] sm:$0xff]
  %v3023 = vld [vmem:[%s13 + $0x28] sm:$0xff]
  %v3024 = vld [vmem:[%s13 + $0x30] sm:$0xff]
  %v3025 = vld [vmem:[%s13 + $0x38] sm:$0xff]
  %v3026 = vld [vmem:[%s13 + $0x40] sm:$0xff]
  %v3027 = vld [vmem:[%s13 + $0x48] sm:$0xff]
  %v3028 = vld [vmem:[%s13 + $0x50] sm:$0xff]
  %v3029 = vld [vmem:[%s13 + $0x58] sm:$0xff]
  %v3030 = vld [vmem:[%s13 + $0x60] sm:$0xff]
  %v3031 = vld [vmem:[%s13 + $0x68] sm:$0xff]
  %v3032 = vld [vmem:[%s13 + $0x70] sm:$0xff]
  %v3033 = vld [vmem:[%s13 + $0x78] sm:$0xff]
  %s3034 = scalar_lea.vmem %s12, 4
  %v3035 = vld [vmem:[%s3034] sm:$0x7]
  %v3037 = vsel %vm2973, %v3035, 0
  %3039 = vmatprep.subr.bf16.mxu0 0
  %3040 = vmatpush1.bf16.msra.mxu0 0
  %3041 = vmatprep.subr.bf16.mxu0 0
  %3042 = vmatpush1.bf16.msra.mxu0 0
  %3043 = vmatprep.subr.bf16.mxu0 0
  %3044 = vmatpush1.bf16.msra.mxu0 0
  %3045 = vmatprep.subr.bf16.mxu0 0
  %3046 = vmatpush1.bf16.msra.mxu0 0
  %3047 = vmatprep.subr.bf16.mxu0 0
  %3048 = vmatpush1.bf16.msra.mxu0 0
  %3049 = vmatprep.subr.bf16.mxu0 0
  %3050 = vmatpush1.bf16.msra.mxu0 0
  %3051 = vmatprep.subr.bf16.mxu0 0
  %3052 = vmatpush1.bf16.msra.mxu0 0
  %3053 = vmatprep.subr.bf16.mxu0 0
  %3054 = vmatpush1.bf16.msra.mxu0 %v2971
  %3055 = vmatprep.subr.bf16.mxu0 0
  %3056 = vmatpush2.bf16.msra.mxu0 0
  %3057 = vmatprep.subr.bf16.mxu0 0
  %3058 = vmatpush2.bf16.msra.mxu0 0
  %3059 = vmatprep.subr.bf16.mxu0 0
  %3060 = vmatpush2.bf16.msra.mxu0 0
  %3061 = vmatprep.subr.bf16.mxu0 0
  %3062 = vmatpush2.bf16.msra.mxu0 0
  %3063 = vmatprep.subr.bf16.mxu0 0
  %3064 = vmatpush2.bf16.msra.mxu0 0
  %3065 = vmatprep.subr.bf16.mxu0 0
  %3066 = vmatpush2.bf16.msra.mxu0 0
  %3067 = vmatprep.subr.bf16.mxu0 0
  %3068 = vmatpush2.bf16.msra.mxu0 0
  %3069 = vmatprep.subr.bf16.mxu0 0
  %3070 = vmatpush2.bf16.msra.mxu0 0
  %3071 = vmatprep.mubr.bf16.mxu0 0
  %3072 = vmatmul.mubr.bf16.gmra.mxu0 %v3037
  %v3073 = vpop.f32.mrf.mxu0
  %v3074 = vadd.f32 0.0, %v3073
  %v3075 = vpop.f32.mrf.mxu0
  %v3076 = vpop.f32.mrf.mxu0
  %v3077 = vpop.f32.mrf.mxu0
  %3078 = vdwg.mxu0
  %v3079 = vpack.c.bf16 %v3074, %v3074
  %s3080 = scalar_lea.vmem %s13, 128
  %v3081 = vld [vmem:[%s3080] sm:$0xff]
  %v3082 = vld [vmem:[%s3080 + $0x8] sm:$0xff]
  %v3083 = vld [vmem:[%s3080 + $0x10] sm:$0xff]
  %v3084 = vld [vmem:[%s3080 + $0x18] sm:$0xff]
  %v3085 = vld [vmem:[%s3080 + $0x20] sm:$0xff]
  %v3086 = vld [vmem:[%s3080 + $0x28] sm:$0xff]
  %v3087 = vld [vmem:[%s3080 + $0x30] sm:$0xff]
  %v3088 = vld [vmem:[%s3080 + $0x38] sm:$0xff]
  %v3089 = vld [vmem:[%s3080 + $0x40] sm:$0xff]
  %v3090 = vld [vmem:[%s3080 + $0x48] sm:$0xff]
  %v3091 = vld [vmem:[%s3080 + $0x50] sm:$0xff]
  %v3092 = vld [vmem:[%s3080 + $0x58] sm:$0xff]
  %v3093 = vld [vmem:[%s3080 + $0x60] sm:$0xff]
  %v3094 = vld [vmem:[%s3080 + $0x68] sm:$0xff]
  %v3095 = vld [vmem:[%s3080 + $0x70] sm:$0xff]
  %v3096 = vld [vmem:[%s3080 + $0x78] sm:$0xff]
  %v3113 = vunpack.c.l.b16 %v3081
  %v3114 = vunpack.c.h.b16 %v3081
  %v3115 = vunpack.c.l.b16 %v3082
  %v3116 = vunpack.c.h.b16 %v3082
  %v3117 = vunpack.c.l.b16 %v3083
  %v3118 = vunpack.c.h.b16 %v3083
  %v3119 = vunpack.c.l.b16 %v3084
  %v3120 = vunpack.c.h.b16 %v3084
  %v3121 = vunpack.c.l.b16 %v3085
  %v3122 = vunpack.c.h.b16 %v3085
  %v3123 = vunpack.c.l.b16 %v3086
  %v3124 = vunpack.c.h.b16 %v3086
  %v3125 = vunpack.c.l.b16 %v3087
  %v3126 = vunpack.c.h.b16 %v3087
  %v3127 = vunpack.c.l.b16 %v3088
  %v3128 = vunpack.c.h.b16 %v3088
  %v3129 = vunpack.c.l.b16 %v3089
  %v3130 = vunpack.c.h.b16 %v3089
  %v3131 = vunpack.c.l.b16 %v3090
  %v3132 = vunpack.c.h.b16 %v3090
  %v3133 = vunpack.c.l.b16 %v3091
  %v3134 = vunpack.c.h.b16 %v3091
  %v3135 = vunpack.c.l.b16 %v3092
  %v3136 = vunpack.c.h.b16 %v3092
  %v3137 = vunpack.c.l.b16 %v3093
  %v3138 = vunpack.c.h.b16 %v3093
  %v3139 = vunpack.c.l.b16 %v3094
  %v3140 = vunpack.c.h.b16 %v3094
  %v3141 = vunpack.c.l.b16 %v3095
  %v3142 = vunpack.c.h.b16 %v3095
  %v3143 = vunpack.c.l.b16 %v3096
  %v3144 = vunpack.c.h.b16 %v3096
  %v3145 = vpack.c.b16 %v3115, %v3113
  %v3146 = vpack.c.b16 %v3116, %v3114
  %v3147 = vpack.c.b16 %v3119, %v3117
  %v3148 = vpack.c.b16 %v3120, %v3118
  %v3149 = vpack.c.b16 %v3123, %v3121
  %v3150 = vpack.c.b16 %v3124, %v3122
  %v3151 = vpack.c.b16 %v3127, %v3125
  %v3152 = vpack.c.b16 %v3128, %v3126
  %v3153 = vpack.c.b16 %v3131, %v3129
  %v3154 = vpack.c.b16 %v3132, %v3130
  %v3155 = vpack.c.b16 %v3135, %v3133
  %v3156 = vpack.c.b16 %v3136, %v3134
  %v3157 = vpack.c.b16 %v3139, %v3137
  %v3158 = vpack.c.b16 %v3140, %v3138
  %v3159 = vpack.c.b16 %v3143, %v3141
  %v3160 = vpack.c.b16 %v3144, %v3142
  %3177 = vmatprep.subr.bf16.mxu0 %v3160
  %3178 = vmatpush1.bf16.msra.mxu0 %v3159
  %3179 = vmatprep.subr.bf16.mxu0 %v3158
  %3180 = vmatpush1.bf16.msra.mxu0 %v3157
  %3181 = vmatprep.subr.bf16.mxu0 %v3156
  %3182 = vmatpush1.bf16.msra.mxu0 %v3155
  %3183 = vmatprep.subr.bf16.mxu0 %v3154
  %3184 = vmatpush1.bf16.msra.mxu0 %v3153
  %3185 = vmatprep.subr.bf16.mxu0 %v3152
  %3186 = vmatpush1.bf16.msra.mxu0 %v3151
  %3187 = vmatprep.subr.bf16.mxu0 %v3150
  %3188 = vmatpush1.bf16.msra.mxu0 %v3149
  %3189 = vmatprep.subr.bf16.mxu0 %v3148
  %3190 = vmatpush1.bf16.msra.mxu0 %v3147
  %3191 = vmatprep.subr.bf16.mxu0 %v3146
  %3192 = vmatpush1.bf16.msra.mxu0 %v3145
  %3193 = vmatprep.subr.bf16.mxu0 0
  %3194 = vmatpush2.bf16.msra.mxu0 0
  %3195 = vmatprep.subr.bf16.mxu0 0
  %3196 = vmatpush2.bf16.msra.mxu0 0
  %3197 = vmatprep.subr.bf16.mxu0 0
  %3198 = vmatpush2.bf16.msra.mxu0 0
  %3199 = vmatprep.subr.bf16.mxu0 0
  %3200 = vmatpush2.bf16.msra.mxu0 0
  %3201 = vmatprep.subr.bf16.mxu0 0
  %3202 = vmatpush2.bf16.msra.mxu0 0
  %3203 = vmatprep.subr.bf16.mxu0 0
  %3204 = vmatpush2.bf16.msra.mxu0 0
  %3205 = vmatprep.subr.bf16.mxu0 0
  %3206 = vmatpush2.bf16.msra.mxu0 0
  %3207 = vmatprep.subr.bf16.mxu0 0
  %3208 = vmatpush2.bf16.msra.mxu0 0
  %3209 = vmatprep.mubr.bf16.mxu0 0
  %3210 = vmatmul.mubr.bf16.gmra.mxu0 %v3079
  %v3211 = vpop.f32.mrf.mxu0
  %v3212 = vadd.f32 0.0, %v3211
  %v3213 = vpop.f32.mrf.mxu0
  %v3214 = vadd.f32 0.0, %v3213
  %v3215 = vpop.f32.mrf.mxu0
  %v3216 = vpop.f32.mrf.mxu0
  %3217 = vdwg.mxu0
  %v3234 = vunpack.c.l.b16 %v3018
  %v3235 = vunpack.c.h.b16 %v3018
  %v3236 = vunpack.c.l.b16 %v3019
  %v3237 = vunpack.c.h.b16 %v3019
  %v3238 = vunpack.c.l.b16 %v3020
  %v3239 = vunpack.c.h.b16 %v3020
  %v3240 = vunpack.c.l.b16 %v3021
  %v3241 = vunpack.c.h.b16 %v3021
  %v3242 = vunpack.c.l.b16 %v3022
  %v3243 = vunpack.c.h.b16 %v3022
  %v3244 = vunpack.c.l.b16 %v3023
  %v3245 = vunpack.c.h.b16 %v3023
  %v3246 = vunpack.c.l.b16 %v3024
  %v3247 = vunpack.c.h.b16 %v3024
  %v3248 = vunpack.c.l.b16 %v3025
  %v3249 = vunpack.c.h.b16 %v3025
  %v3250 = vunpack.c.l.b16 %v3026
  %v3251 = vunpack.c.h.b16 %v3026
  %v3252 = vunpack.c.l.b16 %v3027
  %v3253 = vunpack.c.h.b16 %v3027
  %v3254 = vunpack.c.l.b16 %v3028
  %v3255 = vunpack.c.h.b16 %v3028
  %v3256 = vunpack.c.l.b16 %v3029
  %v3257 = vunpack.c.h.b16 %v3029
  %v3258 = vunpack.c.l.b16 %v3030
  %v3259 = vunpack.c.h.b16 %v3030
  %v3260 = vunpack.c.l.b16 %v3031
  %v3261 = vunpack.c.h.b16 %v3031
  %v3262 = vunpack.c.l.b16 %v3032
  %v3263 = vunpack.c.h.b16 %v3032
  %v3264 = vunpack.c.l.b16 %v3033
  %v3265 = vunpack.c.h.b16 %v3033
  %v3266 = vpack.c.b16 %v3236, %v3234
  %v3267 = vpack.c.b16 %v3237, %v3235
  %v3268 = vpack.c.b16 %v3240, %v3238
  %v3269 = vpack.c.b16 %v3241, %v3239
  %v3270 = vpack.c.b16 %v3244, %v3242
  %v3271 = vpack.c.b16 %v3245, %v3243
  %v3272 = vpack.c.b16 %v3248, %v3246
  %v3273 = vpack.c.b16 %v3249, %v3247
  %v3274 = vpack.c.b16 %v3252, %v3250
  %v3275 = vpack.c.b16 %v3253, %v3251
  %v3276 = vpack.c.b16 %v3256, %v3254
  %v3277 = vpack.c.b16 %v3257, %v3255
  %v3278 = vpack.c.b16 %v3260, %v3258
  %v3279 = vpack.c.b16 %v3261, %v3259
  %v3280 = vpack.c.b16 %v3264, %v3262
  %v3281 = vpack.c.b16 %v3265, %v3263
  %3298 = vmatprep.subr.bf16.mxu0 %v3281
  %3299 = vmatpush1.bf16.msra.mxu0 %v3280
  %3300 = vmatprep.subr.bf16.mxu0 %v3279
  %3301 = vmatpush1.bf16.msra.mxu0 %v3278
  %3302 = vmatprep.subr.bf16.mxu0 %v3277
  %3303 = vmatpush1.bf16.msra.mxu0 %v3276
  %3304 = vmatprep.subr.bf16.mxu0 %v3275
  %3305 = vmatpush1.bf16.msra.mxu0 %v3274
  %3306 = vmatprep.subr.bf16.mxu0 %v3273
  %3307 = vmatpush1.bf16.msra.mxu0 %v3272
  %3308 = vmatprep.subr.bf16.mxu0 %v3271
  %3309 = vmatpush1.bf16.msra.mxu0 %v3270
  %3310 = vmatprep.subr.bf16.mxu0 %v3269
  %3311 = vmatpush1.bf16.msra.mxu0 %v3268
  %3312 = vmatprep.subr.bf16.mxu0 %v3267
  %3313 = vmatpush1.bf16.msra.mxu0 %v3266
  %3314 = vmatprep.subr.bf16.mxu0 0
  %3315 = vmatpush2.bf16.msra.mxu0 0
  %3316 = vmatprep.subr.bf16.mxu0 0
  %3317 = vmatpush2.bf16.msra.mxu0 0
  %3318 = vmatprep.subr.bf16.mxu0 0
  %3319 = vmatpush2.bf16.msra.mxu0 0
  %3320 = vmatprep.subr.bf16.mxu0 0
  %3321 = vmatpush2.bf16.msra.mxu0 0
  %3322 = vmatprep.subr.bf16.mxu0 0
  %3323 = vmatpush2.bf16.msra.mxu0 0
  %3324 = vmatprep.subr.bf16.mxu0 0
  %3325 = vmatpush2.bf16.msra.mxu0 0
  %3326 = vmatprep.subr.bf16.mxu0 0
  %3327 = vmatpush2.bf16.msra.mxu0 0
  %3328 = vmatprep.subr.bf16.mxu0 0
  %3329 = vmatpush2.bf16.msra.mxu0 0
  %3330 = vmatprep.mubr.bf16.mxu0 0
  %3331 = vmatmul.mubr.bf16.gmra.mxu0 %v3017
  %v3332 = vpop.f32.mrf.mxu0
  %v3333 = vadd.f32 %v3212, %v3332
  %v3334 = vpop.f32.mrf.mxu0
  %v3335 = vadd.f32 %v3214, %v3334
  %v3336 = vpop.f32.mrf.mxu0
  %v3337 = vpop.f32.mrf.mxu0
  %3338 = vdwg.mxu0
  %v3339 = vld [vmem:[%s15] sm:$0x7]
  %vm3340 = vcmask 48128
  %v3342 = vsel %vm3340, %v3339, 0
  %vm3344 = vcmask 1045504
  %v3346 = vsel %vm3344, %v3333, 0
  %v3349 = vsel %vm3344, %v3335, 0
  %3351 = vmatprep.subr.mxu0 0.0
  %3352 = vmatpush1.msra.mxu0 0.0
  %3353 = vmatprep.subr.mxu0 0.0
  %3354 = vmatpush1.msra.mxu0 0.0
  %3355 = vmatprep.subr.mxu0 0.0
  %3356 = vmatpush1.msra.mxu0 0.0
  %3357 = vmatprep.subr.mxu0 0.0
  %3358 = vmatpush1.msra.mxu0 0.0
  %3359 = vmatprep.subr.mxu0 0.0
  %3360 = vmatpush1.msra.mxu0 0.0
  %3361 = vmatprep.subr.mxu0 0.0
  %3362 = vmatpush1.msra.mxu0 0.0
  %3363 = vmatprep.subr.mxu0 0.0
  %3364 = vmatpush1.msra.mxu0 0.0
  %3365 = vmatprep.subr.mxu0 0.0
  %3366 = vmatpush1.msra.mxu0 0.0
  %3367 = vmatprep.subr.mxu0 0.0
  %3368 = vmatpush1.msra.mxu0 0.0
  %3369 = vmatprep.subr.mxu0 0.0
  %3370 = vmatpush1.msra.mxu0 0.0
  %3371 = vmatprep.subr.mxu0 0.0
  %3372 = vmatpush1.msra.mxu0 0.0
  %3373 = vmatprep.subr.mxu0 0.0
  %3374 = vmatpush1.msra.mxu0 0.0
  %3375 = vmatprep.subr.mxu0 0.0
  %3376 = vmatpush1.msra.mxu0 0.0
  %3377 = vmatprep.subr.mxu0 0.0
  %3378 = vmatpush1.msra.mxu0 0.0
  %3379 = vmatprep.subr.mxu0 0.0
  %3380 = vmatpush1.msra.mxu0 0.0
  %3381 = vmatprep.subr.mxu0 %v3349
  %3382 = vmatpush1.msra.mxu0 %v3346
  %3383 = vmatprep.subr.mxu0 0.0
  %3384 = vmatpush2.msra.mxu0 0.0
  %3385 = vmatprep.subr.mxu0 0.0
  %3386 = vmatpush2.msra.mxu0 0.0
  %3387 = vmatprep.subr.mxu0 0.0
  %3388 = vmatpush2.msra.mxu0 0.0
  %3389 = vmatprep.subr.mxu0 0.0
  %3390 = vmatpush2.msra.mxu0 0.0
  %3391 = vmatprep.subr.mxu0 0.0
  %3392 = vmatpush2.msra.mxu0 0.0
  %3393 = vmatprep.subr.mxu0 0.0
  %3394 = vmatpush2.msra.mxu0 0.0
  %3395 = vmatprep.subr.mxu0 0.0
  %3396 = vmatpush2.msra.mxu0 0.0
  %3397 = vmatprep.subr.mxu0 0.0
  %3398 = vmatpush2.msra.mxu0 0.0
  %3399 = vmatprep.subr.mxu0 0.0
  %3400 = vmatpush2.msra.mxu0 0.0
  %3401 = vmatprep.subr.mxu0 0.0
  %3402 = vmatpush2.msra.mxu0 0.0
  %3403 = vmatprep.subr.mxu0 0.0
  %3404 = vmatpush2.msra.mxu0 0.0
  %3405 = vmatprep.subr.mxu0 0.0
  %3406 = vmatpush2.msra.mxu0 0.0
  %3407 = vmatprep.subr.mxu0 0.0
  %3408 = vmatpush2.msra.mxu0 0.0
  %3409 = vmatprep.subr.mxu0 0.0
  %3410 = vmatpush2.msra.mxu0 0.0
  %3411 = vmatprep.subr.mxu0 0.0
  %3412 = vmatpush2.msra.mxu0 0.0
  %3413 = vmatprep.subr.mxu0 0.0
  %3414 = vmatpush2.msra.mxu0 0.0
  %3415 = vmatprep.mubr.f32.mxu0 0.0
  %3416 = vmatmul.mubr.f32.gmra.mxu0 %v3342
  %v3417 = vpop.f32.mrf.mxu0
  %v3418 = vadd.f32 0.0, %v3417
  %v3419 = vpop.f32.mrf.mxu0
  %v3420 = vadd.f32 0.0, %v3419
  %3421 = vdwg.mxu0
  %v3422 = vrcp.pop 2.0
  %v3423 = vmul.f32 %v3418, %v3422
  %v3424 = vmul.f32 %v3420, %v3422
  %v3425 = vmul.f32 %v3333, %v3333
  %v3426 = vmul.f32 %v3335, %v3335
  %v3428 = vsel %vm3344, %v3425, 0
  %v3431 = vsel %vm3344, %v3426, 0
  %3433 = vmatprep.subr.mxu0 0.0
  %3434 = vmatpush1.msra.mxu0 0.0
  %3435 = vmatprep.subr.mxu0 0.0
  %3436 = vmatpush1.msra.mxu0 0.0
  %3437 = vmatprep.subr.mxu0 0.0
  %3438 = vmatpush1.msra.mxu0 0.0
  %3439 = vmatprep.subr.mxu0 0.0
  %3440 = vmatpush1.msra.mxu0 0.0
  %3441 = vmatprep.subr.mxu0 0.0
  %3442 = vmatpush1.msra.mxu0 0.0
  %3443 = vmatprep.subr.mxu0 0.0
  %3444 = vmatpush1.msra.mxu0 0.0
  %3445 = vmatprep.subr.mxu0 0.0
  %3446 = vmatpush1.msra.mxu0 0.0
  %3447 = vmatprep.subr.mxu0 0.0
  %3448 = vmatpush1.msra.mxu0 0.0
  %3449 = vmatprep.subr.mxu0 0.0
  %3450 = vmatpush1.msra.mxu0 0.0
  %3451 = vmatprep.subr.mxu0 0.0
  %3452 = vmatpush1.msra.mxu0 0.0
  %3453 = vmatprep.subr.mxu0 0.0
  %3454 = vmatpush1.msra.mxu0 0.0
  %3455 = vmatprep.subr.mxu0 0.0
  %3456 = vmatpush1.msra.mxu0 0.0
  %3457 = vmatprep.subr.mxu0 0.0
  %3458 = vmatpush1.msra.mxu0 0.0
  %3459 = vmatprep.subr.mxu0 0.0
  %3460 = vmatpush1.msra.mxu0 0.0
  %3461 = vmatprep.subr.mxu0 0.0
  %3462 = vmatpush1.msra.mxu0 0.0
  %3463 = vmatprep.subr.mxu0 %v3431
  %3464 = vmatpush1.msra.mxu0 %v3428
  %3465 = vmatprep.subr.mxu0 0.0
  %3466 = vmatpush2.msra.mxu0 0.0
  %3467 = vmatprep.subr.mxu0 0.0
  %3468 = vmatpush2.msra.mxu0 0.0
  %3469 = vmatprep.subr.mxu0 0.0
  %3470 = vmatpush2.msra.mxu0 0.0
  %3471 = vmatprep.subr.mxu0 0.0
  %3472 = vmatpush2.msra.mxu0 0.0
  %3473 = vmatprep.subr.mxu0 0.0
  %3474 = vmatpush2.msra.mxu0 0.0
  %3475 = vmatprep.subr.mxu0 0.0
  %3476 = vmatpush2.msra.mxu0 0.0
  %3477 = vmatprep.subr.mxu0 0.0
  %3478 = vmatpush2.msra.mxu0 0.0
  %3479 = vmatprep.subr.mxu0 0.0
  %3480 = vmatpush2.msra.mxu0 0.0
  %3481 = vmatprep.subr.mxu0 0.0
  %3482 = vmatpush2.msra.mxu0 0.0
  %3483 = vmatprep.subr.mxu0 0.0
  %3484 = vmatpush2.msra.mxu0 0.0
  %3485 = vmatprep.subr.mxu0 0.0
  %3486 = vmatpush2.msra.mxu0 0.0
  %3487 = vmatprep.subr.mxu0 0.0
  %3488 = vmatpush2.msra.mxu0 0.0
  %3489 = vmatprep.subr.mxu0 0.0
  %3490 = vmatpush2.msra.mxu0 0.0
  %3491 = vmatprep.subr.mxu0 0.0
  %3492 = vmatpush2.msra.mxu0 0.0
  %3493 = vmatprep.subr.mxu0 0.0
  %3494 = vmatpush2.msra.mxu0 0.0
  %3495 = vmatprep.subr.mxu0 0.0
  %3496 = vmatpush2.msra.mxu0 0.0
  %3497 = vmatprep.mubr.f32.mxu0 0.0
  %3498 = vmatmul.mubr.f32.gmra.mxu0 %v3342
  %v3499 = vpop.f32.mrf.mxu0
  %v3500 = vadd.f32 0.0, %v3499
  %v3501 = vpop.f32.mrf.mxu0
  %v3502 = vadd.f32 0.0, %v3501
  %3503 = vdwg.mxu0
  %v3504 = vmul.f32 %v3500, %v3422
  %v3505 = vmul.f32 %v3502, %v3422
  %v3506 = vld [vmem:[%s14] sm:$0x3f]
  %v3508 = vsel %vm2127, %v3506, 0
  %v3511 = vsel %vm2146, %v3423, 0
  %v3514 = vsel %vm2146, %v3424, 0
  %3516 = vmatprep.subr.mxu0 0.0
  %3517 = vmatpush1.msra.mxu0 0.0
  %3518 = vmatprep.subr.mxu0 0.0
  %3519 = vmatpush1.msra.mxu0 0.0
  %3520 = vmatprep.subr.mxu0 0.0
  %3521 = vmatpush1.msra.mxu0 0.0
  %3522 = vmatprep.subr.mxu0 0.0
  %3523 = vmatpush1.msra.mxu0 0.0
  %3524 = vmatprep.subr.mxu0 0.0
  %3525 = vmatpush1.msra.mxu0 0.0
  %3526 = vmatprep.subr.mxu0 0.0
  %3527 = vmatpush1.msra.mxu0 0.0
  %3528 = vmatprep.subr.mxu0 0.0
  %3529 = vmatpush1.msra.mxu0 0.0
  %3530 = vmatprep.subr.mxu0 0.0
  %3531 = vmatpush1.msra.mxu0 0.0
  %3532 = vmatprep.subr.mxu0 0.0
  %3533 = vmatpush1.msra.mxu0 0.0
  %3534 = vmatprep.subr.mxu0 0.0
  %3535 = vmatpush1.msra.mxu0 0.0
  %3536 = vmatprep.subr.mxu0 0.0
  %3537 = vmatpush1.msra.mxu0 0.0
  %3538 = vmatprep.subr.mxu0 0.0
  %3539 = vmatpush1.msra.mxu0 0.0
  %3540 = vmatprep.subr.mxu0 0.0
  %3541 = vmatpush1.msra.mxu0 0.0
  %3542 = vmatprep.subr.mxu0 0.0
  %3543 = vmatpush1.msra.mxu0 0.0
  %3544 = vmatprep.subr.mxu0 0.0
  %3545 = vmatpush1.msra.mxu0 0.0
  %3546 = vmatprep.subr.mxu0 %v3514
  %3547 = vmatpush1.msra.mxu0 %v3511
  %3548 = vmatprep.subr.mxu0 0.0
  %3549 = vmatpush2.msra.mxu0 0.0
  %3550 = vmatprep.subr.mxu0 0.0
  %3551 = vmatpush2.msra.mxu0 0.0
  %3552 = vmatprep.subr.mxu0 0.0
  %3553 = vmatpush2.msra.mxu0 0.0
  %3554 = vmatprep.subr.mxu0 0.0
  %3555 = vmatpush2.msra.mxu0 0.0
  %3556 = vmatprep.subr.mxu0 0.0
  %3557 = vmatpush2.msra.mxu0 0.0
  %3558 = vmatprep.subr.mxu0 0.0
  %3559 = vmatpush2.msra.mxu0 0.0
  %3560 = vmatprep.subr.mxu0 0.0
  %3561 = vmatpush2.msra.mxu0 0.0
  %3562 = vmatprep.subr.mxu0 0.0
  %3563 = vmatpush2.msra.mxu0 0.0
  %3564 = vmatprep.subr.mxu0 0.0
  %3565 = vmatpush2.msra.mxu0 0.0
  %3566 = vmatprep.subr.mxu0 0.0
  %3567 = vmatpush2.msra.mxu0 0.0
  %3568 = vmatprep.subr.mxu0 0.0
  %3569 = vmatpush2.msra.mxu0 0.0
  %3570 = vmatprep.subr.mxu0 0.0
  %3571 = vmatpush2.msra.mxu0 0.0
  %3572 = vmatprep.subr.mxu0 0.0
  %3573 = vmatpush2.msra.mxu0 0.0
  %3574 = vmatprep.subr.mxu0 0.0
  %3575 = vmatpush2.msra.mxu0 0.0
  %3576 = vmatprep.subr.mxu0 0.0
  %3577 = vmatpush2.msra.mxu0 0.0
  %3578 = vmatprep.subr.mxu0 0.0
  %3579 = vmatpush2.msra.mxu0 0.0
  %3580 = vmatprep.mubr.f32.mxu0 0.0
  %3581 = vmatmul.mubr.f32.gmra.mxu0 %v3508
  %v3582 = vpop.f32.mrf.mxu0
  %v3583 = vadd.f32 0.0, %v3582
  %v3584 = vpop.f32.mrf.mxu0
  %v3585 = vadd.f32 0.0, %v3584
  %3586 = vdwg.mxu0
  %v3588 = vsel %vm2146, %v3504, 0
  %v3591 = vsel %vm2146, %v3505, 0
  %3593 = vmatprep.subr.mxu0 0.0
  %3594 = vmatpush1.msra.mxu0 0.0
  %3595 = vmatprep.subr.mxu0 0.0
  %3596 = vmatpush1.msra.mxu0 0.0
  %3597 = vmatprep.subr.mxu0 0.0
  %3598 = vmatpush1.msra.mxu0 0.0
  %3599 = vmatprep.subr.mxu0 0.0
  %3600 = vmatpush1.msra.mxu0 0.0
  %3601 = vmatprep.subr.mxu0 0.0
  %3602 = vmatpush1.msra.mxu0 0.0
  %3603 = vmatprep.subr.mxu0 0.0
  %3604 = vmatpush1.msra.mxu0 0.0
  %3605 = vmatprep.subr.mxu0 0.0
  %3606 = vmatpush1.msra.mxu0 0.0
  %3607 = vmatprep.subr.mxu0 0.0
  %3608 = vmatpush1.msra.mxu0 0.0
  %3609 = vmatprep.subr.mxu0 0.0
  %3610 = vmatpush1.msra.mxu0 0.0
  %3611 = vmatprep.subr.mxu0 0.0
  %3612 = vmatpush1.msra.mxu0 0.0
  %3613 = vmatprep.subr.mxu0 0.0
  %3614 = vmatpush1.msra.mxu0 0.0
  %3615 = vmatprep.subr.mxu0 0.0
  %3616 = vmatpush1.msra.mxu0 0.0
  %3617 = vmatprep.subr.mxu0 0.0
  %3618 = vmatpush1.msra.mxu0 0.0
  %3619 = vmatprep.subr.mxu0 0.0
  %3620 = vmatpush1.msra.mxu0 0.0
  %3621 = vmatprep.subr.mxu0 0.0
  %3622 = vmatpush1.msra.mxu0 0.0
  %3623 = vmatprep.subr.mxu0 %v3591
  %3624 = vmatpush1.msra.mxu0 %v3588
  %3625 = vmatprep.subr.mxu0 0.0
  %3626 = vmatpush2.msra.mxu0 0.0
  %3627 = vmatprep.subr.mxu0 0.0
  %3628 = vmatpush2.msra.mxu0 0.0
  %3629 = vmatprep.subr.mxu0 0.0
  %3630 = vmatpush2.msra.mxu0 0.0
  %3631 = vmatprep.subr.mxu0 0.0
  %3632 = vmatpush2.msra.mxu0 0.0
  %3633 = vmatprep.subr.mxu0 0.0
  %3634 = vmatpush2.msra.mxu0 0.0
  %3635 = vmatprep.subr.mxu0 0.0
  %3636 = vmatpush2.msra.mxu0 0.0
  %3637 = vmatprep.subr.mxu0 0.0
  %3638 = vmatpush2.msra.mxu0 0.0
  %3639 = vmatprep.subr.mxu0 0.0
  %3640 = vmatpush2.msra.mxu0 0.0
  %3641 = vmatprep.subr.mxu0 0.0
  %3642 = vmatpush2.msra.mxu0 0.0
  %3643 = vmatprep.subr.mxu0 0.0
  %3644 = vmatpush2.msra.mxu0 0.0
  %3645 = vmatprep.subr.mxu0 0.0
  %3646 = vmatpush2.msra.mxu0 0.0
  %3647 = vmatprep.subr.mxu0 0.0
  %3648 = vmatpush2.msra.mxu0 0.0
  %3649 = vmatprep.subr.mxu0 0.0
  %3650 = vmatpush2.msra.mxu0 0.0
  %3651 = vmatprep.subr.mxu0 0.0
  %3652 = vmatpush2.msra.mxu0 0.0
  %3653 = vmatprep.subr.mxu0 0.0
  %3654 = vmatpush2.msra.mxu0 0.0
  %3655 = vmatprep.subr.mxu0 0.0
  %3656 = vmatpush2.msra.mxu0 0.0
  %3657 = vmatprep.mubr.f32.mxu0 0.0
  %3658 = vmatmul.mubr.f32.gmra.mxu0 %v3508
  %v3659 = vpop.f32.mrf.mxu0
  %v3660 = vadd.f32 0.0, %v3659
  %v3661 = vpop.f32.mrf.mxu0
  %v3662 = vadd.f32 0.0, %v3661
  %3663 = vdwg.mxu0
  %v3664 = vsub.f32 %v3333, %v3583
  %v3665 = vsub.f32 %v3335, %v3585
  %v3666 = vmul.f32 %v3583, %v3583
  %v3667 = vmul.f32 %v3585, %v3585
  %v3668 = vsub.f32 %v3660, %v3666
  %v3669 = vsub.f32 %v3662, %v3667
  %v3670 = vadd.f32 %v3668, 1e-05
  %v3671 = vadd.f32 %v3669, 1e-05
  %v3672 = vrsqrt.pop %v3670
  %v3673 = vrsqrt.pop %v3671
  %v3674 = vmul.f32 %v3664, %v3672
  %v3675 = vmul.f32 %v3665, %v3673
  %v3676 = vmax.f32 %v3674, 0.0
  %v3677 = vmax.f32 %v3675, 0.0
  %v3678 = vpack.c.bf16 %v3676, %v3676
  %v3679 = vpack.c.bf16 %v3677, %v3677
  %v3680 = vld [vmem:[%s16] sm:$0xf]
  %v3681 = vld [vmem:[%s16 + $0x4] sm:$0xf]
  %v3682 = vld [vmem:[%s16 + $0x8] sm:$0xf]
  %v3683 = vld [vmem:[%s16 + $0xc] sm:$0xf]
  %v3684 = vld [vmem:[%s16 + $0x10] sm:$0xf]
  %v3685 = vld [vmem:[%s16 + $0x14] sm:$0xf]
  %v3686 = vld [vmem:[%s16 + $0x18] sm:$0xf]
  %v3687 = vld [vmem:[%s16 + $0x1c] sm:$0xf]
  %v3688 = vld [vmem:[%s16 + $0x20] sm:$0xf]
  %v3689 = vld [vmem:[%s16 + $0x24] sm:$0xf]
  %v3690 = vld [vmem:[%s16 + $0x28] sm:$0xf]
  %v3691 = vld [vmem:[%s16 + $0x2c] sm:$0xf]
  %v3692 = vld [vmem:[%s16 + $0x30] sm:$0xf]
  %v3693 = vld [vmem:[%s16 + $0x34] sm:$0xf]
  %v3694 = vld [vmem:[%s16 + $0x38] sm:$0xf]
  %v3695 = vld [vmem:[%s16 + $0x3c] sm:$0xf]
  %v3696 = vld [vmem:[%s16 + $0x40] sm:$0xf]
  %v3697 = vld [vmem:[%s16 + $0x44] sm:$0xf]
  %v3698 = vld [vmem:[%s16 + $0x48] sm:$0xf]
  %v3699 = vld [vmem:[%s16 + $0x4c] sm:$0xf]
  %v3700 = vld [vmem:[%s16 + $0x50] sm:$0xf]
  %v3701 = vld [vmem:[%s16 + $0x54] sm:$0xf]
  %v3702 = vld [vmem:[%s16 + $0x58] sm:$0xf]
  %v3703 = vld [vmem:[%s16 + $0x5c] sm:$0xf]
  %v3704 = vld [vmem:[%s16 + $0x60] sm:$0xf]
  %v3705 = vld [vmem:[%s16 + $0x64] sm:$0xf]
  %v3706 = vld [vmem:[%s16 + $0x68] sm:$0xf]
  %v3707 = vld [vmem:[%s16 + $0x6c] sm:$0xf]
  %v3708 = vld [vmem:[%s16 + $0x70] sm:$0xf]
  %v3709 = vld [vmem:[%s16 + $0x74] sm:$0xf]
  %v3710 = vld [vmem:[%s16 + $0x78] sm:$0xf]
  %v3711 = vld [vmem:[%s16 + $0x7c] sm:$0xf]
  %v3744 = vunpack.c.l.b16 %v3680
  %v3745 = vunpack.c.l.b16 %v3681
  %v3746 = vunpack.c.l.b16 %v3682
  %v3747 = vunpack.c.l.b16 %v3683
  %v3748 = vunpack.c.l.b16 %v3684
  %v3749 = vunpack.c.l.b16 %v3685
  %v3750 = vunpack.c.l.b16 %v3686
  %v3751 = vunpack.c.l.b16 %v3687
  %v3752 = vunpack.c.l.b16 %v3688
  %v3753 = vunpack.c.l.b16 %v3689
  %v3754 = vunpack.c.l.b16 %v3690
  %v3755 = vunpack.c.l.b16 %v3691
  %v3756 = vunpack.c.l.b16 %v3692
  %v3757 = vunpack.c.l.b16 %v3693
  %v3758 = vunpack.c.l.b16 %v3694
  %v3759 = vunpack.c.l.b16 %v3695
  %v3760 = vunpack.c.l.b16 %v3696
  %v3761 = vunpack.c.l.b16 %v3697
  %v3762 = vunpack.c.l.b16 %v3698
  %v3763 = vunpack.c.l.b16 %v3699
  %v3764 = vunpack.c.l.b16 %v3700
  %v3765 = vunpack.c.l.b16 %v3701
  %v3766 = vunpack.c.l.b16 %v3702
  %v3767 = vunpack.c.l.b16 %v3703
  %v3768 = vunpack.c.l.b16 %v3704
  %v3769 = vunpack.c.l.b16 %v3705
  %v3770 = vunpack.c.l.b16 %v3706
  %v3771 = vunpack.c.l.b16 %v3707
  %v3772 = vunpack.c.l.b16 %v3708
  %v3773 = vunpack.c.l.b16 %v3709
  %v3774 = vunpack.c.l.b16 %v3710
  %v3775 = vunpack.c.l.b16 %v3711
  %v3776 = vpack.c.b16 %v3745, %v3744
  %v3777 = vpack.c.b16 %v3747, %v3746
  %v3778 = vpack.c.b16 %v3749, %v3748
  %v3779 = vpack.c.b16 %v3751, %v3750
  %v3780 = vpack.c.b16 %v3753, %v3752
  %v3781 = vpack.c.b16 %v3755, %v3754
  %v3782 = vpack.c.b16 %v3757, %v3756
  %v3783 = vpack.c.b16 %v3759, %v3758
  %v3784 = vpack.c.b16 %v3761, %v3760
  %v3785 = vpack.c.b16 %v3763, %v3762
  %v3786 = vpack.c.b16 %v3765, %v3764
  %v3787 = vpack.c.b16 %v3767, %v3766
  %v3788 = vpack.c.b16 %v3769, %v3768
  %v3789 = vpack.c.b16 %v3771, %v3770
  %v3790 = vpack.c.b16 %v3773, %v3772
  %v3791 = vpack.c.b16 %v3775, %v3774
  %3808 = vmatprep.subr.bf16.mxu0 0
  %3809 = vmatpush1.bf16.msra.mxu0 %v3783
  %3810 = vmatprep.subr.bf16.mxu0 0
  %3811 = vmatpush1.bf16.msra.mxu0 %v3782
  %3812 = vmatprep.subr.bf16.mxu0 0
  %3813 = vmatpush1.bf16.msra.mxu0 %v3781
  %3814 = vmatprep.subr.bf16.mxu0 0
  %3815 = vmatpush1.bf16.msra.mxu0 %v3780
  %3816 = vmatprep.subr.bf16.mxu0 0
  %3817 = vmatpush1.bf16.msra.mxu0 %v3779
  %3818 = vmatprep.subr.bf16.mxu0 0
  %3819 = vmatpush1.bf16.msra.mxu0 %v3778
  %3820 = vmatprep.subr.bf16.mxu0 0
  %3821 = vmatpush1.bf16.msra.mxu0 %v3777
  %3822 = vmatprep.subr.bf16.mxu0 0
  %3823 = vmatpush1.bf16.msra.mxu0 %v3776
  %3824 = vmatprep.subr.bf16.mxu0 0
  %3825 = vmatpush2.bf16.msra.mxu0 %v3791
  %3826 = vmatprep.subr.bf16.mxu0 0
  %3827 = vmatpush2.bf16.msra.mxu0 %v3790
  %3828 = vmatprep.subr.bf16.mxu0 0
  %3829 = vmatpush2.bf16.msra.mxu0 %v3789
  %3830 = vmatprep.subr.bf16.mxu0 0
  %3831 = vmatpush2.bf16.msra.mxu0 %v3788
  %3832 = vmatprep.subr.bf16.mxu0 0
  %3833 = vmatpush2.bf16.msra.mxu0 %v3787
  %3834 = vmatprep.subr.bf16.mxu0 0
  %3835 = vmatpush2.bf16.msra.mxu0 %v3786
  %3836 = vmatprep.subr.bf16.mxu0 0
  %3837 = vmatpush2.bf16.msra.mxu0 %v3785
  %3838 = vmatprep.subr.bf16.mxu0 0
  %3839 = vmatpush2.bf16.msra.mxu0 %v3784
  %3840 = vmatprep.mubr.bf16.mxu0 %v3679
  %3841 = vmatmul.mubr.bf16.gmra.mxu0 %v3678
  %v3842 = vpop.f32.mrf.mxu0
  %v3843 = vadd.f32 0.0, %v3842
  %v3844 = vpop.f32.mrf.mxu0
  %v3845 = vpop.f32.mrf.mxu0
  %v3846 = vpop.f32.mrf.mxu0
  %3847 = vdwg.mxu0
  %v3849 = vsel %vm3344, %v3843, 0
  %3851 = vmatprep.subr.mxu0 0.0
  %3852 = vmatpush1.msra.mxu0 0.0
  %3853 = vmatprep.subr.mxu0 0.0
  %3854 = vmatpush1.msra.mxu0 0.0
  %3855 = vmatprep.subr.mxu0 0.0
  %3856 = vmatpush1.msra.mxu0 0.0
  %3857 = vmatprep.subr.mxu0 0.0
  %3858 = vmatpush1.msra.mxu0 0.0
  %3859 = vmatprep.subr.mxu0 0.0
  %3860 = vmatpush1.msra.mxu0 0.0
  %3861 = vmatprep.subr.mxu0 0.0
  %3862 = vmatpush1.msra.mxu0 0.0
  %3863 = vmatprep.subr.mxu0 0.0
  %3864 = vmatpush1.msra.mxu0 0.0
  %3865 = vmatprep.subr.mxu0 0.0
  %3866 = vmatpush1.msra.mxu0 0.0
  %3867 = vmatprep.subr.mxu0 0.0
  %3868 = vmatpush1.msra.mxu0 0.0
  %3869 = vmatprep.subr.mxu0 0.0
  %3870 = vmatpush1.msra.mxu0 0.0
  %3871 = vmatprep.subr.mxu0 0.0
  %3872 = vmatpush1.msra.mxu0 0.0
  %3873 = vmatprep.subr.mxu0 0.0
  %3874 = vmatpush1.msra.mxu0 0.0
  %3875 = vmatprep.subr.mxu0 0.0
  %3876 = vmatpush1.msra.mxu0 0.0
  %3877 = vmatprep.subr.mxu0 0.0
  %3878 = vmatpush1.msra.mxu0 0.0
  %3879 = vmatprep.subr.mxu0 0.0
  %3880 = vmatpush1.msra.mxu0 0.0
  %3881 = vmatprep.subr.mxu0 0.0
  %3882 = vmatpush1.msra.mxu0 %v3849
  %3883 = vmatprep.subr.mxu0 0.0
  %3884 = vmatpush2.msra.mxu0 0.0
  %3885 = vmatprep.subr.mxu0 0.0
  %3886 = vmatpush2.msra.mxu0 0.0
  %3887 = vmatprep.subr.mxu0 0.0
  %3888 = vmatpush2.msra.mxu0 0.0
  %3889 = vmatprep.subr.mxu0 0.0
  %3890 = vmatpush2.msra.mxu0 0.0
  %3891 = vmatprep.subr.mxu0 0.0
  %3892 = vmatpush2.msra.mxu0 0.0
  %3893 = vmatprep.subr.mxu0 0.0
  %3894 = vmatpush2.msra.mxu0 0.0
  %3895 = vmatprep.subr.mxu0 0.0
  %3896 = vmatpush2.msra.mxu0 0.0
  %3897 = vmatprep.subr.mxu0 0.0
  %3898 = vmatpush2.msra.mxu0 0.0
  %3899 = vmatprep.subr.mxu0 0.0
  %3900 = vmatpush2.msra.mxu0 0.0
  %3901 = vmatprep.subr.mxu0 0.0
  %3902 = vmatpush2.msra.mxu0 0.0
  %3903 = vmatprep.subr.mxu0 0.0
  %3904 = vmatpush2.msra.mxu0 0.0
  %3905 = vmatprep.subr.mxu0 0.0
  %3906 = vmatpush2.msra.mxu0 0.0
  %3907 = vmatprep.subr.mxu0 0.0
  %3908 = vmatpush2.msra.mxu0 0.0
  %3909 = vmatprep.subr.mxu0 0.0
  %3910 = vmatpush2.msra.mxu0 0.0
  %3911 = vmatprep.subr.mxu0 0.0
  %3912 = vmatpush2.msra.mxu0 0.0
  %3913 = vmatprep.subr.mxu0 0.0
  %3914 = vmatpush2.msra.mxu0 0.0
  %3915 = vmatprep.mubr.f32.mxu0 0.0
  %3916 = vmatmul.mubr.f32.gmra.mxu0 %v3342
  %v3917 = vpop.f32.mrf.mxu0
  %v3918 = vadd.f32 0.0, %v3917
  %v3919 = vpop.f32.mrf.mxu0
  %3920 = vdwg.mxu0
  %v3921 = vmul.f32 %v3918, %v3422
  %v3922 = vmul.f32 %v3843, %v3843
  %v3924 = vsel %vm3344, %v3922, 0
  %3926 = vmatprep.subr.mxu0 0.0
  %3927 = vmatpush1.msra.mxu0 0.0
  %3928 = vmatprep.subr.mxu0 0.0
  %3929 = vmatpush1.msra.mxu0 0.0
  %3930 = vmatprep.subr.mxu0 0.0
  %3931 = vmatpush1.msra.mxu0 0.0
  %3932 = vmatprep.subr.mxu0 0.0
  %3933 = vmatpush1.msra.mxu0 0.0
  %3934 = vmatprep.subr.mxu0 0.0
  %3935 = vmatpush1.msra.mxu0 0.0
  %3936 = vmatprep.subr.mxu0 0.0
  %3937 = vmatpush1.msra.mxu0 0.0
  %3938 = vmatprep.subr.mxu0 0.0
  %3939 = vmatpush1.msra.mxu0 0.0
  %3940 = vmatprep.subr.mxu0 0.0
  %3941 = vmatpush1.msra.mxu0 0.0
  %3942 = vmatprep.subr.mxu0 0.0
  %3943 = vmatpush1.msra.mxu0 0.0
  %3944 = vmatprep.subr.mxu0 0.0
  %3945 = vmatpush1.msra.mxu0 0.0
  %3946 = vmatprep.subr.mxu0 0.0
  %3947 = vmatpush1.msra.mxu0 0.0
  %3948 = vmatprep.subr.mxu0 0.0
  %3949 = vmatpush1.msra.mxu0 0.0
  %3950 = vmatprep.subr.mxu0 0.0
  %3951 = vmatpush1.msra.mxu0 0.0
  %3952 = vmatprep.subr.mxu0 0.0
  %3953 = vmatpush1.msra.mxu0 0.0
  %3954 = vmatprep.subr.mxu0 0.0
  %3955 = vmatpush1.msra.mxu0 0.0
  %3956 = vmatprep.subr.mxu0 0.0
  %3957 = vmatpush1.msra.mxu0 %v3924
  %3958 = vmatprep.subr.mxu0 0.0
  %3959 = vmatpush2.msra.mxu0 0.0
  %3960 = vmatprep.subr.mxu0 0.0
  %3961 = vmatpush2.msra.mxu0 0.0
  %3962 = vmatprep.subr.mxu0 0.0
  %3963 = vmatpush2.msra.mxu0 0.0
  %3964 = vmatprep.subr.mxu0 0.0
  %3965 = vmatpush2.msra.mxu0 0.0
  %3966 = vmatprep.subr.mxu0 0.0
  %3967 = vmatpush2.msra.mxu0 0.0
  %3968 = vmatprep.subr.mxu0 0.0
  %3969 = vmatpush2.msra.mxu0 0.0
  %3970 = vmatprep.subr.mxu0 0.0
  %3971 = vmatpush2.msra.mxu0 0.0
  %3972 = vmatprep.subr.mxu0 0.0
  %3973 = vmatpush2.msra.mxu0 0.0
  %3974 = vmatprep.subr.mxu0 0.0
  %3975 = vmatpush2.msra.mxu0 0.0
  %3976 = vmatprep.subr.mxu0 0.0
  %3977 = vmatpush2.msra.mxu0 0.0
  %3978 = vmatprep.subr.mxu0 0.0
  %3979 = vmatpush2.msra.mxu0 0.0
  %3980 = vmatprep.subr.mxu0 0.0
  %3981 = vmatpush2.msra.mxu0 0.0
  %3982 = vmatprep.subr.mxu0 0.0
  %3983 = vmatpush2.msra.mxu0 0.0
  %3984 = vmatprep.subr.mxu0 0.0
  %3985 = vmatpush2.msra.mxu0 0.0
  %3986 = vmatprep.subr.mxu0 0.0
  %3987 = vmatpush2.msra.mxu0 0.0
  %3988 = vmatprep.subr.mxu0 0.0
  %3989 = vmatpush2.msra.mxu0 0.0
  %3990 = vmatprep.mubr.f32.mxu0 0.0
  %3991 = vmatmul.mubr.f32.gmra.mxu0 %v3342
  %v3992 = vpop.f32.mrf.mxu0
  %v3993 = vadd.f32 0.0, %v3992
  %v3994 = vpop.f32.mrf.mxu0
  %3995 = vdwg.mxu0
  %v3996 = vmul.f32 %v3993, %v3422
  %v3998 = vsel %vm2146, %v3921, 0
  %4000 = vmatprep.subr.mxu0 0.0
  %4001 = vmatpush1.msra.mxu0 0.0
  %4002 = vmatprep.subr.mxu0 0.0
  %4003 = vmatpush1.msra.mxu0 0.0
  %4004 = vmatprep.subr.mxu0 0.0
  %4005 = vmatpush1.msra.mxu0 0.0
  %4006 = vmatprep.subr.mxu0 0.0
  %4007 = vmatpush1.msra.mxu0 0.0
  %4008 = vmatprep.subr.mxu0 0.0
  %4009 = vmatpush1.msra.mxu0 0.0
  %4010 = vmatprep.subr.mxu0 0.0
  %4011 = vmatpush1.msra.mxu0 0.0
  %4012 = vmatprep.subr.mxu0 0.0
  %4013 = vmatpush1.msra.mxu0 0.0
  %4014 = vmatprep.subr.mxu0 0.0
  %4015 = vmatpush1.msra.mxu0 0.0
  %4016 = vmatprep.subr.mxu0 0.0
  %4017 = vmatpush1.msra.mxu0 0.0
  %4018 = vmatprep.subr.mxu0 0.0
  %4019 = vmatpush1.msra.mxu0 0.0
  %4020 = vmatprep.subr.mxu0 0.0
  %4021 = vmatpush1.msra.mxu0 0.0
  %4022 = vmatprep.subr.mxu0 0.0
  %4023 = vmatpush1.msra.mxu0 0.0
  %4024 = vmatprep.subr.mxu0 0.0
  %4025 = vmatpush1.msra.mxu0 0.0
  %4026 = vmatprep.subr.mxu0 0.0
  %4027 = vmatpush1.msra.mxu0 0.0
  %4028 = vmatprep.subr.mxu0 0.0
  %4029 = vmatpush1.msra.mxu0 0.0
  %4030 = vmatprep.subr.mxu0 0.0
  %4031 = vmatpush1.msra.mxu0 %v3998
  %4032 = vmatprep.subr.mxu0 0.0
  %4033 = vmatpush2.msra.mxu0 0.0
  %4034 = vmatprep.subr.mxu0 0.0
  %4035 = vmatpush2.msra.mxu0 0.0
  %4036 = vmatprep.subr.mxu0 0.0
  %4037 = vmatpush2.msra.mxu0 0.0
  %4038 = vmatprep.subr.mxu0 0.0
  %4039 = vmatpush2.msra.mxu0 0.0
  %4040 = vmatprep.subr.mxu0 0.0
  %4041 = vmatpush2.msra.mxu0 0.0
  %4042 = vmatprep.subr.mxu0 0.0
  %4043 = vmatpush2.msra.mxu0 0.0
  %4044 = vmatprep.subr.mxu0 0.0
  %4045 = vmatpush2.msra.mxu0 0.0
  %4046 = vmatprep.subr.mxu0 0.0
  %4047 = vmatpush2.msra.mxu0 0.0
  %4048 = vmatprep.subr.mxu0 0.0
  %4049 = vmatpush2.msra.mxu0 0.0
  %4050 = vmatprep.subr.mxu0 0.0
  %4051 = vmatpush2.msra.mxu0 0.0
  %4052 = vmatprep.subr.mxu0 0.0
  %4053 = vmatpush2.msra.mxu0 0.0
  %4054 = vmatprep.subr.mxu0 0.0
  %4055 = vmatpush2.msra.mxu0 0.0
  %4056 = vmatprep.subr.mxu0 0.0
  %4057 = vmatpush2.msra.mxu0 0.0
  %4058 = vmatprep.subr.mxu0 0.0
  %4059 = vmatpush2.msra.mxu0 0.0
  %4060 = vmatprep.subr.mxu0 0.0
  %4061 = vmatpush2.msra.mxu0 0.0
  %4062 = vmatprep.subr.mxu0 0.0
  %4063 = vmatpush2.msra.mxu0 0.0
  %4064 = vmatprep.mubr.f32.mxu0 0.0
  %4065 = vmatmul.mubr.f32.gmra.mxu0 %v3508
  %v4066 = vpop.f32.mrf.mxu0
  %v4067 = vadd.f32 0.0, %v4066
  %v4068 = vpop.f32.mrf.mxu0
  %4069 = vdwg.mxu0
  %v4071 = vsel %vm2146, %v3996, 0
  %4073 = vmatprep.subr.mxu0 0.0
  %4074 = vmatpush1.msra.mxu0 0.0
  %4075 = vmatprep.subr.mxu0 0.0
  %4076 = vmatpush1.msra.mxu0 0.0
  %4077 = vmatprep.subr.mxu0 0.0
  %4078 = vmatpush1.msra.mxu0 0.0
  %4079 = vmatprep.subr.mxu0 0.0
  %4080 = vmatpush1.msra.mxu0 0.0
  %4081 = vmatprep.subr.mxu0 0.0
  %4082 = vmatpush1.msra.mxu0 0.0
  %4083 = vmatprep.subr.mxu0 0.0
  %4084 = vmatpush1.msra.mxu0 0.0
  %4085 = vmatprep.subr.mxu0 0.0
  %4086 = vmatpush1.msra.mxu0 0.0
  %4087 = vmatprep.subr.mxu0 0.0
  %4088 = vmatpush1.msra.mxu0 0.0
  %4089 = vmatprep.subr.mxu0 0.0
  %4090 = vmatpush1.msra.mxu0 0.0
  %4091 = vmatprep.subr.mxu0 0.0
  %4092 = vmatpush1.msra.mxu0 0.0
  %4093 = vmatprep.subr.mxu0 0.0
  %4094 = vmatpush1.msra.mxu0 0.0
  %4095 = vmatprep.subr.mxu0 0.0
  %4096 = vmatpush1.msra.mxu0 0.0
  %4097 = vmatprep.subr.mxu0 0.0
  %4098 = vmatpush1.msra.mxu0 0.0
  %4099 = vmatprep.subr.mxu0 0.0
  %4100 = vmatpush1.msra.mxu0 0.0
  %4101 = vmatprep.subr.mxu0 0.0
  %4102 = vmatpush1.msra.mxu0 0.0
  %4103 = vmatprep.subr.mxu0 0.0
  %4104 = vmatpush1.msra.mxu0 %v4071
  %4105 = vmatprep.subr.mxu0 0.0
  %4106 = vmatpush2.msra.mxu0 0.0
  %4107 = vmatprep.subr.mxu0 0.0
  %4108 = vmatpush2.msra.mxu0 0.0
  %4109 = vmatprep.subr.mxu0 0.0
  %4110 = vmatpush2.msra.mxu0 0.0
  %4111 = vmatprep.subr.mxu0 0.0
  %4112 = vmatpush2.msra.mxu0 0.0
  %4113 = vmatprep.subr.mxu0 0.0
  %4114 = vmatpush2.msra.mxu0 0.0
  %4115 = vmatprep.subr.mxu0 0.0
  %4116 = vmatpush2.msra.mxu0 0.0
  %4117 = vmatprep.subr.mxu0 0.0
  %4118 = vmatpush2.msra.mxu0 0.0
  %4119 = vmatprep.subr.mxu0 0.0
  %4120 = vmatpush2.msra.mxu0 0.0
  %4121 = vmatprep.subr.mxu0 0.0
  %4122 = vmatpush2.msra.mxu0 0.0
  %4123 = vmatprep.subr.mxu0 0.0
  %4124 = vmatpush2.msra.mxu0 0.0
  %4125 = vmatprep.subr.mxu0 0.0
  %4126 = vmatpush2.msra.mxu0 0.0
  %4127 = vmatprep.subr.mxu0 0.0
  %4128 = vmatpush2.msra.mxu0 0.0
  %4129 = vmatprep.subr.mxu0 0.0
  %4130 = vmatpush2.msra.mxu0 0.0
  %4131 = vmatprep.subr.mxu0 0.0
  %4132 = vmatpush2.msra.mxu0 0.0
  %4133 = vmatprep.subr.mxu0 0.0
  %4134 = vmatpush2.msra.mxu0 0.0
  %4135 = vmatprep.subr.mxu0 0.0
  %4136 = vmatpush2.msra.mxu0 0.0
  %4137 = vmatprep.mubr.f32.mxu0 0.0
  %4138 = vmatmul.mubr.f32.gmra.mxu0 %v3508
  %v4139 = vpop.f32.mrf.mxu0
  %v4140 = vadd.f32 0.0, %v4139
  %v4141 = vpop.f32.mrf.mxu0
  %4142 = vdwg.mxu0
  %v4143 = vsub.f32 %v3843, %v4067
  %v4144 = vmul.f32 %v4067, %v4067
  %v4145 = vsub.f32 %v4140, %v4144
  %v4146 = vadd.f32 %v4145, 1e-05
  %v4147 = vrsqrt.pop %v4146
  %v4148 = vmul.f32 %v4143, %v4147
  %v4149 = vmax.f32 %v4148, 0.0
  %v4150 = vpack.c.bf16 %v4149, %v4149
  %v4151 = vld [vmem:[%s17] sm:$0xf]
  %v4152 = vld [vmem:[%s17 + $0x4] sm:$0xf]
  %v4153 = vld [vmem:[%s17 + $0x8] sm:$0xf]
  %v4154 = vld [vmem:[%s17 + $0xc] sm:$0xf]
  %v4155 = vld [vmem:[%s17 + $0x10] sm:$0xf]
  %v4156 = vld [vmem:[%s17 + $0x14] sm:$0xf]
  %v4157 = vld [vmem:[%s17 + $0x18] sm:$0xf]
  %v4158 = vld [vmem:[%s17 + $0x1c] sm:$0xf]
  %v4159 = vld [vmem:[%s17 + $0x20] sm:$0xf]
  %v4160 = vld [vmem:[%s17 + $0x24] sm:$0xf]
  %v4161 = vld [vmem:[%s17 + $0x28] sm:$0xf]
  %v4162 = vld [vmem:[%s17 + $0x2c] sm:$0xf]
  %v4163 = vld [vmem:[%s17 + $0x30] sm:$0xf]
  %v4164 = vld [vmem:[%s17 + $0x34] sm:$0xf]
  %v4165 = vld [vmem:[%s17 + $0x38] sm:$0xf]
  %v4166 = vld [vmem:[%s17 + $0x3c] sm:$0xf]
  %v4167 = vld [vmem:[%s18] sm:$0x1]
  %v4169 = vlaneseq
  %v4170 = vshrl.u32 %v4169, 7
  %v4171 = vsub.s32 0, %v4170
  %v4172 = vrot.slane %v4167, %v4171
  %v4190 = vunpack.c.l.b16 %v4151
  %v4191 = vunpack.c.l.b16 %v4152
  %v4192 = vunpack.c.l.b16 %v4153
  %v4193 = vunpack.c.l.b16 %v4154
  %v4194 = vunpack.c.l.b16 %v4155
  %v4195 = vunpack.c.l.b16 %v4156
  %v4196 = vunpack.c.l.b16 %v4157
  %v4197 = vunpack.c.l.b16 %v4158
  %v4198 = vunpack.c.l.b16 %v4159
  %v4199 = vunpack.c.l.b16 %v4160
  %v4200 = vunpack.c.l.b16 %v4161
  %v4201 = vunpack.c.l.b16 %v4162
  %v4202 = vunpack.c.l.b16 %v4163
  %v4203 = vunpack.c.l.b16 %v4164
  %v4204 = vunpack.c.l.b16 %v4165
  %v4205 = vunpack.c.l.b16 %v4166
  %v4206 = vpack.c.b16 %v4191, %v4190
  %v4207 = vpack.c.b16 %v4193, %v4192
  %v4208 = vpack.c.b16 %v4195, %v4194
  %v4209 = vpack.c.b16 %v4197, %v4196
  %v4210 = vpack.c.b16 %v4199, %v4198
  %v4211 = vpack.c.b16 %v4201, %v4200
  %v4212 = vpack.c.b16 %v4203, %v4202
  %v4213 = vpack.c.b16 %v4205, %v4204
  %4222 = vmatprep.subr.bf16.mxu0 0
  %4223 = vmatpush1.bf16.msra.mxu0 %v4213
  %4224 = vmatprep.subr.bf16.mxu0 0
  %4225 = vmatpush1.bf16.msra.mxu0 %v4212
  %4226 = vmatprep.subr.bf16.mxu0 0
  %4227 = vmatpush1.bf16.msra.mxu0 %v4211
  %4228 = vmatprep.subr.bf16.mxu0 0
  %4229 = vmatpush1.bf16.msra.mxu0 %v4210
  %4230 = vmatprep.subr.bf16.mxu0 0
  %4231 = vmatpush1.bf16.msra.mxu0 %v4209
  %4232 = vmatprep.subr.bf16.mxu0 0
  %4233 = vmatpush1.bf16.msra.mxu0 %v4208
  %4234 = vmatprep.subr.bf16.mxu0 0
  %4235 = vmatpush1.bf16.msra.mxu0 %v4207
  %4236 = vmatprep.subr.bf16.mxu0 0
  %4237 = vmatpush1.bf16.msra.mxu0 %v4206
  %4238 = vmatprep.subr.bf16.mxu0 0
  %4239 = vmatpush2.bf16.msra.mxu0 0
  %4240 = vmatprep.subr.bf16.mxu0 0
  %4241 = vmatpush2.bf16.msra.mxu0 0
  %4242 = vmatprep.subr.bf16.mxu0 0
  %4243 = vmatpush2.bf16.msra.mxu0 0
  %4244 = vmatprep.subr.bf16.mxu0 0
  %4245 = vmatpush2.bf16.msra.mxu0 0
  %4246 = vmatprep.subr.bf16.mxu0 0
  %4247 = vmatpush2.bf16.msra.mxu0 0
  %4248 = vmatprep.subr.bf16.mxu0 0
  %4249 = vmatpush2.bf16.msra.mxu0 0
  %4250 = vmatprep.subr.bf16.mxu0 0
  %4251 = vmatpush2.bf16.msra.mxu0 0
  %4252 = vmatprep.subr.bf16.mxu0 0
  %4253 = vmatpush2.bf16.msra.mxu0 0
  %4254 = vmatprep.mubr.bf16.mxu0 0
  %4255 = vmatmul.mubr.bf16.gmra.mxu0 %v4150
  %v4256 = vpop.f32.mrf.mxu0
  %v4257 = vadd.f32 %v4172, %v4256
  %v4258 = vpop.f32.mrf.mxu0
  %v4259 = vpop.f32.mrf.mxu0
  %v4260 = vpop.f32.mrf.mxu0
  %4261 = vdwg.mxu0
  %4262 = vst [vmem:[%s19] sm:$0x3f] %v4257
  // Predicated region
  $region78: #{train_models_nce_forward.1} parent=0 // pred_check
    _
  $region79: #{train_models_nce_forward.1} parent=0 // pred_check_branch
    %4264 = sbr.rel (0) target = $region81
  $region80: #{train_models_nce_forward.1} parent=0 // pred_region
    _
  $region81: #{train_models_nce_forward.1} parent=0 // pred_fallthru
    _
  // Predicated region
  $region82: #{train_models_nce_forward.1} parent=0 // pred_check
    _
  $region83: #{train_models_nce_forward.1} parent=0 // pred_check_branch
    %4266 = sbr.rel (0) target = $region85
  $region84: #{train_models_nce_forward.1} parent=0 // pred_region
    _
  $region85: #{train_models_nce_forward.1} parent=0 // pred_fallthru
    _

</llo_original>
